<compile_context>
chip_gen: v5e
topology: v5e:2x2
jax: 0.10.0
libtpu: 0.0.40
codegen_flags: <defaults>
</compile_context>

<pallas_src>
import math
from functools import partial

import numpy as np
import jax
import jax.numpy as jnp
from jax.experimental import pallas as pl
from jax.experimental.pallas import tpu as pltpu

LN_EPS = 1e-5                 # nn.LayerNorm default
MM_DTYPE = jnp.bfloat16       # MXU-native matmul operand dtype


# ----------------------------------------------------------------------------------
# host-side helpers (numpy; one-time parameter preparation)
# ----------------------------------------------------------------------------------
def window_partition_np(x, ws):
    B, H, W, C = x.shape
    x = x.reshape(B, H // ws, ws, W // ws, ws, C)
    return x.transpose(0, 1, 3, 2, 4, 5).reshape(-1, ws, ws, C)


def relative_position_index(ws):
    coords = np.stack(np.meshgrid(np.arange(ws), np.arange(ws), indexing="ij"))
    cf = coords.reshape(2, -1)
    rel = (cf[:, :, None] - cf[:, None, :]).transpose(1, 2, 0).astype(np.int64)
    rel[:, :, 0] += ws - 1
    rel[:, :, 1] += ws - 1
    rel[:, :, 0] *= 2 * ws - 1
    return rel.sum(-1)                                          # (N, N)


def calculate_mask(x_size, window_size, shift_size):
    # replicates SwinTransformerBlock.calculate_mask -> (nW, N, N) float32
    H, W = x_size
    img_mask = np.zeros((1, H, W, 1), np.float32)
    h_slices = (slice(0, -window_size), slice(-window_size, -shift_size),
                slice(-shift_size, None))
    w_slices = (slice(0, -window_size), slice(-window_size, -shift_size),
                slice(-shift_size, None))
    cnt = 0
    for h in h_slices:
        for w in w_slices:
            img_mask[:, h, w, :] = cnt
            cnt += 1
    mw = window_partition_np(img_mask, window_size)
    mw = mw.reshape(-1, window_size * window_size)
    diff = mw[:, None, :] - mw[:, :, None]
    return np.where(diff != 0, -100.0, 0.0).astype(np.float32)


def _gelu(x, exact):
    if exact:
        # exact erf-based GELU (matches PyTorch nn.GELU default)
        return 0.5 * x * (1.0 + jax.lax.erf(x * (1.0 / math.sqrt(2.0))))
    # TODO(synk): erf did not lower on this backend; tanh approximation used instead
    # (<= ~1e-3 deviation from PyTorch's exact GELU).
    return 0.5 * x * (1.0 + jnp.tanh(math.sqrt(2.0 / math.pi)
                                     * (x + 0.044715 * x * x * x)))


def _erf_lowers():
    """Capability check: does lax.erf lower inside a Pallas TPU kernel?"""
    def k(x_ref, o_ref):
        o_ref[...] = jax.lax.erf(x_ref[...])
    try:
        f = pl.pallas_call(k, out_shape=jax.ShapeDtypeStruct((8, 128), jnp.float32))
        jax.jit(f).lower(jnp.zeros((8, 128), jnp.float32)).compile()
        return True
    except Exception:
        return False


def _vmem_limit_bytes():
    """Explicit scoped-VMEM limit, generation-aware (<= 3/4 physical, <= 100 MiB)."""
    try:
        info = pltpu.get_tpu_info()
        cap = getattr(info, "vmem_capacity_bytes", None)
        if cap:
            return int(min(cap * 3 // 4, 100 << 20))
    except Exception:
        pass
    return 64 << 20


# ----------------------------------------------------------------------------------
# fused Swin block kernel
# ----------------------------------------------------------------------------------
def swin_block_kernel(*refs, num_heads, ws, G, has_mask, gelu_exact):
    """One grid step = one window-row of one image: (1, ws, W, C) in / out."""
    if has_mask:
        (x_ref, g1_ref, b1_ref, wqkv_ref, bqkv_ref, wproj_ref, bproj_ref,
         rb_ref, g2_ref, b2_ref, w1_ref, b1m_ref, w2_ref, b2m_ref,
         mask_ref, o_ref) = refs
    else:
        (x_ref, g1_ref, b1_ref, wqkv_ref, bqkv_ref, wproj_ref, bproj_ref,
         rb_ref, g2_ref, b2_ref, w1_ref, b1m_ref, w2_ref, b2m_ref,
         o_ref) = refs
        mask_ref = None

    _, _, W, C = x_ref.shape
    N = ws * ws
    nh = num_heads
    hd = C // nh
    R = G * N                      # tokens handled per grid step
    mm = wqkv_ref.dtype            # bf16 matmul operand dtype

    # --- image-layout block -> window-token rows (window_partition, in-VMEM) -------
    # TODO(synk): for real Swin window sizes (ws=7 -> N=49) pad N to a multiple of 8
    # at prep time so these regroup reshapes and the score tiles avoid sublane padding.
    x = x_ref[0].astype(jnp.float32)                              # (ws, W, C)
    xw = x.reshape(ws, G, ws, C).transpose(1, 0, 2, 3).reshape(R, C)

    # --- norm1 (fused) --------------------------------------------------------------
    mu = jnp.mean(xw, axis=-1, keepdims=True)
    xc = xw - mu
    var = jnp.mean(xc * xc, axis=-1, keepdims=True)
    xn = xc * jax.lax.rsqrt(var + LN_EPS) * g1_ref[...] + b1_ref[...]

    # --- qkv projection (bf16 x bf16 -> f32); qk scale pre-folded into q columns ----
    qkv = jnp.dot(xn.astype(mm), wqkv_ref[...],
                  preferred_element_type=jnp.float32) + bqkv_ref[...]   # (R, 3C)

    # --- gather heads once; batch (head, window) on one leading dim -----------------
    def heads(base):
        parts = [qkv[:, base + h * hd: base + (h + 1) * hd] for h in range(nh)]
        return jnp.concatenate(parts, axis=0).reshape(nh * G, N, hd)

    q = heads(0)
    k = heads(C)
    v = heads(2 * C)

    s = jnp.einsum('bnd,bmd->bnm', q.astype(mm), k.astype(mm),
                   preferred_element_type=jnp.float32)            # (nh*G, N, N)
    s = s.reshape(nh, G, N, N) + rb_ref[...][:, None, :, :]
    if mask_ref is not None:
        row = pl.multiple_of(pl.program_id(1) * G, G)
        s = s + mask_ref[pl.ds(row, G), :, :][None, :, :, :]

    # softmax in f32 (EUP exp, approx reciprocal)
    s = s - jnp.max(s, axis=-1, keepdims=True)
    e = jnp.exp(s)
    pr = e * pl.reciprocal(jnp.sum(e, axis=-1, keepdims=True), approx=True)

    o = jnp.einsum('bnm,bmd->bnd', pr.reshape(nh * G, N, N).astype(mm), v.astype(mm),
                   preferred_element_type=jnp.float32)            # (nh*G, N, hd)
    o = o.reshape(nh, R, hd)
    attn = jnp.concatenate([o[h] for h in range(nh)], axis=-1)    # (R, C)

    y = jnp.dot(attn.astype(mm), wproj_ref[...],
                preferred_element_type=jnp.float32) + bproj_ref[...]

    # --- first residual (fused; valid in the rolled/window frame) -------------------
    h1 = xw + y

    # --- norm2 + MLP + second residual (per-token, so window layout is fine) --------
    mu2 = jnp.mean(h1, axis=-1, keepdims=True)
    hc = h1 - mu2
    var2 = jnp.mean(hc * hc, axis=-1, keepdims=True)
    hn = hc * jax.lax.rsqrt(var2 + LN_EPS) * g2_ref[...] + b2_ref[...]
    ff = jnp.dot(hn.astype(mm), w1_ref[...],
                 preferred_element_type=jnp.float32) + b1m_ref[...]
    ff = _gelu(ff, gelu_exact)
    ff = jnp.dot(ff.astype(mm), w2_ref[...],
                 preferred_element_type=jnp.float32) + b2m_ref[...]
    out = h1 + ff                                                  # (R, C)

    # --- inverse window regroup back to the image-layout output block ---------------
    out = out.reshape(G, ws, ws, C).transpose(1, 0, 2, 3).reshape(1, ws, W, C)
    o_ref[...] = out.astype(o_ref.dtype)


# ----------------------------------------------------------------------------------
# block / layer forward
# ----------------------------------------------------------------------------------
def swin_block_forward(x, x_size, p, st, num_heads, gelu_exact, vmem_limit):
    H, W = x_size
    B, L, C = x.shape
    ws, shift = st["wsz"], st["shift"]
    G = W // ws
    Hr = H // ws
    N = ws * ws
    nW = Hr * G
    Hd = p["w1"].shape[1]
    has_mask = shift > 0

    xs = x.reshape(B, H, W, C)
    if shift > 0:
        # TODO(synk): cyclic shift stays as an XLA roll; the wrap-around windows are
        # not expressible as a contiguous BlockSpec slice.
        xs = jnp.roll(xs, shift=(-shift, -shift), axis=(1, 2))

    def c2(shape):
        return pl.BlockSpec(shape, lambda b, r: (0, 0))

    def c3(shape):
        return pl.BlockSpec(shape, lambda b, r: (0, 0, 0))

    # TODO(synk): for large C (real Swin dims) give the constant weight BlockSpecs
    # pipeline_mode=pl.Buffered(1) (or tile fc1/fc2 over the hidden dim) so the
    # double-buffered weight copies fit v7x's 64 MiB VMEM; unnecessary at demo dims.
    in_specs = [
        pl.BlockSpec((1, ws, W, C), lambda b, r: (b, r, 0, 0)),   # image-layout tokens
        c2((1, C)), c2((1, C)),                                   # norm1 gamma/beta
        c2((C, 3 * C)), c2((1, 3 * C)),                           # qkv (scale folded)
        c2((C, C)), c2((1, C)),                                   # proj
        c3((num_heads, N, N)),                                    # rel-pos bias
        c2((1, C)), c2((1, C)),                                   # norm2 gamma/beta
        c2((C, Hd)), c2((1, Hd)),                                 # fc1
        c2((Hd, C)), c2((1, C)),                                  # fc2
    ]
    args = [xs, p["g1"], p["b1"], p["wqkv_s"], p["bqkv_s"], p["wproj"], p["bproj"],
            p["rel_bias"], p["g2"], p["b2"], p["w1"], p["b1m"], p["w2"], p["b2m"]]
    if has_mask:
        in_specs.append(c3((nW, N, N)))                           # resident shift mask
        args.append(p["mask"])

    kern = partial(swin_block_kernel, num_heads=num_heads, ws=ws, G=G,
                   has_mask=has_mask, gelu_exact=gelu_exact)

    ys = pl.pallas_call(
        kern,
        out_shape=jax.ShapeDtypeStruct((B, H, W, C), x.dtype),
        grid=(B, Hr),
        in_specs=in_specs,
        out_specs=pl.BlockSpec((1, ws, W, C), lambda b, r: (b, r, 0, 0)),
        compiler_params=pltpu.CompilerParams(
            dimension_semantics=("parallel", "parallel"),
            vmem_limit_bytes=vmem_limit),
    )(*args)

    if shift > 0:
        ys = jnp.roll(ys, shift=(shift, shift), axis=(1, 2))
    return ys.reshape(B, L, C)


def basic_layer_forward(x, x_size, prepared, statics, num_heads, gelu_exact, vmem_limit):
    for p, st in zip(prepared, statics):
        x = swin_block_forward(x, x_size, p, st, num_heads, gelu_exact, vmem_limit)
    # downsample is None in this configuration
    return x


# ----------------------------------------------------------------------------------
# one-time parameter preparation (hoisted out of the forward)
# ----------------------------------------------------------------------------------
def prepare_block_params(p, num_heads, window_size):
    N = window_size * window_size
    C = p["wqkv"].shape[0]
    Hd = p["w1"].shape[1]
    scale = p["scale"]
    wqkv = p["wqkv"].at[:, :C].multiply(scale)       # fold qk scale into q columns
    bqkv = p["bqkv"].at[:C].multiply(scale)
    rpi = relative_position_index(window_size)
    rel = p["rpb_table"][rpi.reshape(-1)].reshape(N, N, num_heads)
    rel = jnp.transpose(rel, (2, 0, 1)).astype(jnp.float32)       # (nh, N, N)
    return dict(
        g1=p["g1"].reshape(1, C), b1=p["b1"].reshape(1, C),
        g2=p["g2"].reshape(1, C), b2=p["b2"].reshape(1, C),
        wqkv_s=wqkv.astype(MM_DTYPE), bqkv_s=bqkv.reshape(1, 3 * C),
        wproj=p["wproj"].astype(MM_DTYPE), bproj=p["bproj"].reshape(1, C),
        w1=p["w1"].astype(MM_DTYPE), b1m=p["b1m"].reshape(1, Hd),
        w2=p["w2"].astype(MM_DTYPE), b2m=p["b2m"].reshape(1, C),
        rel_bias=rel,
    )


def prepare_layer(blocks_params, cfg, x_size):
    ws0 = cfg["window_size"]
    ir = cfg["input_resolution"]
    num_heads = cfg["num_heads"]
    H, W = x_size
    prepared, statics = [], []
    for i, p in enumerate(blocks_params):
        shift = 0 if i % 2 == 0 else ws0 // 2
        wsz = ws0
        if min(ir) <= wsz:                   # same adjustment as the module
            shift, wsz = 0, min(ir)
        assert H % wsz == 0 and W % wsz == 0, "H, W must be multiples of the window size"
        pp = prepare_block_params(p, num_heads, wsz)
        if shift > 0:
            pp["mask"] = jnp.asarray(calculate_mask(x_size, wsz, shift))
        prepared.append(pp)
        statics.append(dict(shift=shift, wsz=wsz))
    return prepared, statics


# ----------------------------------------------------------------------------------
# deterministic parameter init (synthetic; matches module shapes)
# ----------------------------------------------------------------------------------
def init_block_params(key, dim, num_heads, window_size, mlp_ratio):
    hidden = int(dim * mlp_ratio)
    hd = dim // num_heads
    ks = jax.random.split(key, 5)
    std = 0.02
    return dict(
        g1=jnp.ones((dim,), jnp.float32), b1=jnp.zeros((dim,), jnp.float32),
        g2=jnp.ones((dim,), jnp.float32), b2=jnp.zeros((dim,), jnp.float32),
        wqkv=jax.random.normal(ks[0], (dim, 3 * dim), jnp.float32) * std,
        bqkv=jnp.zeros((3 * dim,), jnp.float32),
        wproj=jax.random.normal(ks[1], (dim, dim), jnp.float32) * std,
        bproj=jnp.zeros((dim,), jnp.float32),
        w1=jax.random.normal(ks[2], (dim, hidden), jnp.float32) * std,
        b1m=jnp.zeros((hidden,), jnp.float32),
        w2=jax.random.normal(ks[3], (hidden, dim), jnp.float32) * std,
        b2m=jnp.zeros((dim,), jnp.float32),
        rpb_table=jax.random.normal(
            ks[4], ((2 * window_size - 1) * (2 * window_size - 1), num_heads),
            jnp.float32) * std,
        scale=hd ** (-0.5),
    )


if __name__ == "__main__":
    # small, module-consistent shapes
    cfg = dict(dim=32, input_resolution=(8, 8), depth=2, num_heads=4,
               window_size=4, mlp_ratio=4.0)
    B = 2
    H, W = cfg["input_resolution"]
    L, C = H * W, cfg["dim"]

    key = jax.random.PRNGKey(0)
    kx, kp = jax.random.split(key)
    x = jax.random.normal(kx, (B, L, C), jnp.float32)
    block_keys = jax.random.split(kp, cfg["depth"])
    blocks_params = [init_block_params(block_keys[i], cfg["dim"], cfg["num_heads"],
                                       cfg["window_size"], cfg["mlp_ratio"])
                     for i in range(cfg["depth"])]

    gelu_exact = _erf_lowers()          # capability check instead of a silent fallback
    vmem_limit = _vmem_limit_bytes()

    prepared, statics = prepare_layer(blocks_params, cfg, (H, W))

    fwd = jax.jit(lambda xx, pp: basic_layer_forward(
        xx, (H, W), pp, statics, cfg["num_heads"], gelu_exact, vmem_limit))
    out = jax.block_until_ready(fwd(x, prepared))

    assert out.shape == (B, L, C) and bool(jnp.all(jnp.isfinite(out)))
    print("KERNEL_OK")
</pallas_src>

<mosaic_0001>
module attributes {stable_mosaic.version = 11 : i64} {
  func.func @swin_block_kernel(%arg0: i32, %arg1: i32, %arg2: memref<1x4x8x32xf32, #tpu.memory_space<vmem>>, %arg3: memref<1x32xf32, #tpu.memory_space<vmem>>, %arg4: memref<1x32xf32, #tpu.memory_space<vmem>>, %arg5: memref<32x96xbf16, #tpu.memory_space<vmem>>, %arg6: memref<1x96xf32, #tpu.memory_space<vmem>>, %arg7: memref<32x32xbf16, #tpu.memory_space<vmem>>, %arg8: memref<1x32xf32, #tpu.memory_space<vmem>>, %arg9: memref<4x16x16xf32, #tpu.memory_space<vmem>>, %arg10: memref<1x32xf32, #tpu.memory_space<vmem>>, %arg11: memref<1x32xf32, #tpu.memory_space<vmem>>, %arg12: memref<32x128xbf16, #tpu.memory_space<vmem>>, %arg13: memref<1x128xf32, #tpu.memory_space<vmem>>, %arg14: memref<128x32xbf16, #tpu.memory_space<vmem>>, %arg15: memref<1x32xf32, #tpu.memory_space<vmem>>, %arg16: memref<1x4x8x32xf32, #tpu.memory_space<vmem>>) attributes {dimension_semantics = [#tpu.dimension_semantics<parallel>, #tpu.dimension_semantics<parallel>], iteration_bounds = array<i64: 2, 2>, scalar_prefetch = 0 : i64, scratch_operands = 0 : i64, tpu.core_type = #tpu.core_type<tc>, window_params = [{transform_indices = @transform_0, window_bounds = array<i64: 1, 4, 8, 32>}, {pipeline_mode = #tpu.pipeline_mode<synchronous>, transform_indices = @transform_1, window_bounds = array<i64: 1, 32>}, {pipeline_mode = #tpu.pipeline_mode<synchronous>, transform_indices = @transform_2, window_bounds = array<i64: 1, 32>}, {pipeline_mode = #tpu.pipeline_mode<synchronous>, transform_indices = @transform_3, window_bounds = array<i64: 32, 96>}, {pipeline_mode = #tpu.pipeline_mode<synchronous>, transform_indices = @transform_4, window_bounds = array<i64: 1, 96>}, {pipeline_mode = #tpu.pipeline_mode<synchronous>, transform_indices = @transform_5, window_bounds = array<i64: 32, 32>}, {pipeline_mode = #tpu.pipeline_mode<synchronous>, transform_indices = @transform_6, window_bounds = array<i64: 1, 32>}, {pipeline_mode = #tpu.pipeline_mode<synchronous>, transform_indices = @transform_7, window_bounds = array<i64: 4, 16, 16>}, {pipeline_mode = #tpu.pipeline_mode<synchronous>, transform_indices = @transform_8, window_bounds = array<i64: 1, 32>}, {pipeline_mode = #tpu.pipeline_mode<synchronous>, transform_indices = @transform_9, window_bounds = array<i64: 1, 32>}, {pipeline_mode = #tpu.pipeline_mode<synchronous>, transform_indices = @transform_10, window_bounds = array<i64: 32, 128>}, {pipeline_mode = #tpu.pipeline_mode<synchronous>, transform_indices = @transform_11, window_bounds = array<i64: 1, 128>}, {pipeline_mode = #tpu.pipeline_mode<synchronous>, transform_indices = @transform_12, window_bounds = array<i64: 128, 32>}, {pipeline_mode = #tpu.pipeline_mode<synchronous>, transform_indices = @transform_13, window_bounds = array<i64: 1, 32>}, {transform_indices = @transform_14, window_bounds = array<i64: 1, 4, 8, 32>}]} {
    %c0 = arith.constant 0 : index
    %c0_0 = arith.constant 0 : index
    %c0_1 = arith.constant 0 : index
    %c0_2 = arith.constant 0 : index
    %0 = vector.load %arg2[%c0, %c0_0, %c0_1, %c0_2] : memref<1x4x8x32xf32, #tpu.memory_space<vmem>>, vector<1x4x8x32xf32>
    %1 = vector.shape_cast %0 : vector<1x4x8x32xf32> to vector<4x8x32xf32>
    %2 = vector.shape_cast %1 : vector<4x8x32xf32> to vector<4x2x4x32xf32>
    %3 = tpu.transpose %2, [1, 0, 2, 3] : vector<4x2x4x32xf32> -> vector<2x4x4x32xf32>
    %4 = vector.shape_cast %3 : vector<2x4x4x32xf32> to vector<32x32xf32>
    %cst = arith.constant dense<0.000000e+00> : vector<32xf32>
    %5 = vector.multi_reduction <add>, %4, %cst [1] : vector<32x32xf32> to vector<32xf32>
    %6 = vector.shape_cast %5 : vector<32xf32> to vector<32x1xf32>
    %cst_3 = arith.constant 3.200000e+01 : f32
    %7 = vector.broadcast %cst_3 : f32 to vector<32x1xf32>
    %8 = arith.divf %6, %7 : vector<32x1xf32>
    %9 = vector.broadcast %8 : vector<32x1xf32> to vector<32x32xf32>
    %10 = arith.subf %4, %9 : vector<32x32xf32>
    %11 = arith.mulf %10, %10 : vector<32x32xf32>
    %cst_4 = arith.constant dense<0.000000e+00> : vector<32xf32>
    %12 = vector.multi_reduction <add>, %11, %cst_4 [1] : vector<32x32xf32> to vector<32xf32>
    %13 = vector.shape_cast %12 : vector<32xf32> to vector<32x1xf32>
    %cst_5 = arith.constant 3.200000e+01 : f32
    %14 = vector.broadcast %cst_5 : f32 to vector<32x1xf32>
    %15 = arith.divf %13, %14 : vector<32x1xf32>
    %cst_6 = arith.constant 9.99999974E-6 : f32
    %16 = vector.broadcast %cst_6 : f32 to vector<32x1xf32>
    %17 = arith.addf %15, %16 : vector<32x1xf32>
    %18 = math.rsqrt %17 : vector<32x1xf32>
    %19 = vector.broadcast %18 : vector<32x1xf32> to vector<32x32xf32>
    %20 = arith.mulf %10, %19 : vector<32x32xf32>
    %c0_7 = arith.constant 0 : index
    %c0_8 = arith.constant 0 : index
    %21 = vector.load %arg3[%c0_7, %c0_8] : memref<1x32xf32, #tpu.memory_space<vmem>>, vector<1x32xf32>
    %22 = vector.broadcast %21 : vector<1x32xf32> to vector<32x32xf32>
    %23 = arith.mulf %20, %22 : vector<32x32xf32>
    %c0_9 = arith.constant 0 : index
    %c0_10 = arith.constant 0 : index
    %24 = vector.load %arg4[%c0_9, %c0_10] : memref<1x32xf32, #tpu.memory_space<vmem>>, vector<1x32xf32>
    %25 = vector.broadcast %24 : vector<1x32xf32> to vector<32x32xf32>
    %26 = arith.addf %23, %25 : vector<32x32xf32>
    %27 = arith.truncf %26 : vector<32x32xf32> to vector<32x32xbf16>
    %c0_11 = arith.constant 0 : index
    %c0_12 = arith.constant 0 : index
    %28 = vector.load %arg5[%c0_11, %c0_12] : memref<32x96xbf16, #tpu.memory_space<vmem>>, vector<32x96xbf16>
    %cst_13 = arith.constant dense<0.000000e+00> : vector<32x96xf32>
    %29 = tpu.matmul %27, %28, %cst_13 {dimension_numbers = #tpu.dot_dimension_numbers<[1], [0], [0], [1], [0, 0, 1, 1], [], []>} : vector<32x32xbf16>, vector<32x96xbf16>, vector<32x96xf32> -> vector<32x96xf32>
    %c0_14 = arith.constant 0 : index
    %c0_15 = arith.constant 0 : index
    %30 = vector.load %arg6[%c0_14, %c0_15] : memref<1x96xf32, #tpu.memory_space<vmem>>, vector<1x96xf32>
    %31 = vector.broadcast %30 : vector<1x96xf32> to vector<32x96xf32>
    %32 = arith.addf %29, %31 : vector<32x96xf32>
    %33 = vector.extract_strided_slice %32 {offsets = [0, 0], sizes = [32, 8], strides = [1, 1]} : vector<32x96xf32> to vector<32x8xf32>
    %34 = vector.extract_strided_slice %32 {offsets = [0, 8], sizes = [32, 8], strides = [1, 1]} : vector<32x96xf32> to vector<32x8xf32>
    %35 = vector.extract_strided_slice %32 {offsets = [0, 16], sizes = [32, 8], strides = [1, 1]} : vector<32x96xf32> to vector<32x8xf32>
    %36 = vector.extract_strided_slice %32 {offsets = [0, 24], sizes = [32, 8], strides = [1, 1]} : vector<32x96xf32> to vector<32x8xf32>
    %37 = tpu.concatenate %33, %34, %35, %36 in 0 : vector<32x8xf32>, vector<32x8xf32>, vector<32x8xf32>, vector<32x8xf32> -> vector<128x8xf32>
    %38 = vector.shape_cast %37 : vector<128x8xf32> to vector<8x16x8xf32>
    %39 = vector.extract_strided_slice %32 {offsets = [0, 32], sizes = [32, 8], strides = [1, 1]} : vector<32x96xf32> to vector<32x8xf32>
    %40 = vector.extract_strided_slice %32 {offsets = [0, 40], sizes = [32, 8], strides = [1, 1]} : vector<32x96xf32> to vector<32x8xf32>
    %41 = vector.extract_strided_slice %32 {offsets = [0, 48], sizes = [32, 8], strides = [1, 1]} : vector<32x96xf32> to vector<32x8xf32>
    %42 = vector.extract_strided_slice %32 {offsets = [0, 56], sizes = [32, 8], strides = [1, 1]} : vector<32x96xf32> to vector<32x8xf32>
    %43 = tpu.concatenate %39, %40, %41, %42 in 0 : vector<32x8xf32>, vector<32x8xf32>, vector<32x8xf32>, vector<32x8xf32> -> vector<128x8xf32>
    %44 = vector.shape_cast %43 : vector<128x8xf32> to vector<8x16x8xf32>
    %45 = vector.extract_strided_slice %32 {offsets = [0, 64], sizes = [32, 8], strides = [1, 1]} : vector<32x96xf32> to vector<32x8xf32>
    %46 = vector.extract_strided_slice %32 {offsets = [0, 72], sizes = [32, 8], strides = [1, 1]} : vector<32x96xf32> to vector<32x8xf32>
    %47 = vector.extract_strided_slice %32 {offsets = [0, 80], sizes = [32, 8], strides = [1, 1]} : vector<32x96xf32> to vector<32x8xf32>
    %48 = vector.extract_strided_slice %32 {offsets = [0, 88], sizes = [32, 8], strides = [1, 1]} : vector<32x96xf32> to vector<32x8xf32>
    %49 = tpu.concatenate %45, %46, %47, %48 in 0 : vector<32x8xf32>, vector<32x8xf32>, vector<32x8xf32>, vector<32x8xf32> -> vector<128x8xf32>
    %50 = vector.shape_cast %49 : vector<128x8xf32> to vector<8x16x8xf32>
    %51 = arith.truncf %38 : vector<8x16x8xf32> to vector<8x16x8xbf16>
    %52 = arith.truncf %44 : vector<8x16x8xf32> to vector<8x16x8xbf16>
    "tpu.trace_start"() <{level = 10 : i32, message = "bnd,bmd->bnm"}> : () -> ()
    %cst_16 = arith.constant dense<0.000000e+00> : vector<8x16x16xf32>
    %53 = tpu.matmul %51, %52, %cst_16 {dimension_numbers = #tpu.dot_dimension_numbers<[2], [2], [1], [1], [0, 0, 0, 1, 1, 1], [0], [0]>} : vector<8x16x8xbf16>, vector<8x16x8xbf16>, vector<8x16x16xf32> -> vector<8x16x16xf32>
    "tpu.trace_stop"() : () -> ()
    %54 = vector.shape_cast %53 : vector<8x16x16xf32> to vector<4x2x16x16xf32>
    %c0_17 = arith.constant 0 : index
    %c0_18 = arith.constant 0 : index
    %c0_19 = arith.constant 0 : index
    %55 = vector.load %arg9[%c0_17, %c0_18, %c0_19] : memref<4x16x16xf32, #tpu.memory_space<vmem>>, vector<4x16x16xf32>
    %56 = vector.shape_cast %55 : vector<4x16x16xf32> to vector<4x1x16x16xf32>
    %57 = vector.broadcast %56 : vector<4x1x16x16xf32> to vector<4x2x16x16xf32>
    %58 = arith.addf %54, %57 : vector<4x2x16x16xf32>
    %cst_20 = arith.constant dense<0xFF800000> : vector<4x2x16xf32>
    %59 = vector.multi_reduction <maximumf>, %58, %cst_20 [3] : vector<4x2x16x16xf32> to vector<4x2x16xf32>
    %60 = vector.shape_cast %59 : vector<4x2x16xf32> to vector<4x2x16x1xf32>
    %61 = vector.broadcast %60 : vector<4x2x16x1xf32> to vector<4x2x16x16xf32>
    %62 = arith.subf %58, %61 : vector<4x2x16x16xf32>
    %63 = math.exp %62 : vector<4x2x16x16xf32>
    %cst_21 = arith.constant dense<0.000000e+00> : vector<4x2x16xf32>
    %64 = vector.multi_reduction <add>, %63, %cst_21 [3] : vector<4x2x16x16xf32> to vector<4x2x16xf32>
    %65 = vector.shape_cast %64 : vector<4x2x16xf32> to vector<4x2x16x1xf32>
    %66 = tpu.reciprocal %65 {approx = true} : vector<4x2x16x1xf32> -> vector<4x2x16x1xf32>
    %67 = vector.broadcast %66 : vector<4x2x16x1xf32> to vector<4x2x16x16xf32>
    %68 = arith.mulf %63, %67 : vector<4x2x16x16xf32>
    %69 = vector.shape_cast %68 : vector<4x2x16x16xf32> to vector<8x16x16xf32>
    %70 = arith.truncf %69 : vector<8x16x16xf32> to vector<8x16x16xbf16>
    %71 = arith.truncf %50 : vector<8x16x8xf32> to vector<8x16x8xbf16>
    "tpu.trace_start"() <{level = 10 : i32, message = "bnm,bmd->bnd"}> : () -> ()
    %cst_22 = arith.constant dense<0.000000e+00> : vector<8x16x8xf32>
    %72 = tpu.matmul %70, %71, %cst_22 {dimension_numbers = #tpu.dot_dimension_numbers<[2], [1], [1], [2], [0, 0, 0, 1, 1, 2], [0], [0]>} : vector<8x16x16xbf16>, vector<8x16x8xbf16>, vector<8x16x8xf32> -> vector<8x16x8xf32>
    "tpu.trace_stop"() : () -> ()
    %73 = vector.shape_cast %72 : vector<8x16x8xf32> to vector<4x32x8xf32>
    %74 = vector.extract_strided_slice %73 {offsets = [0, 0, 0], sizes = [1, 32, 8], strides = [1, 1, 1]} : vector<4x32x8xf32> to vector<1x32x8xf32>
    %75 = vector.shape_cast %74 : vector<1x32x8xf32> to vector<32x8xf32>
    %76 = vector.extract_strided_slice %73 {offsets = [1, 0, 0], sizes = [1, 32, 8], strides = [1, 1, 1]} : vector<4x32x8xf32> to vector<1x32x8xf32>
    %77 = vector.shape_cast %76 : vector<1x32x8xf32> to vector<32x8xf32>
    %78 = vector.extract_strided_slice %73 {offsets = [2, 0, 0], sizes = [1, 32, 8], strides = [1, 1, 1]} : vector<4x32x8xf32> to vector<1x32x8xf32>
    %79 = vector.shape_cast %78 : vector<1x32x8xf32> to vector<32x8xf32>
    %80 = vector.extract_strided_slice %73 {offsets = [3, 0, 0], sizes = [1, 32, 8], strides = [1, 1, 1]} : vector<4x32x8xf32> to vector<1x32x8xf32>
    %81 = vector.shape_cast %80 : vector<1x32x8xf32> to vector<32x8xf32>
    %82 = tpu.concatenate %75, %77, %79, %81 in 1 : vector<32x8xf32>, vector<32x8xf32>, vector<32x8xf32>, vector<32x8xf32> -> vector<32x32xf32>
    %83 = arith.truncf %82 : vector<32x32xf32> to vector<32x32xbf16>
    %c0_23 = arith.constant 0 : index
    %c0_24 = arith.constant 0 : index
    %84 = vector.load %arg7[%c0_23, %c0_24] : memref<32x32xbf16, #tpu.memory_space<vmem>>, vector<32x32xbf16>
    %cst_25 = arith.constant dense<0.000000e+00> : vector<32x32xf32>
    %85 = tpu.matmul %83, %84, %cst_25 {dimension_numbers = #tpu.dot_dimension_numbers<[1], [0], [0], [1], [0, 0, 1, 1], [], []>} : vector<32x32xbf16>, vector<32x32xbf16>, vector<32x32xf32> -> vector<32x32xf32>
    %c0_26 = arith.constant 0 : index
    %c0_27 = arith.constant 0 : index
    %86 = vector.load %arg8[%c0_26, %c0_27] : memref<1x32xf32, #tpu.memory_space<vmem>>, vector<1x32xf32>
    %87 = vector.broadcast %86 : vector<1x32xf32> to vector<32x32xf32>
    %88 = arith.addf %85, %87 : vector<32x32xf32>
    %89 = arith.addf %4, %88 : vector<32x32xf32>
    %cst_28 = arith.constant dense<0.000000e+00> : vector<32xf32>
    %90 = vector.multi_reduction <add>, %89, %cst_28 [1] : vector<32x32xf32> to vector<32xf32>
    %91 = vector.shape_cast %90 : vector<32xf32> to vector<32x1xf32>
    %cst_29 = arith.constant 3.200000e+01 : f32
    %92 = vector.broadcast %cst_29 : f32 to vector<32x1xf32>
    %93 = arith.divf %91, %92 : vector<32x1xf32>
    %94 = vector.broadcast %93 : vector<32x1xf32> to vector<32x32xf32>
    %95 = arith.subf %89, %94 : vector<32x32xf32>
    %96 = arith.mulf %95, %95 : vector<32x32xf32>
    %cst_30 = arith.constant dense<0.000000e+00> : vector<32xf32>
    %97 = vector.multi_reduction <add>, %96, %cst_30 [1] : vector<32x32xf32> to vector<32xf32>
    %98 = vector.shape_cast %97 : vector<32xf32> to vector<32x1xf32>
    %cst_31 = arith.constant 3.200000e+01 : f32
    %99 = vector.broadcast %cst_31 : f32 to vector<32x1xf32>
    %100 = arith.divf %98, %99 : vector<32x1xf32>
    %cst_32 = arith.constant 9.99999974E-6 : f32
    %101 = vector.broadcast %cst_32 : f32 to vector<32x1xf32>
    %102 = arith.addf %100, %101 : vector<32x1xf32>
    %103 = math.rsqrt %102 : vector<32x1xf32>
    %104 = vector.broadcast %103 : vector<32x1xf32> to vector<32x32xf32>
    %105 = arith.mulf %95, %104 : vector<32x32xf32>
    %c0_33 = arith.constant 0 : index
    %c0_34 = arith.constant 0 : index
    %106 = vector.load %arg10[%c0_33, %c0_34] : memref<1x32xf32, #tpu.memory_space<vmem>>, vector<1x32xf32>
    %107 = vector.broadcast %106 : vector<1x32xf32> to vector<32x32xf32>
    %108 = arith.mulf %105, %107 : vector<32x32xf32>
    %c0_35 = arith.constant 0 : index
    %c0_36 = arith.constant 0 : index
    %109 = vector.load %arg11[%c0_35, %c0_36] : memref<1x32xf32, #tpu.memory_space<vmem>>, vector<1x32xf32>
    %110 = vector.broadcast %109 : vector<1x32xf32> to vector<32x32xf32>
    %111 = arith.addf %108, %110 : vector<32x32xf32>
    %112 = arith.truncf %111 : vector<32x32xf32> to vector<32x32xbf16>
    %c0_37 = arith.constant 0 : index
    %c0_38 = arith.constant 0 : index
    %113 = vector.load %arg12[%c0_37, %c0_38] : memref<32x128xbf16, #tpu.memory_space<vmem>>, vector<32x128xbf16>
    %cst_39 = arith.constant dense<0.000000e+00> : vector<32x128xf32>
    %114 = tpu.matmul %112, %113, %cst_39 {dimension_numbers = #tpu.dot_dimension_numbers<[1], [0], [0], [1], [0, 0, 1, 1], [], []>} : vector<32x32xbf16>, vector<32x128xbf16>, vector<32x128xf32> -> vector<32x128xf32>
    %c0_40 = arith.constant 0 : index
    %c0_41 = arith.constant 0 : index
    %115 = vector.load %arg13[%c0_40, %c0_41] : memref<1x128xf32, #tpu.memory_space<vmem>>, vector<1x128xf32>
    %116 = vector.broadcast %115 : vector<1x128xf32> to vector<32x128xf32>
    %117 = arith.addf %114, %116 : vector<32x128xf32>
    %cst_42 = arith.constant 5.000000e-01 : f32
    %118 = vector.broadcast %cst_42 : f32 to vector<32x128xf32>
    %119 = arith.mulf %118, %117 : vector<32x128xf32>
    %cst_43 = arith.constant 4.471500e-02 : f32
    %120 = vector.broadcast %cst_43 : f32 to vector<32x128xf32>
    %121 = arith.mulf %120, %117 : vector<32x128xf32>
    %122 = arith.mulf %121, %117 : vector<32x128xf32>
    %123 = arith.mulf %122, %117 : vector<32x128xf32>
    %124 = arith.addf %117, %123 : vector<32x128xf32>
    %cst_44 = arith.constant 0.797884583 : f32
    %125 = vector.broadcast %cst_44 : f32 to vector<32x128xf32>
    %126 = arith.mulf %125, %124 : vector<32x128xf32>
    %127 = math.tanh %126 : vector<32x128xf32>
    %cst_45 = arith.constant 1.000000e+00 : f32
    %128 = vector.broadcast %cst_45 : f32 to vector<32x128xf32>
    %129 = arith.addf %128, %127 : vector<32x128xf32>
    %130 = arith.mulf %119, %129 : vector<32x128xf32>
    %131 = arith.truncf %130 : vector<32x128xf32> to vector<32x128xbf16>
    %c0_46 = arith.constant 0 : index
    %c0_47 = arith.constant 0 : index
    %132 = vector.load %arg14[%c0_46, %c0_47] : memref<128x32xbf16, #tpu.memory_space<vmem>>, vector<128x32xbf16>
    %cst_48 = arith.constant dense<0.000000e+00> : vector<32x32xf32>
    %133 = tpu.matmul %131, %132, %cst_48 {dimension_numbers = #tpu.dot_dimension_numbers<[1], [0], [0], [1], [0, 0, 1, 1], [], []>} : vector<32x128xbf16>, vector<128x32xbf16>, vector<32x32xf32> -> vector<32x32xf32>
    %c0_49 = arith.constant 0 : index
    %c0_50 = arith.constant 0 : index
    %134 = vector.load %arg15[%c0_49, %c0_50] : memref<1x32xf32, #tpu.memory_space<vmem>>, vector<1x32xf32>
    %135 = vector.broadcast %134 : vector<1x32xf32> to vector<32x32xf32>
    %136 = arith.addf %133, %135 : vector<32x32xf32>
    %137 = arith.addf %89, %136 : vector<32x32xf32>
    %138 = vector.shape_cast %137 : vector<32x32xf32> to vector<2x4x4x32xf32>
    %139 = tpu.transpose %138, [1, 0, 2, 3] : vector<2x4x4x32xf32> -> vector<4x2x4x32xf32>
    %140 = vector.shape_cast %139 : vector<4x2x4x32xf32> to vector<1x4x8x32xf32>
    %c0_51 = arith.constant 0 : index
    %c0_52 = arith.constant 0 : index
    %c0_53 = arith.constant 0 : index
    %c0_54 = arith.constant 0 : index
    %141 = vector.load %arg16[%c0_51, %c0_52, %c0_53, %c0_54] : memref<1x4x8x32xf32, #tpu.memory_space<vmem>>, vector<1x4x8x32xf32>
    tpu.vector_store %arg16[%c0_51, %c0_52, %c0_53, %c0_54], %140 {strides = array<i32>} : memref<1x4x8x32xf32, #tpu.memory_space<vmem>>, vector<1x4x8x32xf32>,
    return
  }
  func.func @transform_0(%arg0: i32, %arg1: i32) -> (i32, i32, i32, i32) {
    %c0_i32 = arith.constant 0 : i32
    %c0_i32_0 = arith.constant 0 : i32
    %c0_i32_1 = arith.constant 0 : i32
    return %arg0, %arg1, %c0_i32, %c0_i32_0 : i32, i32, i32, i32
  }
  func.func @transform_1(%arg0: i32, %arg1: i32) -> (i32, i32) {
    %c0_i32 = arith.constant 0 : i32
    %c0_i32_0 = arith.constant 0 : i32
    %c0_i32_1 = arith.constant 0 : i32
    return %c0_i32, %c0_i32_0 : i32, i32
  }
  func.func @transform_2(%arg0: i32, %arg1: i32) -> (i32, i32) {
    %c0_i32 = arith.constant 0 : i32
    %c0_i32_0 = arith.constant 0 : i32
    %c0_i32_1 = arith.constant 0 : i32
    return %c0_i32, %c0_i32_0 : i32, i32
  }
  func.func @transform_3(%arg0: i32, %arg1: i32) -> (i32, i32) {
    %c0_i32 = arith.constant 0 : i32
    %c0_i32_0 = arith.constant 0 : i32
    %c0_i32_1 = arith.constant 0 : i32
    return %c0_i32, %c0_i32_0 : i32, i32
  }
  func.func @transform_4(%arg0: i32, %arg1: i32) -> (i32, i32) {
    %c0_i32 = arith.constant 0 : i32
    %c0_i32_0 = arith.constant 0 : i32
    %c0_i32_1 = arith.constant 0 : i32
    return %c0_i32, %c0_i32_0 : i32, i32
  }
  func.func @transform_5(%arg0: i32, %arg1: i32) -> (i32, i32) {
    %c0_i32 = arith.constant 0 : i32
    %c0_i32_0 = arith.constant 0 : i32
    %c0_i32_1 = arith.constant 0 : i32
    return %c0_i32, %c0_i32_0 : i32, i32
  }
  func.func @transform_6(%arg0: i32, %arg1: i32) -> (i32, i32) {
    %c0_i32 = arith.constant 0 : i32
    %c0_i32_0 = arith.constant 0 : i32
    %c0_i32_1 = arith.constant 0 : i32
    return %c0_i32, %c0_i32_0 : i32, i32
  }
  func.func @transform_7(%arg0: i32, %arg1: i32) -> (i32, i32, i32) {
    %c0_i32 = arith.constant 0 : i32
    %c0_i32_0 = arith.constant 0 : i32
    %c0_i32_1 = arith.constant 0 : i32
    %c0_i32_2 = arith.constant 0 : i32
    return %c0_i32, %c0_i32_0, %c0_i32_1 : i32, i32, i32
  }
  func.func @transform_8(%arg0: i32, %arg1: i32) -> (i32, i32) {
    %c0_i32 = arith.constant 0 : i32
    %c0_i32_0 = arith.constant 0 : i32
    %c0_i32_1 = arith.constant 0 : i32
    return %c0_i32, %c0_i32_0 : i32, i32
  }
  func.func @transform_9(%arg0: i32, %arg1: i32) -> (i32, i32) {
    %c0_i32 = arith.constant 0 : i32
    %c0_i32_0 = arith.constant 0 : i32
    %c0_i32_1 = arith.constant 0 : i32
    return %c0_i32, %c0_i32_0 : i32, i32
  }
  func.func @transform_10(%arg0: i32, %arg1: i32) -> (i32, i32) {
    %c0_i32 = arith.constant 0 : i32
    %c0_i32_0 = arith.constant 0 : i32
    %c0_i32_1 = arith.constant 0 : i32
    return %c0_i32, %c0_i32_0 : i32, i32
  }
  func.func @transform_11(%arg0: i32, %arg1: i32) -> (i32, i32) {
    %c0_i32 = arith.constant 0 : i32
    %c0_i32_0 = arith.constant 0 : i32
    %c0_i32_1 = arith.constant 0 : i32
    return %c0_i32, %c0_i32_0 : i32, i32
  }
  func.func @transform_12(%arg0: i32, %arg1: i32) -> (i32, i32) {
    %c0_i32 = arith.constant 0 : i32
    %c0_i32_0 = arith.constant 0 : i32
    %c0_i32_1 = arith.constant 0 : i32
    return %c0_i32, %c0_i32_0 : i32, i32
  }
  func.func @transform_13(%arg0: i32, %arg1: i32) -> (i32, i32) {
    %c0_i32 = arith.constant 0 : i32
    %c0_i32_0 = arith.constant 0 : i32
    %c0_i32_1 = arith.constant 0 : i32
    return %c0_i32, %c0_i32_0 : i32, i32
  }
  func.func @transform_14(%arg0: i32, %arg1: i32) -> (i32, i32, i32, i32) {
    %c0_i32 = arith.constant 0 : i32
    %c0_i32_0 = arith.constant 0 : i32
    %c0_i32_1 = arith.constant 0 : i32
    return %arg0, %arg1, %c0_i32, %c0_i32_0 : i32, i32, i32, i32
  }
}

module attributes {stable_mosaic.version = 11 : i64} {
  func.func @swin_block_kernel(%arg0: i32, %arg1: i32, %arg2: memref<1x4x8x32xf32, #tpu.memory_space<vmem>>, %arg3: memref<1x32xf32, #tpu.memory_space<vmem>>, %arg4: memref<1x32xf32, #tpu.memory_space<vmem>>, %arg5: memref<32x96xbf16, #tpu.memory_space<vmem>>, %arg6: memref<1x96xf32, #tpu.memory_space<vmem>>, %arg7: memref<32x32xbf16, #tpu.memory_space<vmem>>, %arg8: memref<1x32xf32, #tpu.memory_space<vmem>>, %arg9: memref<4x16x16xf32, #tpu.memory_space<vmem>>, %arg10: memref<1x32xf32, #tpu.memory_space<vmem>>, %arg11: memref<1x32xf32, #tpu.memory_space<vmem>>, %arg12: memref<32x128xbf16, #tpu.memory_space<vmem>>, %arg13: memref<1x128xf32, #tpu.memory_space<vmem>>, %arg14: memref<128x32xbf16, #tpu.memory_space<vmem>>, %arg15: memref<1x32xf32, #tpu.memory_space<vmem>>, %arg16: memref<4x16x16xf32, #tpu.memory_space<vmem>>, %arg17: memref<1x4x8x32xf32, #tpu.memory_space<vmem>>) attributes {dimension_semantics = [#tpu.dimension_semantics<parallel>, #tpu.dimension_semantics<parallel>], iteration_bounds = array<i64: 2, 2>, scalar_prefetch = 0 : i64, scratch_operands = 0 : i64, tpu.core_type = #tpu.core_type<tc>, window_params = [{transform_indices = @transform_0, window_bounds = array<i64: 1, 4, 8, 32>}, {pipeline_mode = #tpu.pipeline_mode<synchronous>, transform_indices = @transform_1, window_bounds = array<i64: 1, 32>}, {pipeline_mode = #tpu.pipeline_mode<synchronous>, transform_indices = @transform_2, window_bounds = array<i64: 1, 32>}, {pipeline_mode = #tpu.pipeline_mode<synchronous>, transform_indices = @transform_3, window_bounds = array<i64: 32, 96>}, {pipeline_mode = #tpu.pipeline_mode<synchronous>, transform_indices = @transform_4, window_bounds = array<i64: 1, 96>}, {pipeline_mode = #tpu.pipeline_mode<synchronous>, transform_indices = @transform_5, window_bounds = array<i64: 32, 32>}, {pipeline_mode = #tpu.pipeline_mode<synchronous>, transform_indices = @transform_6, window_bounds = array<i64: 1, 32>}, {pipeline_mode = #tpu.pipeline_mode<synchronous>, transform_indices = @transform_7, window_bounds = array<i64: 4, 16, 16>}, {pipeline_mode = #tpu.pipeline_mode<synchronous>, transform_indices = @transform_8, window_bounds = array<i64: 1, 32>}, {pipeline_mode = #tpu.pipeline_mode<synchronous>, transform_indices = @transform_9, window_bounds = array<i64: 1, 32>}, {pipeline_mode = #tpu.pipeline_mode<synchronous>, transform_indices = @transform_10, window_bounds = array<i64: 32, 128>}, {pipeline_mode = #tpu.pipeline_mode<synchronous>, transform_indices = @transform_11, window_bounds = array<i64: 1, 128>}, {pipeline_mode = #tpu.pipeline_mode<synchronous>, transform_indices = @transform_12, window_bounds = array<i64: 128, 32>}, {pipeline_mode = #tpu.pipeline_mode<synchronous>, transform_indices = @transform_13, window_bounds = array<i64: 1, 32>}, {pipeline_mode = #tpu.pipeline_mode<synchronous>, transform_indices = @transform_14, window_bounds = array<i64: 4, 16, 16>}, {transform_indices = @transform_15, window_bounds = array<i64: 1, 4, 8, 32>}]} {
    %c0 = arith.constant 0 : index
    %c0_0 = arith.constant 0 : index
    %c0_1 = arith.constant 0 : index
    %c0_2 = arith.constant 0 : index
    %0 = vector.load %arg2[%c0, %c0_0, %c0_1, %c0_2] : memref<1x4x8x32xf32, #tpu.memory_space<vmem>>, vector<1x4x8x32xf32>
    %1 = vector.shape_cast %0 : vector<1x4x8x32xf32> to vector<4x8x32xf32>
    %2 = vector.shape_cast %1 : vector<4x8x32xf32> to vector<4x2x4x32xf32>
    %3 = tpu.transpose %2, [1, 0, 2, 3] : vector<4x2x4x32xf32> -> vector<2x4x4x32xf32>
    %4 = vector.shape_cast %3 : vector<2x4x4x32xf32> to vector<32x32xf32>
    %cst = arith.constant dense<0.000000e+00> : vector<32xf32>
    %5 = vector.multi_reduction <add>, %4, %cst [1] : vector<32x32xf32> to vector<32xf32>
    %6 = vector.shape_cast %5 : vector<32xf32> to vector<32x1xf32>
    %cst_3 = arith.constant 3.200000e+01 : f32
    %7 = vector.broadcast %cst_3 : f32 to vector<32x1xf32>
    %8 = arith.divf %6, %7 : vector<32x1xf32>
    %9 = vector.broadcast %8 : vector<32x1xf32> to vector<32x32xf32>
    %10 = arith.subf %4, %9 : vector<32x32xf32>
    %11 = arith.mulf %10, %10 : vector<32x32xf32>
    %cst_4 = arith.constant dense<0.000000e+00> : vector<32xf32>
    %12 = vector.multi_reduction <add>, %11, %cst_4 [1] : vector<32x32xf32> to vector<32xf32>
    %13 = vector.shape_cast %12 : vector<32xf32> to vector<32x1xf32>
    %cst_5 = arith.constant 3.200000e+01 : f32
    %14 = vector.broadcast %cst_5 : f32 to vector<32x1xf32>
    %15 = arith.divf %13, %14 : vector<32x1xf32>
    %cst_6 = arith.constant 9.99999974E-6 : f32
    %16 = vector.broadcast %cst_6 : f32 to vector<32x1xf32>
    %17 = arith.addf %15, %16 : vector<32x1xf32>
    %18 = math.rsqrt %17 : vector<32x1xf32>
    %19 = vector.broadcast %18 : vector<32x1xf32> to vector<32x32xf32>
    %20 = arith.mulf %10, %19 : vector<32x32xf32>
    %c0_7 = arith.constant 0 : index
    %c0_8 = arith.constant 0 : index
    %21 = vector.load %arg3[%c0_7, %c0_8] : memref<1x32xf32, #tpu.memory_space<vmem>>, vector<1x32xf32>
    %22 = vector.broadcast %21 : vector<1x32xf32> to vector<32x32xf32>
    %23 = arith.mulf %20, %22 : vector<32x32xf32>
    %c0_9 = arith.constant 0 : index
    %c0_10 = arith.constant 0 : index
    %24 = vector.load %arg4[%c0_9, %c0_10] : memref<1x32xf32, #tpu.memory_space<vmem>>, vector<1x32xf32>
    %25 = vector.broadcast %24 : vector<1x32xf32> to vector<32x32xf32>
    %26 = arith.addf %23, %25 : vector<32x32xf32>
    %27 = arith.truncf %26 : vector<32x32xf32> to vector<32x32xbf16>
    %c0_11 = arith.constant 0 : index
    %c0_12 = arith.constant 0 : index
    %28 = vector.load %arg5[%c0_11, %c0_12] : memref<32x96xbf16, #tpu.memory_space<vmem>>, vector<32x96xbf16>
    %cst_13 = arith.constant dense<0.000000e+00> : vector<32x96xf32>
    %29 = tpu.matmul %27, %28, %cst_13 {dimension_numbers = #tpu.dot_dimension_numbers<[1], [0], [0], [1], [0, 0, 1, 1], [], []>} : vector<32x32xbf16>, vector<32x96xbf16>, vector<32x96xf32> -> vector<32x96xf32>
    %c0_14 = arith.constant 0 : index
    %c0_15 = arith.constant 0 : index
    %30 = vector.load %arg6[%c0_14, %c0_15] : memref<1x96xf32, #tpu.memory_space<vmem>>, vector<1x96xf32>
    %31 = vector.broadcast %30 : vector<1x96xf32> to vector<32x96xf32>
    %32 = arith.addf %29, %31 : vector<32x96xf32>
    %33 = vector.extract_strided_slice %32 {offsets = [0, 0], sizes = [32, 8], strides = [1, 1]} : vector<32x96xf32> to vector<32x8xf32>
    %34 = vector.extract_strided_slice %32 {offsets = [0, 8], sizes = [32, 8], strides = [1, 1]} : vector<32x96xf32> to vector<32x8xf32>
    %35 = vector.extract_strided_slice %32 {offsets = [0, 16], sizes = [32, 8], strides = [1, 1]} : vector<32x96xf32> to vector<32x8xf32>
    %36 = vector.extract_strided_slice %32 {offsets = [0, 24], sizes = [32, 8], strides = [1, 1]} : vector<32x96xf32> to vector<32x8xf32>
    %37 = tpu.concatenate %33, %34, %35, %36 in 0 : vector<32x8xf32>, vector<32x8xf32>, vector<32x8xf32>, vector<32x8xf32> -> vector<128x8xf32>
    %38 = vector.shape_cast %37 : vector<128x8xf32> to vector<8x16x8xf32>
    %39 = vector.extract_strided_slice %32 {offsets = [0, 32], sizes = [32, 8], strides = [1, 1]} : vector<32x96xf32> to vector<32x8xf32>
    %40 = vector.extract_strided_slice %32 {offsets = [0, 40], sizes = [32, 8], strides = [1, 1]} : vector<32x96xf32> to vector<32x8xf32>
    %41 = vector.extract_strided_slice %32 {offsets = [0, 48], sizes = [32, 8], strides = [1, 1]} : vector<32x96xf32> to vector<32x8xf32>
    %42 = vector.extract_strided_slice %32 {offsets = [0, 56], sizes = [32, 8], strides = [1, 1]} : vector<32x96xf32> to vector<32x8xf32>
    %43 = tpu.concatenate %39, %40, %41, %42 in 0 : vector<32x8xf32>, vector<32x8xf32>, vector<32x8xf32>, vector<32x8xf32> -> vector<128x8xf32>
    %44 = vector.shape_cast %43 : vector<128x8xf32> to vector<8x16x8xf32>
    %45 = vector.extract_strided_slice %32 {offsets = [0, 64], sizes = [32, 8], strides = [1, 1]} : vector<32x96xf32> to vector<32x8xf32>
    %46 = vector.extract_strided_slice %32 {offsets = [0, 72], sizes = [32, 8], strides = [1, 1]} : vector<32x96xf32> to vector<32x8xf32>
    %47 = vector.extract_strided_slice %32 {offsets = [0, 80], sizes = [32, 8], strides = [1, 1]} : vector<32x96xf32> to vector<32x8xf32>
    %48 = vector.extract_strided_slice %32 {offsets = [0, 88], sizes = [32, 8], strides = [1, 1]} : vector<32x96xf32> to vector<32x8xf32>
    %49 = tpu.concatenate %45, %46, %47, %48 in 0 : vector<32x8xf32>, vector<32x8xf32>, vector<32x8xf32>, vector<32x8xf32> -> vector<128x8xf32>
    %50 = vector.shape_cast %49 : vector<128x8xf32> to vector<8x16x8xf32>
    %51 = arith.truncf %38 : vector<8x16x8xf32> to vector<8x16x8xbf16>
    %52 = arith.truncf %44 : vector<8x16x8xf32> to vector<8x16x8xbf16>
    "tpu.trace_start"() <{level = 10 : i32, message = "bnd,bmd->bnm"}> : () -> ()
    %cst_16 = arith.constant dense<0.000000e+00> : vector<8x16x16xf32>
    %53 = tpu.matmul %51, %52, %cst_16 {dimension_numbers = #tpu.dot_dimension_numbers<[2], [2], [1], [1], [0, 0, 0, 1, 1, 1], [0], [0]>} : vector<8x16x8xbf16>, vector<8x16x8xbf16>, vector<8x16x16xf32> -> vector<8x16x16xf32>
    "tpu.trace_stop"() : () -> ()
    %54 = vector.shape_cast %53 : vector<8x16x16xf32> to vector<4x2x16x16xf32>
    %c0_17 = arith.constant 0 : index
    %c0_18 = arith.constant 0 : index
    %c0_19 = arith.constant 0 : index
    %55 = vector.load %arg9[%c0_17, %c0_18, %c0_19] : memref<4x16x16xf32, #tpu.memory_space<vmem>>, vector<4x16x16xf32>
    %56 = vector.shape_cast %55 : vector<4x16x16xf32> to vector<4x1x16x16xf32>
    %57 = vector.broadcast %56 : vector<4x1x16x16xf32> to vector<4x2x16x16xf32>
    %58 = arith.addf %54, %57 : vector<4x2x16x16xf32>
    %c2_i32 = arith.constant 2 : i32
    %59 = arith.muli %arg1, %c2_i32 : i32
    %60 = tpu.assume_multiple %59, 2 : i32
    %61 = arith.index_cast %60 : i32 to index
    %c0_20 = arith.constant 0 : index
    %c0_21 = arith.constant 0 : index
    %62 = vector.load %arg16[%61, %c0_20, %c0_21] : memref<4x16x16xf32, #tpu.memory_space<vmem>>, vector<2x16x16xf32>
    %63 = vector.shape_cast %62 : vector<2x16x16xf32> to vector<1x2x16x16xf32>
    %64 = vector.broadcast %63 : vector<1x2x16x16xf32> to vector<4x2x16x16xf32>
    %65 = arith.addf %58, %64 : vector<4x2x16x16xf32>
    %cst_22 = arith.constant dense<0xFF800000> : vector<4x2x16xf32>
    %66 = vector.multi_reduction <maximumf>, %65, %cst_22 [3] : vector<4x2x16x16xf32> to vector<4x2x16xf32>
    %67 = vector.shape_cast %66 : vector<4x2x16xf32> to vector<4x2x16x1xf32>
    %68 = vector.broadcast %67 : vector<4x2x16x1xf32> to vector<4x2x16x16xf32>
    %69 = arith.subf %65, %68 : vector<4x2x16x16xf32>
    %70 = math.exp %69 : vector<4x2x16x16xf32>
    %cst_23 = arith.constant dense<0.000000e+00> : vector<4x2x16xf32>
    %71 = vector.multi_reduction <add>, %70, %cst_23 [3] : vector<4x2x16x16xf32> to vector<4x2x16xf32>
    %72 = vector.shape_cast %71 : vector<4x2x16xf32> to vector<4x2x16x1xf32>
    %73 = tpu.reciprocal %72 {approx = true} : vector<4x2x16x1xf32> -> vector<4x2x16x1xf32>
    %74 = vector.broadcast %73 : vector<4x2x16x1xf32> to vector<4x2x16x16xf32>
    %75 = arith.mulf %70, %74 : vector<4x2x16x16xf32>
    %76 = vector.shape_cast %75 : vector<4x2x16x16xf32> to vector<8x16x16xf32>
    %77 = arith.truncf %76 : vector<8x16x16xf32> to vector<8x16x16xbf16>
    %78 = arith.truncf %50 : vector<8x16x8xf32> to vector<8x16x8xbf16>
    "tpu.trace_start"() <{level = 10 : i32, message = "bnm,bmd->bnd"}> : () -> ()
    %cst_24 = arith.constant dense<0.000000e+00> : vector<8x16x8xf32>
    %79 = tpu.matmul %77, %78, %cst_24 {dimension_numbers = #tpu.dot_dimension_numbers<[2], [1], [1], [2], [0, 0, 0, 1, 1, 2], [0], [0]>} : vector<8x16x16xbf16>, vector<8x16x8xbf16>, vector<8x16x8xf32> -> vector<8x16x8xf32>
    "tpu.trace_stop"() : () -> ()
    %80 = vector.shape_cast %79 : vector<8x16x8xf32> to vector<4x32x8xf32>
    %81 = vector.extract_strided_slice %80 {offsets = [0, 0, 0], sizes = [1, 32, 8], strides = [1, 1, 1]} : vector<4x32x8xf32> to vector<1x32x8xf32>
    %82 = vector.shape_cast %81 : vector<1x32x8xf32> to vector<32x8xf32>
    %83 = vector.extract_strided_slice %80 {offsets = [1, 0, 0], sizes = [1, 32, 8], strides = [1, 1, 1]} : vector<4x32x8xf32> to vector<1x32x8xf32>
    %84 = vector.shape_cast %83 : vector<1x32x8xf32> to vector<32x8xf32>
    %85 = vector.extract_strided_slice %80 {offsets = [2, 0, 0], sizes = [1, 32, 8], strides = [1, 1, 1]} : vector<4x32x8xf32> to vector<1x32x8xf32>
    %86 = vector.shape_cast %85 : vector<1x32x8xf32> to vector<32x8xf32>
    %87 = vector.extract_strided_slice %80 {offsets = [3, 0, 0], sizes = [1, 32, 8], strides = [1, 1, 1]} : vector<4x32x8xf32> to vector<1x32x8xf32>
    %88 = vector.shape_cast %87 : vector<1x32x8xf32> to vector<32x8xf32>
    %89 = tpu.concatenate %82, %84, %86, %88 in 1 : vector<32x8xf32>, vector<32x8xf32>, vector<32x8xf32>, vector<32x8xf32> -> vector<32x32xf32>
    %90 = arith.truncf %89 : vector<32x32xf32> to vector<32x32xbf16>
    %c0_25 = arith.constant 0 : index
    %c0_26 = arith.constant 0 : index
    %91 = vector.load %arg7[%c0_25, %c0_26] : memref<32x32xbf16, #tpu.memory_space<vmem>>, vector<32x32xbf16>
    %cst_27 = arith.constant dense<0.000000e+00> : vector<32x32xf32>
    %92 = tpu.matmul %90, %91, %cst_27 {dimension_numbers = #tpu.dot_dimension_numbers<[1], [0], [0], [1], [0, 0, 1, 1], [], []>} : vector<32x32xbf16>, vector<32x32xbf16>, vector<32x32xf32> -> vector<32x32xf32>
    %c0_28 = arith.constant 0 : index
    %c0_29 = arith.constant 0 : index
    %93 = vector.load %arg8[%c0_28, %c0_29] : memref<1x32xf32, #tpu.memory_space<vmem>>, vector<1x32xf32>
    %94 = vector.broadcast %93 : vector<1x32xf32> to vector<32x32xf32>
    %95 = arith.addf %92, %94 : vector<32x32xf32>
    %96 = arith.addf %4, %95 : vector<32x32xf32>
    %cst_30 = arith.constant dense<0.000000e+00> : vector<32xf32>
    %97 = vector.multi_reduction <add>, %96, %cst_30 [1] : vector<32x32xf32> to vector<32xf32>
    %98 = vector.shape_cast %97 : vector<32xf32> to vector<32x1xf32>
    %cst_31 = arith.constant 3.200000e+01 : f32
    %99 = vector.broadcast %cst_31 : f32 to vector<32x1xf32>
    %100 = arith.divf %98, %99 : vector<32x1xf32>
    %101 = vector.broadcast %100 : vector<32x1xf32> to vector<32x32xf32>
    %102 = arith.subf %96, %101 : vector<32x32xf32>
    %103 = arith.mulf %102, %102 : vector<32x32xf32>
    %cst_32 = arith.constant dense<0.000000e+00> : vector<32xf32>
    %104 = vector.multi_reduction <add>, %103, %cst_32 [1] : vector<32x32xf32> to vector<32xf32>
    %105 = vector.shape_cast %104 : vector<32xf32> to vector<32x1xf32>
    %cst_33 = arith.constant 3.200000e+01 : f32
    %106 = vector.broadcast %cst_33 : f32 to vector<32x1xf32>
    %107 = arith.divf %105, %106 : vector<32x1xf32>
    %cst_34 = arith.constant 9.99999974E-6 : f32
    %108 = vector.broadcast %cst_34 : f32 to vector<32x1xf32>
    %109 = arith.addf %107, %108 : vector<32x1xf32>
    %110 = math.rsqrt %109 : vector<32x1xf32>
    %111 = vector.broadcast %110 : vector<32x1xf32> to vector<32x32xf32>
    %112 = arith.mulf %102, %111 : vector<32x32xf32>
    %c0_35 = arith.constant 0 : index
    %c0_36 = arith.constant 0 : index
    %113 = vector.load %arg10[%c0_35, %c0_36] : memref<1x32xf32, #tpu.memory_space<vmem>>, vector<1x32xf32>
    %114 = vector.broadcast %113 : vector<1x32xf32> to vector<32x32xf32>
    %115 = arith.mulf %112, %114 : vector<32x32xf32>
    %c0_37 = arith.constant 0 : index
    %c0_38 = arith.constant 0 : index
    %116 = vector.load %arg11[%c0_37, %c0_38] : memref<1x32xf32, #tpu.memory_space<vmem>>, vector<1x32xf32>
    %117 = vector.broadcast %116 : vector<1x32xf32> to vector<32x32xf32>
    %118 = arith.addf %115, %117 : vector<32x32xf32>
    %119 = arith.truncf %118 : vector<32x32xf32> to vector<32x32xbf16>
    %c0_39 = arith.constant 0 : index
    %c0_40 = arith.constant 0 : index
    %120 = vector.load %arg12[%c0_39, %c0_40] : memref<32x128xbf16, #tpu.memory_space<vmem>>, vector<32x128xbf16>
    %cst_41 = arith.constant dense<0.000000e+00> : vector<32x128xf32>
    %121 = tpu.matmul %119, %120, %cst_41 {dimension_numbers = #tpu.dot_dimension_numbers<[1], [0], [0], [1], [0, 0, 1, 1], [], []>} : vector<32x32xbf16>, vector<32x128xbf16>, vector<32x128xf32> -> vector<32x128xf32>
    %c0_42 = arith.constant 0 : index
    %c0_43 = arith.constant 0 : index
    %122 = vector.load %arg13[%c0_42, %c0_43] : memref<1x128xf32, #tpu.memory_space<vmem>>, vector<1x128xf32>
    %123 = vector.broadcast %122 : vector<1x128xf32> to vector<32x128xf32>
    %124 = arith.addf %121, %123 : vector<32x128xf32>
    %cst_44 = arith.constant 5.000000e-01 : f32
    %125 = vector.broadcast %cst_44 : f32 to vector<32x128xf32>
    %126 = arith.mulf %125, %124 : vector<32x128xf32>
    %cst_45 = arith.constant 4.471500e-02 : f32
    %127 = vector.broadcast %cst_45 : f32 to vector<32x128xf32>
    %128 = arith.mulf %127, %124 : vector<32x128xf32>
    %129 = arith.mulf %128, %124 : vector<32x128xf32>
    %130 = arith.mulf %129, %124 : vector<32x128xf32>
    %131 = arith.addf %124, %130 : vector<32x128xf32>
    %cst_46 = arith.constant 0.797884583 : f32
    %132 = vector.broadcast %cst_46 : f32 to vector<32x128xf32>
    %133 = arith.mulf %132, %131 : vector<32x128xf32>
    %134 = math.tanh %133 : vector<32x128xf32>
    %cst_47 = arith.constant 1.000000e+00 : f32
    %135 = vector.broadcast %cst_47 : f32 to vector<32x128xf32>
    %136 = arith.addf %135, %134 : vector<32x128xf32>
    %137 = arith.mulf %126, %136 : vector<32x128xf32>
    %138 = arith.truncf %137 : vector<32x128xf32> to vector<32x128xbf16>
    %c0_48 = arith.constant 0 : index
    %c0_49 = arith.constant 0 : index
    %139 = vector.load %arg14[%c0_48, %c0_49] : memref<128x32xbf16, #tpu.memory_space<vmem>>, vector<128x32xbf16>
    %cst_50 = arith.constant dense<0.000000e+00> : vector<32x32xf32>
    %140 = tpu.matmul %138, %139, %cst_50 {dimension_numbers = #tpu.dot_dimension_numbers<[1], [0], [0], [1], [0, 0, 1, 1], [], []>} : vector<32x128xbf16>, vector<128x32xbf16>, vector<32x32xf32> -> vector<32x32xf32>
    %c0_51 = arith.constant 0 : index
    %c0_52 = arith.constant 0 : index
    %141 = vector.load %arg15[%c0_51, %c0_52] : memref<1x32xf32, #tpu.memory_space<vmem>>, vector<1x32xf32>
    %142 = vector.broadcast %141 : vector<1x32xf32> to vector<32x32xf32>
    %143 = arith.addf %140, %142 : vector<32x32xf32>
    %144 = arith.addf %96, %143 : vector<32x32xf32>
    %145 = vector.shape_cast %144 : vector<32x32xf32> to vector<2x4x4x32xf32>
    %146 = tpu.transpose %145, [1, 0, 2, 3] : vector<2x4x4x32xf32> -> vector<4x2x4x32xf32>
    %147 = vector.shape_cast %146 : vector<4x2x4x32xf32> to vector<1x4x8x32xf32>
    %c0_53 = arith.constant 0 : index
    %c0_54 = arith.constant 0 : index
    %c0_55 = arith.constant 0 : index
    %c0_56 = arith.constant 0 : index
    %148 = vector.load %arg17[%c0_53, %c0_54, %c0_55, %c0_56] : memref<1x4x8x32xf32, #tpu.memory_space<vmem>>, vector<1x4x8x32xf32>
    tpu.vector_store %arg17[%c0_53, %c0_54, %c0_55, %c0_56], %147 {strides = array<i32>} : memref<1x4x8x32xf32, #tpu.memory_space<vmem>>, vector<1x4x8x32xf32>,
    return
  }
  func.func @transform_0(%arg0: i32, %arg1: i32) -> (i32, i32, i32, i32) {
    %c0_i32 = arith.constant 0 : i32
    %c0_i32_0 = arith.constant 0 : i32
    %c0_i32_1 = arith.constant 0 : i32
    return %arg0, %arg1, %c0_i32, %c0_i32_0 : i32, i32, i32, i32
  }
  func.func @transform_1(%arg0: i32, %arg1: i32) -> (i32, i32) {
    %c0_i32 = arith.constant 0 : i32
    %c0_i32_0 = arith.constant 0 : i32
    %c0_i32_1 = arith.constant 0 : i32
    return %c0_i32, %c0_i32_0 : i32, i32
  }
  func.func @transform_2(%arg0: i32, %arg1: i32) -> (i32, i32) {
    %c0_i32 = arith.constant 0 : i32
    %c0_i32_0 = arith.constant 0 : i32
    %c0_i32_1 = arith.constant 0 : i32
    return %c0_i32, %c0_i32_0 : i32, i32
  }
  func.func @transform_3(%arg0: i32, %arg1: i32) -> (i32, i32) {
    %c0_i32 = arith.constant 0 : i32
    %c0_i32_0 = arith.constant 0 : i32
    %c0_i32_1 = arith.constant 0 : i32
    return %c0_i32, %c0_i32_0 : i32, i32
  }
  func.func @transform_4(%arg0: i32, %arg1: i32) -> (i32, i32) {
    %c0_i32 = arith.constant 0 : i32
    %c0_i32_0 = arith.constant 0 : i32
    %c0_i32_1 = arith.constant 0 : i32
    return %c0_i32, %c0_i32_0 : i32, i32
  }
  func.func @transform_5(%arg0: i32, %arg1: i32) -> (i32, i32) {
    %c0_i32 = arith.constant 0 : i32
    %c0_i32_0 = arith.constant 0 : i32
    %c0_i32_1 = arith.constant 0 : i32
    return %c0_i32, %c0_i32_0 : i32, i32
  }
  func.func @transform_6(%arg0: i32, %arg1: i32) -> (i32, i32) {
    %c0_i32 = arith.constant 0 : i32
    %c0_i32_0 = arith.constant 0 : i32
    %c0_i32_1 = arith.constant 0 : i32
    return %c0_i32, %c0_i32_0 : i32, i32
  }
  func.func @transform_7(%arg0: i32, %arg1: i32) -> (i32, i32, i32) {
    %c0_i32 = arith.constant 0 : i32
    %c0_i32_0 = arith.constant 0 : i32
    %c0_i32_1 = arith.constant 0 : i32
    %c0_i32_2 = arith.constant 0 : i32
    return %c0_i32, %c0_i32_0, %c0_i32_1 : i32, i32, i32
  }
  func.func @transform_8(%arg0: i32, %arg1: i32) -> (i32, i32) {
    %c0_i32 = arith.constant 0 : i32
    %c0_i32_0 = arith.constant 0 : i32
    %c0_i32_1 = arith.constant 0 : i32
    return %c0_i32, %c0_i32_0 : i32, i32
  }
  func.func @transform_9(%arg0: i32, %arg1: i32) -> (i32, i32) {
    %c0_i32 = arith.constant 0 : i32
    %c0_i32_0 = arith.constant 0 : i32
    %c0_i32_1 = arith.constant 0 : i32
    return %c0_i32, %c0_i32_0 : i32, i32
  }
  func.func @transform_10(%arg0: i32, %arg1: i32) -> (i32, i32) {
    %c0_i32 = arith.constant 0 : i32
    %c0_i32_0 = arith.constant 0 : i32
    %c0_i32_1 = arith.constant 0 : i32
    return %c0_i32, %c0_i32_0 : i32, i32
  }
  func.func @transform_11(%arg0: i32, %arg1: i32) -> (i32, i32) {
    %c0_i32 = arith.constant 0 : i32
    %c0_i32_0 = arith.constant 0 : i32
    %c0_i32_1 = arith.constant 0 : i32
    return %c0_i32, %c0_i32_0 : i32, i32
  }
  func.func @transform_12(%arg0: i32, %arg1: i32) -> (i32, i32) {
    %c0_i32 = arith.constant 0 : i32
    %c0_i32_0 = arith.constant 0 : i32
    %c0_i32_1 = arith.constant 0 : i32
    return %c0_i32, %c0_i32_0 : i32, i32
  }
  func.func @transform_13(%arg0: i32, %arg1: i32) -> (i32, i32) {
    %c0_i32 = arith.constant 0 : i32
    %c0_i32_0 = arith.constant 0 : i32
    %c0_i32_1 = arith.constant 0 : i32
    return %c0_i32, %c0_i32_0 : i32, i32
  }
  func.func @transform_14(%arg0: i32, %arg1: i32) -> (i32, i32, i32) {
    %c0_i32 = arith.constant 0 : i32
    %c0_i32_0 = arith.constant 0 : i32
    %c0_i32_1 = arith.constant 0 : i32
    %c0_i32_2 = arith.constant 0 : i32
    return %c0_i32, %c0_i32_0, %c0_i32_1 : i32, i32, i32
  }
  func.func @transform_15(%arg0: i32, %arg1: i32) -> (i32, i32, i32, i32) {
    %c0_i32 = arith.constant 0 : i32
    %c0_i32_0 = arith.constant 0 : i32
    %c0_i32_1 = arith.constant 0 : i32
    return %arg0, %arg1, %c0_i32, %c0_i32_0 : i32, i32, i32, i32
  }
}

</mosaic_0001>

<llo_original>
// kernel: _lambda_.2
$region0: #{_lambda_.2}
  #allocation0 [shape = 'u32[]', space=smem, size = 0x4, offset = 0x4, fixed_abs, tag = 'smem constant byte address 0x4 - core index']
  #allocation1 [shape = 'u32[72,128]{1,0:T(1,128)}', space=vmem, size = 0x9000, scoped, tag = 'internal scratch']
  %s0 = inlined_call_operand.vmem [shape: f32[2,8,8,32], index: 0, kind: input, shape index: {}]
  %s1 = inlined_call_operand.vmem [shape: f32[1,32], index: 1, kind: input, shape index: {}]
  %s2 = inlined_call_operand.vmem [shape: f32[1,32], index: 2, kind: input, shape index: {}]
  %s3 = inlined_call_operand.vmem [shape: bf16[32,96], index: 3, kind: input, shape index: {}]
  %s4 = inlined_call_operand.vmem [shape: f32[1,96], index: 4, kind: input, shape index: {}]
  %s5 = inlined_call_operand.vmem [shape: bf16[32,32], index: 5, kind: input, shape index: {}]
  %s6 = inlined_call_operand.vmem [shape: f32[1,32], index: 6, kind: input, shape index: {}]
  %s7 = inlined_call_operand.vmem [shape: f32[4,16,16], index: 7, kind: input, shape index: {}]
  %s8 = inlined_call_operand.vmem [shape: f32[1,32], index: 8, kind: input, shape index: {}]
  %s9 = inlined_call_operand.vmem [shape: f32[1,32], index: 9, kind: input, shape index: {}]
  %s10 = inlined_call_operand.vmem [shape: bf16[32,128], index: 10, kind: input, shape index: {}]
  %s11 = inlined_call_operand.vmem [shape: f32[1,128], index: 11, kind: input, shape index: {}]
  %s12 = inlined_call_operand.vmem [shape: bf16[128,32], index: 12, kind: input, shape index: {}]
  %s13 = inlined_call_operand.vmem [shape: f32[1,32], index: 13, kind: input, shape index: {}]
  %s14 = inlined_call_operand.vmem [shape: f32[2,8,8,32], index: 14, kind: output, shape index: {}]
  %s15 = sld [smem:[#allocation0]]
  $region89: #{_lambda_.2} parent=0
    _
  %s17 = ssub.s32 1, %s15
  %s18 = scalar_select 0, %s17, %s15
  loop: start=0, step=1, limit=6
  $region2: #{_lambda_.2} parent=0 // loop_pre_header
    _
  $region3: #{_lambda_.2} parent=0 // loop_header
    %s20 = sphi 0, %s24
    %p21 = scmp.ge.s32.totalorder %s20, 6
    %s27 = sphi 0, %s39
    %s28 = sphi 0, %s35
    %s29 = sphi 0, %s27
    %s30 = sphi 0, %s28
    %s31 = sphi 0, %s29
    %s32 = sphi 0, %s30
    %s44 = sphi 0, %s46
    %s47 = sphi 0, %s44
    %s48 = sphi 0, %s47
    %s64 = sphi 0, %s48
    %s68 = sphi 0, %s68
    %s70 = sphi 0, %s68
    %s71 = sphi 0, %s70
    %s85 = sphi 0, %s71
    %s89 = sphi 0, %s89
    %s91 = sphi 0, %s89
    %s92 = sphi 0, %s91
    %s106 = sphi 0, %s92
    %s110 = sphi 0, %s110
    %s112 = sphi 0, %s110
    %s113 = sphi 0, %s112
    %s127 = sphi 0, %s113
    %s131 = sphi 0, %s131
    %s133 = sphi 0, %s131
    %s134 = sphi 0, %s133
    %s148 = sphi 0, %s134
    %s152 = sphi 0, %s152
    %s154 = sphi 0, %s152
    %s155 = sphi 0, %s154
    %s169 = sphi 0, %s155
    %s173 = sphi 0, %s173
    %s175 = sphi 0, %s173
    %s176 = sphi 0, %s175
    %s190 = sphi 0, %s176
    %s194 = sphi 0, %s194
    %s196 = sphi 0, %s194
    %s197 = sphi 0, %s196
    %s211 = sphi 0, %s197
    %s215 = sphi 0, %s215
    %s217 = sphi 0, %s215
    %s218 = sphi 0, %s217
    %s232 = sphi 0, %s218
    %s236 = sphi 0, %s236
    %s238 = sphi 0, %s236
    %s239 = sphi 0, %s238
    %s253 = sphi 0, %s239
    %s257 = sphi 0, %s257
    %s259 = sphi 0, %s257
    %s260 = sphi 0, %s259
    %s274 = sphi 0, %s260
    %s278 = sphi 0, %s278
    %s280 = sphi 0, %s278
    %s281 = sphi 0, %s280
    %s295 = sphi 0, %s281
    %s299 = sphi 0, %s299
    %s301 = sphi 0, %s299
    %s302 = sphi 0, %s301
    %s316 = sphi 0, %s302
    %s320 = sphi 0, %s320
    %s322 = sphi 0, %s320
    %s323 = sphi 0, %s322
    %s337 = sphi 0, %s323
    %s345 = sphi 0, %s347
    %s348 = sphi 0, %s345
    %s349 = sphi 0, %s348
    %s365 = sphi 0, %s349
  $region4: #{_lambda_.2} parent=0 // loop_header_branch
    %23 = sbr.rel (%p21) target = $region8
  $region5: #{_lambda_.2} parent=0 // loop_body
    %s25 = ssub.s32 %s20, 1
    %s26 = ssub.s32 %s20, 2
    %s33 = sadd.s32 1, %s28
    %p34 = scmp.ge.s32.totalorder %s33, 2
    %s35 = scalar_select %p34, 0, %s33
    %s36 = sadd.s32 1, %s27
    %s37 = scalar_select %p34, %s36, %s27
    %p38 = scmp.ge.s32.totalorder %s37, 2
    %s39 = scalar_select %p38, 0, %s37
    %s40 = ssub.s32 %s27, %s39
    %s41 = ssub.s32 %s28, %s35
    %s42 = sor.u32 %s40, %s41
    %p43 = scmp.eq.s32.totalorder %s42, 0
    %s45 = sadd.s32 %s44, 1
    %s46 = scalar_select %p43, %s44, %s45
    %p49 = pneg %p43
    %p50 = scmp.eq.s32.totalorder %s20, 3
    %p51 = por %p49, %p50
    %p52 = scmp.ne.s32.totalorder %s44, %s47
    %p53 = scmp.eq.s32.totalorder %s20, 0
    %p54 = por %p52, %p53
    %p55 = scmp.ne.s32.totalorder %s44, %s47
    %p56 = scmp.eq.s32.totalorder %s25, 3
    %p57 = por %p55, %p56
    %p58 = scmp.ne.s32.totalorder %s47, %s48
    %p59 = scmp.eq.s32.totalorder %s25, 0
    %p60 = por %p58, %p59
    %p61 = scmp.ne.s32.totalorder %s47, %s48
    %p62 = scmp.eq.s32.totalorder %s26, 3
    %p63 = por %p61, %p62
    %p65 = scmp.ne.s32.totalorder %s48, %s64
    %p66 = scmp.eq.s32.totalorder %s26, 0
    %p67 = por %p65, %p66
    %s69 = sadd.s32 %s68, 1
    %p72 = scmp.eq.s32.totalorder %s20, 3
    %p73 = scmp.ne.s32.totalorder %s68, %s70
    %p74 = scmp.eq.s32.totalorder %s20, 0
    %p75 = por %p73, %p74
    %p76 = scmp.ne.s32.totalorder %s68, %s70
    %p77 = scmp.eq.s32.totalorder %s25, 3
    %p78 = por %p76, %p77
    %p79 = scmp.ne.s32.totalorder %s70, %s71
    %p80 = scmp.eq.s32.totalorder %s25, 0
    %p81 = por %p79, %p80
    %p82 = scmp.ne.s32.totalorder %s70, %s71
    %p83 = scmp.eq.s32.totalorder %s26, 3
    %p84 = por %p82, %p83
    %p86 = scmp.ne.s32.totalorder %s71, %s85
    %p87 = scmp.eq.s32.totalorder %s26, 0
    %p88 = por %p86, %p87
    %s90 = sadd.s32 %s89, 1
    %p93 = scmp.eq.s32.totalorder %s20, 3
    %p94 = scmp.ne.s32.totalorder %s89, %s91
    %p95 = scmp.eq.s32.totalorder %s20, 0
    %p96 = por %p94, %p95
    %p97 = scmp.ne.s32.totalorder %s89, %s91
    %p98 = scmp.eq.s32.totalorder %s25, 3
    %p99 = por %p97, %p98
    %p100 = scmp.ne.s32.totalorder %s91, %s92
    %p101 = scmp.eq.s32.totalorder %s25, 0
    %p102 = por %p100, %p101
    %p103 = scmp.ne.s32.totalorder %s91, %s92
    %p104 = scmp.eq.s32.totalorder %s26, 3
    %p105 = por %p103, %p104
    %p107 = scmp.ne.s32.totalorder %s92, %s106
    %p108 = scmp.eq.s32.totalorder %s26, 0
    %p109 = por %p107, %p108
    %s111 = sadd.s32 %s110, 1
    %p114 = scmp.eq.s32.totalorder %s20, 3
    %p115 = scmp.ne.s32.totalorder %s110, %s112
    %p116 = scmp.eq.s32.totalorder %s20, 0
    %p117 = por %p115, %p116
    %p118 = scmp.ne.s32.totalorder %s110, %s112
    %p119 = scmp.eq.s32.totalorder %s25, 3
    %p120 = por %p118, %p119
    %p121 = scmp.ne.s32.totalorder %s112, %s113
    %p122 = scmp.eq.s32.totalorder %s25, 0
    %p123 = por %p121, %p122
    %p124 = scmp.ne.s32.totalorder %s112, %s113
    %p125 = scmp.eq.s32.totalorder %s26, 3
    %p126 = por %p124, %p125
    %p128 = scmp.ne.s32.totalorder %s113, %s127
    %p129 = scmp.eq.s32.totalorder %s26, 0
    %p130 = por %p128, %p129
    %s132 = sadd.s32 %s131, 1
    %p135 = scmp.eq.s32.totalorder %s20, 3
    %p136 = scmp.ne.s32.totalorder %s131, %s133
    %p137 = scmp.eq.s32.totalorder %s20, 0
    %p138 = por %p136, %p137
    %p139 = scmp.ne.s32.totalorder %s131, %s133
    %p140 = scmp.eq.s32.totalorder %s25, 3
    %p141 = por %p139, %p140
    %p142 = scmp.ne.s32.totalorder %s133, %s134
    %p143 = scmp.eq.s32.totalorder %s25, 0
    %p144 = por %p142, %p143
    %p145 = scmp.ne.s32.totalorder %s133, %s134
    %p146 = scmp.eq.s32.totalorder %s26, 3
    %p147 = por %p145, %p146
    %p149 = scmp.ne.s32.totalorder %s134, %s148
    %p150 = scmp.eq.s32.totalorder %s26, 0
    %p151 = por %p149, %p150
    %s153 = sadd.s32 %s152, 1
    %p156 = scmp.eq.s32.totalorder %s20, 3
    %p157 = scmp.ne.s32.totalorder %s152, %s154
    %p158 = scmp.eq.s32.totalorder %s20, 0
    %p159 = por %p157, %p158
    %p160 = scmp.ne.s32.totalorder %s152, %s154
    %p161 = scmp.eq.s32.totalorder %s25, 3
    %p162 = por %p160, %p161
    %p163 = scmp.ne.s32.totalorder %s154, %s155
    %p164 = scmp.eq.s32.totalorder %s25, 0
    %p165 = por %p163, %p164
    %p166 = scmp.ne.s32.totalorder %s154, %s155
    %p167 = scmp.eq.s32.totalorder %s26, 3
    %p168 = por %p166, %p167
    %p170 = scmp.ne.s32.totalorder %s155, %s169
    %p171 = scmp.eq.s32.totalorder %s26, 0
    %p172 = por %p170, %p171
    %s174 = sadd.s32 %s173, 1
    %p177 = scmp.eq.s32.totalorder %s20, 3
    %p178 = scmp.ne.s32.totalorder %s173, %s175
    %p179 = scmp.eq.s32.totalorder %s20, 0
    %p180 = por %p178, %p179
    %p181 = scmp.ne.s32.totalorder %s173, %s175
    %p182 = scmp.eq.s32.totalorder %s25, 3
    %p183 = por %p181, %p182
    %p184 = scmp.ne.s32.totalorder %s175, %s176
    %p185 = scmp.eq.s32.totalorder %s25, 0
    %p186 = por %p184, %p185
    %p187 = scmp.ne.s32.totalorder %s175, %s176
    %p188 = scmp.eq.s32.totalorder %s26, 3
    %p189 = por %p187, %p188
    %p191 = scmp.ne.s32.totalorder %s176, %s190
    %p192 = scmp.eq.s32.totalorder %s26, 0
    %p193 = por %p191, %p192
    %s195 = sadd.s32 %s194, 1
    %p198 = scmp.eq.s32.totalorder %s20, 3
    %p199 = scmp.ne.s32.totalorder %s194, %s196
    %p200 = scmp.eq.s32.totalorder %s20, 0
    %p201 = por %p199, %p200
    %p202 = scmp.ne.s32.totalorder %s194, %s196
    %p203 = scmp.eq.s32.totalorder %s25, 3
    %p204 = por %p202, %p203
    %p205 = scmp.ne.s32.totalorder %s196, %s197
    %p206 = scmp.eq.s32.totalorder %s25, 0
    %p207 = por %p205, %p206
    %p208 = scmp.ne.s32.totalorder %s196, %s197
    %p209 = scmp.eq.s32.totalorder %s26, 3
    %p210 = por %p208, %p209
    %p212 = scmp.ne.s32.totalorder %s197, %s211
    %p213 = scmp.eq.s32.totalorder %s26, 0
    %p214 = por %p212, %p213
    %s216 = sadd.s32 %s215, 1
    %p219 = scmp.eq.s32.totalorder %s20, 3
    %p220 = scmp.ne.s32.totalorder %s215, %s217
    %p221 = scmp.eq.s32.totalorder %s20, 0
    %p222 = por %p220, %p221
    %p223 = scmp.ne.s32.totalorder %s215, %s217
    %p224 = scmp.eq.s32.totalorder %s25, 3
    %p225 = por %p223, %p224
    %p226 = scmp.ne.s32.totalorder %s217, %s218
    %p227 = scmp.eq.s32.totalorder %s25, 0
    %p228 = por %p226, %p227
    %p229 = scmp.ne.s32.totalorder %s217, %s218
    %p230 = scmp.eq.s32.totalorder %s26, 3
    %p231 = por %p229, %p230
    %p233 = scmp.ne.s32.totalorder %s218, %s232
    %p234 = scmp.eq.s32.totalorder %s26, 0
    %p235 = por %p233, %p234
    %s237 = sadd.s32 %s236, 1
    %p240 = scmp.eq.s32.totalorder %s20, 3
    %p241 = scmp.ne.s32.totalorder %s236, %s238
    %p242 = scmp.eq.s32.totalorder %s20, 0
    %p243 = por %p241, %p242
    %p244 = scmp.ne.s32.totalorder %s236, %s238
    %p245 = scmp.eq.s32.totalorder %s25, 3
    %p246 = por %p244, %p245
    %p247 = scmp.ne.s32.totalorder %s238, %s239
    %p248 = scmp.eq.s32.totalorder %s25, 0
    %p249 = por %p247, %p248
    %p250 = scmp.ne.s32.totalorder %s238, %s239
    %p251 = scmp.eq.s32.totalorder %s26, 3
    %p252 = por %p250, %p251
    %p254 = scmp.ne.s32.totalorder %s239, %s253
    %p255 = scmp.eq.s32.totalorder %s26, 0
    %p256 = por %p254, %p255
    %s258 = sadd.s32 %s257, 1
    %p261 = scmp.eq.s32.totalorder %s20, 3
    %p262 = scmp.ne.s32.totalorder %s257, %s259
    %p263 = scmp.eq.s32.totalorder %s20, 0
    %p264 = por %p262, %p263
    %p265 = scmp.ne.s32.totalorder %s257, %s259
    %p266 = scmp.eq.s32.totalorder %s25, 3
    %p267 = por %p265, %p266
    %p268 = scmp.ne.s32.totalorder %s259, %s260
    %p269 = scmp.eq.s32.totalorder %s25, 0
    %p270 = por %p268, %p269
    %p271 = scmp.ne.s32.totalorder %s259, %s260
    %p272 = scmp.eq.s32.totalorder %s26, 3
    %p273 = por %p271, %p272
    %p275 = scmp.ne.s32.totalorder %s260, %s274
    %p276 = scmp.eq.s32.totalorder %s26, 0
    %p277 = por %p275, %p276
    %s279 = sadd.s32 %s278, 1
    %p282 = scmp.eq.s32.totalorder %s20, 3
    %p283 = scmp.ne.s32.totalorder %s278, %s280
    %p284 = scmp.eq.s32.totalorder %s20, 0
    %p285 = por %p283, %p284
    %p286 = scmp.ne.s32.totalorder %s278, %s280
    %p287 = scmp.eq.s32.totalorder %s25, 3
    %p288 = por %p286, %p287
    %p289 = scmp.ne.s32.totalorder %s280, %s281
    %p290 = scmp.eq.s32.totalorder %s25, 0
    %p291 = por %p289, %p290
    %p292 = scmp.ne.s32.totalorder %s280, %s281
    %p293 = scmp.eq.s32.totalorder %s26, 3
    %p294 = por %p292, %p293
    %p296 = scmp.ne.s32.totalorder %s281, %s295
    %p297 = scmp.eq.s32.totalorder %s26, 0
    %p298 = por %p296, %p297
    %s300 = sadd.s32 %s299, 1
    %p303 = scmp.eq.s32.totalorder %s20, 3
    %p304 = scmp.ne.s32.totalorder %s299, %s301
    %p305 = scmp.eq.s32.totalorder %s20, 0
    %p306 = por %p304, %p305
    %p307 = scmp.ne.s32.totalorder %s299, %s301
    %p308 = scmp.eq.s32.totalorder %s25, 3
    %p309 = por %p307, %p308
    %p310 = scmp.ne.s32.totalorder %s301, %s302
    %p311 = scmp.eq.s32.totalorder %s25, 0
    %p312 = por %p310, %p311
    %p313 = scmp.ne.s32.totalorder %s301, %s302
    %p314 = scmp.eq.s32.totalorder %s26, 3
    %p315 = por %p313, %p314
    %p317 = scmp.ne.s32.totalorder %s302, %s316
    %p318 = scmp.eq.s32.totalorder %s26, 0
    %p319 = por %p317, %p318
    %s321 = sadd.s32 %s320, 1
    %p324 = scmp.eq.s32.totalorder %s20, 3
    %p325 = scmp.ne.s32.totalorder %s320, %s322
    %p326 = scmp.eq.s32.totalorder %s20, 0
    %p327 = por %p325, %p326
    %p328 = scmp.ne.s32.totalorder %s320, %s322
    %p329 = scmp.eq.s32.totalorder %s25, 3
    %p330 = por %p328, %p329
    %p331 = scmp.ne.s32.totalorder %s322, %s323
    %p332 = scmp.eq.s32.totalorder %s25, 0
    %p333 = por %p331, %p332
    %p334 = scmp.ne.s32.totalorder %s322, %s323
    %p335 = scmp.eq.s32.totalorder %s26, 3
    %p336 = por %p334, %p335
    %p338 = scmp.ne.s32.totalorder %s323, %s337
    %p339 = scmp.eq.s32.totalorder %s26, 0
    %p340 = por %p338, %p339
    %s341 = ssub.s32 %s27, %s39
    %s342 = ssub.s32 %s28, %s35
    %s343 = sor.u32 %s341, %s342
    %p344 = scmp.eq.s32.totalorder %s343, 0
    %s346 = sadd.s32 %s345, 1
    %s347 = scalar_select %p344, %s345, %s346
    %p350 = pneg %p344
    %p351 = scmp.eq.s32.totalorder %s20, 3
    %p352 = por %p350, %p351
    %p353 = scmp.ne.s32.totalorder %s345, %s348
    %p354 = scmp.eq.s32.totalorder %s20, 0
    %p355 = por %p353, %p354
    %p356 = scmp.ne.s32.totalorder %s345, %s348
    %p357 = scmp.eq.s32.totalorder %s25, 3
    %p358 = por %p356, %p357
    %p359 = scmp.ne.s32.totalorder %s348, %s349
    %p360 = scmp.eq.s32.totalorder %s25, 0
    %p361 = por %p359, %p360
    %p362 = scmp.ne.s32.totalorder %s348, %s349
    %p363 = scmp.eq.s32.totalorder %s26, 3
    %p364 = por %p362, %p363
    %p366 = scmp.ne.s32.totalorder %s349, %s365
    %p367 = scmp.eq.s32.totalorder %s26, 0
    %p368 = por %p366, %p367
    %p369 = scmp.le.s32.totalorder 1, %s20
    %p370 = scmp.lt.s32.totalorder %s20, 5
    %p371 = pnand %p369, %p370
    %p372 = pneg %p371
    // Predicated region
    $region9: #{_lambda_.2} parent=5 // pred_check
      _
    $region10: #{_lambda_.2} parent=5 // pred_check_branch
      %374 = sbr.rel (%p371) target = $region12
    $region11: #{_lambda_.2} parent=5 // pred_region
      %s375 = ssub.s32 %s20, 1
      // Predicated region
      $region13: #{_lambda_.2} parent=11 // pred_check
        %p376 = pneg %p81
      $region14: #{_lambda_.2} parent=11 // pred_check_branch
        %378 = sbr.rel (%p376) target = $region16
      $region15: #{_lambda_.2} parent=11 // pred_region
        _
      $region16: #{_lambda_.2} parent=11 // pred_fallthru
        _
      // Predicated region
      $region17: #{_lambda_.2} parent=11 // pred_check
        %p379 = pneg %p102
      $region18: #{_lambda_.2} parent=11 // pred_check_branch
        %381 = sbr.rel (%p379) target = $region20
      $region19: #{_lambda_.2} parent=11 // pred_region
        _
      $region20: #{_lambda_.2} parent=11 // pred_fallthru
        _
      // Predicated region
      $region21: #{_lambda_.2} parent=11 // pred_check
        %p382 = pneg %p123
      $region22: #{_lambda_.2} parent=11 // pred_check_branch
        %384 = sbr.rel (%p382) target = $region24
      $region23: #{_lambda_.2} parent=11 // pred_region
        _
      $region24: #{_lambda_.2} parent=11 // pred_fallthru
        _
      // Predicated region
      $region25: #{_lambda_.2} parent=11 // pred_check
        %p385 = pneg %p144
      $region26: #{_lambda_.2} parent=11 // pred_check_branch
        %387 = sbr.rel (%p385) target = $region28
      $region27: #{_lambda_.2} parent=11 // pred_region
        _
      $region28: #{_lambda_.2} parent=11 // pred_fallthru
        _
      // Predicated region
      $region29: #{_lambda_.2} parent=11 // pred_check
        %p388 = pneg %p165
      $region30: #{_lambda_.2} parent=11 // pred_check_branch
        %390 = sbr.rel (%p388) target = $region32
      $region31: #{_lambda_.2} parent=11 // pred_region
        _
      $region32: #{_lambda_.2} parent=11 // pred_fallthru
        _
      // Predicated region
      $region33: #{_lambda_.2} parent=11 // pred_check
        %p391 = pneg %p186
      $region34: #{_lambda_.2} parent=11 // pred_check_branch
        %393 = sbr.rel (%p391) target = $region36
      $region35: #{_lambda_.2} parent=11 // pred_region
        _
      $region36: #{_lambda_.2} parent=11 // pred_fallthru
        _
      // Predicated region
      $region37: #{_lambda_.2} parent=11 // pred_check
        %p394 = pneg %p207
      $region38: #{_lambda_.2} parent=11 // pred_check_branch
        %396 = sbr.rel (%p394) target = $region40
      $region39: #{_lambda_.2} parent=11 // pred_region
        _
      $region40: #{_lambda_.2} parent=11 // pred_fallthru
        _
      // Predicated region
      $region41: #{_lambda_.2} parent=11 // pred_check
        %p397 = pneg %p228
      $region42: #{_lambda_.2} parent=11 // pred_check_branch
        %399 = sbr.rel (%p397) target = $region44
      $region43: #{_lambda_.2} parent=11 // pred_region
        _
      $region44: #{_lambda_.2} parent=11 // pred_fallthru
        _
      // Predicated region
      $region45: #{_lambda_.2} parent=11 // pred_check
        %p400 = pneg %p249
      $region46: #{_lambda_.2} parent=11 // pred_check_branch
        %402 = sbr.rel (%p400) target = $region48
      $region47: #{_lambda_.2} parent=11 // pred_region
        _
      $region48: #{_lambda_.2} parent=11 // pred_fallthru
        _
      // Predicated region
      $region49: #{_lambda_.2} parent=11 // pred_check
        %p403 = pneg %p270
      $region50: #{_lambda_.2} parent=11 // pred_check_branch
        %405 = sbr.rel (%p403) target = $region52
      $region51: #{_lambda_.2} parent=11 // pred_region
        _
      $region52: #{_lambda_.2} parent=11 // pred_fallthru
        _
      // Predicated region
      $region53: #{_lambda_.2} parent=11 // pred_check
        %p406 = pneg %p291
      $region54: #{_lambda_.2} parent=11 // pred_check_branch
        %408 = sbr.rel (%p406) target = $region56
      $region55: #{_lambda_.2} parent=11 // pred_region
        _
      $region56: #{_lambda_.2} parent=11 // pred_fallthru
        _
      // Predicated region
      $region57: #{_lambda_.2} parent=11 // pred_check
        %p409 = pneg %p312
      $region58: #{_lambda_.2} parent=11 // pred_check_branch
        %411 = sbr.rel (%p409) target = $region60
      $region59: #{_lambda_.2} parent=11 // pred_region
        _
      $region60: #{_lambda_.2} parent=11 // pred_fallthru
        _
      // Predicated region
      $region61: #{_lambda_.2} parent=11 // pred_check
        %p412 = pneg %p333
      $region62: #{_lambda_.2} parent=11 // pred_check_branch
        %414 = sbr.rel (%p412) target = $region64
      $region63: #{_lambda_.2} parent=11 // pred_region
        _
      $region64: #{_lambda_.2} parent=11 // pred_fallthru
        _
    $region12: #{_lambda_.2} parent=5 // pred_fallthru
      _
    %p415 = scmp.lt.s32.totalorder %s20, 4
    // Predicated region
    $region65: #{_lambda_.2} parent=5 // pred_check
      %p416 = pneg %p415
    $region66: #{_lambda_.2} parent=5 // pred_check_branch
      %418 = sbr.rel (%p416) target = $region68
    $region67: #{_lambda_.2} parent=5 // pred_region
      // Predicated region
      $region69: #{_lambda_.2} parent=67 // pred_check
        %p419 = pneg %p54
      $region70: #{_lambda_.2} parent=67 // pred_check_branch
        %421 = sbr.rel (%p419) target = $region72
      $region71: #{_lambda_.2} parent=67 // pred_region
        %s422 = smul.u32 4, %s28
        %p423 = scmp.lt.s32.totalorder %s27, 1
        %s424 = scalar_select %p423, %s27, 1
        %p425 = scmp.lt.s32.totalorder %s422, 7
        %s426 = scalar_select %p425, %s422, 7
        %s427 = smul.addr %s424, 8
        %s428 = sadd.s32 %s426, %s427
        %s429 = smul.addr %s428, 8
        %s430 = scalar_lea.vmem %s0, %s429
        %s431 = smul.u32 4, %s28
      $region72: #{_lambda_.2} parent=67 // pred_fallthru
        _
    $region68: #{_lambda_.2} parent=5 // pred_fallthru
      _
    %p432 = scmp.le.s32.totalorder 1, %s20
    %p433 = scmp.lt.s32.totalorder %s20, 5
    %p434 = pnand %p432, %p433
    %p435 = pneg %p434
    // Predicated region
    $region73: #{_lambda_.2} parent=5 // pred_check
      _
    $region74: #{_lambda_.2} parent=5 // pred_check_branch
      %437 = sbr.rel (%p434) target = $region76
    $region75: #{_lambda_.2} parent=5 // pred_region
      %s438 = ssub.s32 %s20, 1
      %s439 = smul.u32 4, %s30
      %p440 = scmp.lt.s32.totalorder %s29, 1
      %s441 = scalar_select %p440, %s29, 1
      %p442 = scmp.lt.s32.totalorder %s439, 7
      %s443 = scalar_select %p442, %s439, 7
      %s444 = smul.addr %s441, 8
      %s445 = sadd.s32 %s443, %s444
      %s446 = smul.addr %s445, 8
      %s447 = scalar_lea.vmem %s0, %s446
      %p448 = pneg %p60
      %p449 = pneg %p57
      %p450 = pneg %p81
      %p451 = pneg %p78
      %p452 = pneg %p102
      %p453 = pneg %p99
      %p454 = pneg %p123
      %p455 = pneg %p120
      %p456 = pneg %p144
      %p457 = pneg %p141
      %p458 = pneg %p165
      %p459 = pneg %p162
      %p460 = pneg %p186
      %p461 = pneg %p183
      %p462 = pneg %p207
      %p463 = pneg %p204
      %p464 = pneg %p228
      %p465 = pneg %p225
      %p466 = pneg %p249
      %p467 = pneg %p246
      %p468 = pneg %p270
      %p469 = pneg %p267
      %p470 = pneg %p291
      %p471 = pneg %p288
      %p472 = pneg %p312
      %p473 = pneg %p309
      %p474 = pneg %p333
      %p475 = pneg %p330
      %p476 = pneg %p361
      %p477 = pneg %p358
      %s478 = smul.u32 4, %s30
      %p479 = scmp.lt.s32.totalorder %s29, 1
      %s480 = scalar_select %p479, %s29, 1
      %p481 = scmp.lt.s32.totalorder %s478, 7
      %s482 = scalar_select %p481, %s478, 7
      %s483 = smul.addr %s480, 8
      %s484 = sadd.s32 %s482, %s483
      %s485 = smul.addr %s484, 8
      %s486 = scalar_lea.vmem %s14, %s485
      %s487 = smul.u32 4, %s30
      %p488 = scmp.lt.s32.totalorder %s29, 1
      %s489 = scalar_select %p488, %s29, 1
      %p490 = scmp.lt.s32.totalorder %s487, 7
      %s491 = scalar_select %p490, %s487, 7
      %s492 = smul.addr %s489, 8
      %s493 = sadd.s32 %s491, %s492
      %s494 = smul.addr %s493, 8
      %s495 = scalar_lea.vmem %s0, %s494
      %s496 = smul.u32 4, %s30
      %s497 = smul.u32 4, %s30
      %p498 = scmp.lt.s32.totalorder %s29, 1
      %s499 = scalar_select %p498, %s29, 1
      %p500 = scmp.lt.s32.totalorder %s497, 7
      %s501 = scalar_select %p500, %s497, 7
      %s502 = smul.addr %s499, 8
      %s503 = sadd.s32 %s501, %s502
      %s504 = smul.addr %s503, 8
      %s505 = scalar_lea.vmem %s14, %s504
      %s506 = smul.u32 4, %s30
      %v508 = vld [vmem:[%s495] sm:$0xff]
      %v509 = vld [vmem:[%s495 + $0x8] sm:$0xff]
      %v510 = vld [vmem:[%s495 + $0x10] sm:$0xff]
      %v511 = vld [vmem:[%s495 + $0x18] sm:$0xff]
      %v516 = vrot.slane %v508, 4
      %v517 = vrot.slane %v509, 4
      %v518 = vrot.slane %v510, 4
      %v519 = vrot.slane %v511, 4
      %524 = vst [vmem:[#allocation1] ss:$2 sm:$0xff] %v508
      %s525 = scalar_lea.vmem [#allocation1], 1
      %526 = vst [vmem:[%s525] ss:$2 sm:$0xff] %v509
      %s527 = scalar_lea.vmem [#allocation1], 16
      %528 = vst [vmem:[%s527] ss:$2 sm:$0xff] %v510
      %s529 = scalar_lea.vmem [#allocation1], 17
      %530 = vst [vmem:[%s529] ss:$2 sm:$0xff] %v511
      %s531 = scalar_lea.vmem [#allocation1], 32
      %532 = vst [vmem:[%s531] ss:$2 sm:$0xff] %v516
      %s533 = scalar_lea.vmem [#allocation1], 33
      %534 = vst [vmem:[%s533] ss:$2 sm:$0xff] %v517
      %s535 = scalar_lea.vmem [#allocation1], 48
      %536 = vst [vmem:[%s535] ss:$2 sm:$0xff] %v518
      %s537 = scalar_lea.vmem [#allocation1], 49
      %538 = vst [vmem:[%s537] ss:$2 sm:$0xff] %v519
      %v539 = vld.sshfl [vmem:[#allocation1] sm:$0xff pattern:$0x75316420]
      %v540 = vld.sshfl [vmem:[#allocation1 + $0x10] sm:$0xff pattern:$0x75316420]
      %v541 = vld.sshfl [vmem:[#allocation1 + $0x20] sm:$0xff pattern:$0x75316420]
      %v542 = vld.sshfl [vmem:[#allocation1 + $0x30] sm:$0xff pattern:$0x75316420]
      %vm547 = vcmask 261120
      %v548 = vsel %vm547, %v539, 0.0
      %549 = vadd.xlane.f32.xlu0 %v548
      %v550 = vpop.xlane.xlu0 %549
      %v551 = vsel %vm547, %v540, 0.0
      %552 = vadd.xlane.f32.xlu0 %v551
      %v553 = vpop.xlane.xlu0 %552
      %v554 = vsel %vm547, %v541, 0.0
      %555 = vadd.xlane.f32.xlu0 %v554
      %v556 = vpop.xlane.xlu0 %555
      %v557 = vsel %vm547, %v542, 0.0
      %558 = vadd.xlane.f32.xlu0 %v557
      %v559 = vpop.xlane.xlu0 %558
      %v560 = vrcp.pop 32.0
      %v561 = vmul.f32 32.0, %v560
      %v562 = vsub.f32 1.0, %v561
      %v563 = vmul.f32 %v560, %v562
      %v564 = vadd.f32 %v560, %v563
      %vm565 = vweird.f32 %v560
      %v566 = vsel %vm565, %v560, %v564
      %v567 = vmul.f32 %v550, %v566
      %v568 = vmul.f32 %v553, %v566
      %v569 = vmul.f32 %v556, %v566
      %v570 = vmul.f32 %v559, %v566
      %v576 = vunpack.c.l.s4 839922192
      %v577 = vunpack.c.0.s8 %v576
      %v578 = vperm.slane %v567, %v577
      %v580 = vunpack.c.l.s4 1985246804
      %v581 = vunpack.c.0.s8 %v580
      %v582 = vperm.slane %v567, %v581
      %v584 = vunpack.c.l.s4 839922192
      %v585 = vunpack.c.0.s8 %v584
      %v586 = vperm.slane %v568, %v585
      %v588 = vunpack.c.l.s4 1985246804
      %v589 = vunpack.c.0.s8 %v588
      %v590 = vperm.slane %v568, %v589
      %v592 = vunpack.c.l.s4 839922192
      %v593 = vunpack.c.0.s8 %v592
      %v594 = vperm.slane %v569, %v593
      %v596 = vunpack.c.l.s4 1985246804
      %v597 = vunpack.c.0.s8 %v596
      %v598 = vperm.slane %v569, %v597
      %v600 = vunpack.c.l.s4 839922192
      %v601 = vunpack.c.0.s8 %v600
      %v602 = vperm.slane %v570, %v601
      %v604 = vunpack.c.l.s4 1985246804
      %v605 = vunpack.c.0.s8 %v604
      %v606 = vperm.slane %v570, %v605
      %v615 = vsub.f32 %v508, %v578
      %v616 = vsub.f32 %v509, %v582
      %v617 = vsub.f32 %v510, %v586
      %v618 = vsub.f32 %v511, %v590
      %v619 = vsub.f32 %v516, %v594
      %v620 = vsub.f32 %v517, %v598
      %v621 = vsub.f32 %v518, %v602
      %v622 = vsub.f32 %v519, %v606
      %v623 = vmul.f32 %v615, %v615
      %v624 = vmul.f32 %v616, %v616
      %v625 = vmul.f32 %v617, %v617
      %v626 = vmul.f32 %v618, %v618
      %v627 = vmul.f32 %v619, %v619
      %v628 = vmul.f32 %v620, %v620
      %v629 = vmul.f32 %v621, %v621
      %v630 = vmul.f32 %v622, %v622
      %639 = vst [vmem:[#allocation1] ss:$2 sm:$0xff] %v623
      %s640 = scalar_lea.vmem [#allocation1], 1
      %641 = vst [vmem:[%s640] ss:$2 sm:$0xff] %v624
      %s642 = scalar_lea.vmem [#allocation1], 16
      %643 = vst [vmem:[%s642] ss:$2 sm:$0xff] %v625
      %s644 = scalar_lea.vmem [#allocation1], 17
      %645 = vst [vmem:[%s644] ss:$2 sm:$0xff] %v626
      %s646 = scalar_lea.vmem [#allocation1], 32
      %647 = vst [vmem:[%s646] ss:$2 sm:$0xff] %v627
      %s648 = scalar_lea.vmem [#allocation1], 33
      %649 = vst [vmem:[%s648] ss:$2 sm:$0xff] %v628
      %s650 = scalar_lea.vmem [#allocation1], 48
      %651 = vst [vmem:[%s650] ss:$2 sm:$0xff] %v629
      %s652 = scalar_lea.vmem [#allocation1], 49
      %653 = vst [vmem:[%s652] ss:$2 sm:$0xff] %v630
      %v654 = vld.sshfl [vmem:[#allocation1] sm:$0xff pattern:$0x75316420]
      %v655 = vld.sshfl [vmem:[#allocation1 + $0x10] sm:$0xff pattern:$0x75316420]
      %v656 = vld.sshfl [vmem:[#allocation1 + $0x20] sm:$0xff pattern:$0x75316420]
      %v657 = vld.sshfl [vmem:[#allocation1 + $0x30] sm:$0xff pattern:$0x75316420]
      %v662 = vsel %vm547, %v654, 0.0
      %663 = vadd.xlane.f32.xlu0 %v662
      %v664 = vpop.xlane.xlu0 %663
      %v665 = vsel %vm547, %v655, 0.0
      %666 = vadd.xlane.f32.xlu0 %v665
      %v667 = vpop.xlane.xlu0 %666
      %v668 = vsel %vm547, %v656, 0.0
      %669 = vadd.xlane.f32.xlu0 %v668
      %v670 = vpop.xlane.xlu0 %669
      %v671 = vsel %vm547, %v657, 0.0
      %672 = vadd.xlane.f32.xlu0 %v671
      %v673 = vpop.xlane.xlu0 %672
      %v674 = vmul.f32 %v664, %v566
      %v675 = vmul.f32 %v667, %v566
      %v676 = vmul.f32 %v670, %v566
      %v677 = vmul.f32 %v673, %v566
      %v678 = vadd.f32 %v674, 1e-05
      %v679 = vadd.f32 %v675, 1e-05
      %v680 = vadd.f32 %v676, 1e-05
      %v681 = vadd.f32 %v677, 1e-05
      %v682 = vrsqrt.pop %v678
      %v683 = vmul.f32 %v682, %v678
      %v684 = vmul.f32 %v683, %v682
      %v685 = vmul.f32 0.5, %v684
      %v686 = vsub.f32 1.5, %v685
      %v687 = vmul.f32 %v682, %v686
      %vm688 = vweird.f32 %v678
      %vm689 = vweird.f32 %v682
      %vm690 = vmor %vm688, %vm689
      %v691 = vsel %vm690, %v682, %v687
      %v692 = vrsqrt.pop %v679
      %v693 = vmul.f32 %v692, %v679
      %v694 = vmul.f32 %v693, %v692
      %v695 = vmul.f32 0.5, %v694
      %v696 = vsub.f32 1.5, %v695
      %v697 = vmul.f32 %v692, %v696
      %vm698 = vweird.f32 %v679
      %vm699 = vweird.f32 %v692
      %vm700 = vmor %vm698, %vm699
      %v701 = vsel %vm700, %v692, %v697
      %v702 = vrsqrt.pop %v680
      %v703 = vmul.f32 %v702, %v680
      %v704 = vmul.f32 %v703, %v702
      %v705 = vmul.f32 0.5, %v704
      %v706 = vsub.f32 1.5, %v705
      %v707 = vmul.f32 %v702, %v706
      %vm708 = vweird.f32 %v680
      %vm709 = vweird.f32 %v702
      %vm710 = vmor %vm708, %vm709
      %v711 = vsel %vm710, %v702, %v707
      %v712 = vrsqrt.pop %v681
      %v713 = vmul.f32 %v712, %v681
      %v714 = vmul.f32 %v713, %v712
      %v715 = vmul.f32 0.5, %v714
      %v716 = vsub.f32 1.5, %v715
      %v717 = vmul.f32 %v712, %v716
      %vm718 = vweird.f32 %v681
      %vm719 = vweird.f32 %v712
      %vm720 = vmor %vm718, %vm719
      %v721 = vsel %vm720, %v712, %v717
      %v727 = vunpack.c.l.s4 839922192
      %v728 = vunpack.c.0.s8 %v727
      %v729 = vperm.slane %v691, %v728
      %v731 = vunpack.c.l.s4 1985246804
      %v732 = vunpack.c.0.s8 %v731
      %v733 = vperm.slane %v691, %v732
      %v735 = vunpack.c.l.s4 839922192
      %v736 = vunpack.c.0.s8 %v735
      %v737 = vperm.slane %v701, %v736
      %v739 = vunpack.c.l.s4 1985246804
      %v740 = vunpack.c.0.s8 %v739
      %v741 = vperm.slane %v701, %v740
      %v743 = vunpack.c.l.s4 839922192
      %v744 = vunpack.c.0.s8 %v743
      %v745 = vperm.slane %v711, %v744
      %v747 = vunpack.c.l.s4 1985246804
      %v748 = vunpack.c.0.s8 %v747
      %v749 = vperm.slane %v711, %v748
      %v751 = vunpack.c.l.s4 839922192
      %v752 = vunpack.c.0.s8 %v751
      %v753 = vperm.slane %v721, %v752
      %v755 = vunpack.c.l.s4 1985246804
      %v756 = vunpack.c.0.s8 %v755
      %v757 = vperm.slane %v721, %v756
      %v766 = vmul.f32 %v615, %v729
      %v767 = vmul.f32 %v616, %v733
      %v768 = vmul.f32 %v617, %v737
      %v769 = vmul.f32 %v618, %v741
      %v770 = vmul.f32 %v619, %v745
      %v771 = vmul.f32 %v620, %v749
      %v772 = vmul.f32 %v621, %v753
      %v773 = vmul.f32 %v622, %v757
      %v774 = vld [vmem:[%s1] sm:$0x1]
      %v776 = vperm.slane %v774, 0
      %v778 = vrot.slane %v776, 4
      %v780 = vmul.f32 %v766, %v776
      %v781 = vmul.f32 %v767, %v778
      %v782 = vmul.f32 %v768, %v776
      %v783 = vmul.f32 %v769, %v778
      %v784 = vmul.f32 %v770, %v776
      %v785 = vmul.f32 %v771, %v778
      %v786 = vmul.f32 %v772, %v776
      %v787 = vmul.f32 %v773, %v778
      %v788 = vld [vmem:[%s2] sm:$0x1]
      %v790 = vperm.slane %v788, 0
      %v792 = vrot.slane %v790, 4
      %v794 = vadd.f32 %v780, %v790
      %v795 = vadd.f32 %v781, %v792
      %v796 = vadd.f32 %v782, %v790
      %v797 = vadd.f32 %v783, %v792
      %v798 = vadd.f32 %v784, %v790
      %v799 = vadd.f32 %v785, %v792
      %v800 = vadd.f32 %v786, %v790
      %v801 = vadd.f32 %v787, %v792
      %810 = vst [vmem:[#allocation1] ss:$2 sm:$0xff] %v794
      %s811 = scalar_lea.vmem [#allocation1], 1
      %812 = vst [vmem:[%s811] ss:$2 sm:$0xff] %v795
      %s813 = scalar_lea.vmem [#allocation1], 16
      %814 = vst [vmem:[%s813] ss:$2 sm:$0xff] %v796
      %s815 = scalar_lea.vmem [#allocation1], 17
      %816 = vst [vmem:[%s815] ss:$2 sm:$0xff] %v797
      %s817 = scalar_lea.vmem [#allocation1], 32
      %818 = vst [vmem:[%s817] ss:$2 sm:$0xff] %v798
      %s819 = scalar_lea.vmem [#allocation1], 33
      %820 = vst [vmem:[%s819] ss:$2 sm:$0xff] %v799
      %s821 = scalar_lea.vmem [#allocation1], 48
      %822 = vst [vmem:[%s821] ss:$2 sm:$0xff] %v800
      %s823 = scalar_lea.vmem [#allocation1], 49
      %824 = vst [vmem:[%s823] ss:$2 sm:$0xff] %v801
      %v825 = vld.sshfl [vmem:[#allocation1] sm:$0xff pattern:$0x75316420]
      %v826 = vld.sshfl [vmem:[#allocation1 + $0x10] sm:$0xff pattern:$0x75316420]
      %v827 = vld.sshfl [vmem:[#allocation1 + $0x20] sm:$0xff pattern:$0x75316420]
      %v828 = vld.sshfl [vmem:[#allocation1 + $0x30] sm:$0xff pattern:$0x75316420]
      %v833 = vpack.c.bf16 %v826, %v825
      %v834 = vpack.c.bf16 %v828, %v827
      %v835 = vld [vmem:[%s3] sm:$0xf]
      %v836 = vld [vmem:[%s3 + $0x4] sm:$0xf]
      %v837 = vld [vmem:[%s3 + $0x8] sm:$0xf]
      %v838 = vld [vmem:[%s3 + $0xc] sm:$0xf]
      %v839 = vld [vmem:[%s4] sm:$0x1]
      %v841 = vperm.slane %v839, 0
      %v847 = vunpack.c.l.b16 %v835
      %v848 = vunpack.c.l.b16 %v836
      %v849 = vunpack.c.l.b16 %v837
      %v850 = vunpack.c.l.b16 %v838
      %v851 = vpack.c.b16 %v848, %v847
      %v852 = vpack.c.b16 %v850, %v849
      %v856 = vsel %vm547, %v833, 0
      %v859 = vsel %vm547, %v834, 0
      %861 = vmatpush.bf16.msra.mxu0 0
      %862 = vmatpush.bf16.msra.mxu0 0
      %863 = vmatpush.bf16.msra.mxu0 0
      %864 = vmatpush.bf16.msra.mxu0 0
      %865 = vmatpush.bf16.msra.mxu0 0
      %866 = vmatpush.bf16.msra.mxu0 0
      %867 = vmatpush.bf16.msra.mxu0 %v852
      %868 = vmatpush.bf16.msra.mxu0 %v851
      %869 = vmatmul.bf16.gmra.mxu0 %v856
      %v870 = vpop.f32.mrf.mxu0
      %v871 = vadd.f32 %v841, %v870
      %v872 = vpop.f32.mrf.mxu0
      %v873 = vadd.f32 %v841, %v872
      %874 = vmatmul.bf16.gmra.mxu0 %v859
      %v875 = vpop.f32.mrf.mxu0
      %v876 = vadd.f32 %v841, %v875
      %v877 = vpop.f32.mrf.mxu0
      %v878 = vadd.f32 %v841, %v877
      %879 = vdwg.mxu0
      %884 = vrot.lane.b32.xlu0 %v871, 120
      %v885 = vpop.permute.xlu0 %884
      %886 = vrot.lane.b32.xlu0 %v873, 120
      %v887 = vpop.permute.xlu0 %886
      %888 = vrot.lane.b32.xlu0 %v876, 120
      %v889 = vpop.permute.xlu0 %888
      %890 = vrot.lane.b32.xlu0 %v878, 120
      %v891 = vpop.permute.xlu0 %890
      %896 = vrot.lane.b32.xlu0 %v871, 112
      %v897 = vpop.permute.xlu0 %896
      %898 = vrot.lane.b32.xlu0 %v873, 112
      %v899 = vpop.permute.xlu0 %898
      %900 = vrot.lane.b32.xlu0 %v876, 112
      %v901 = vpop.permute.xlu0 %900
      %902 = vrot.lane.b32.xlu0 %v878, 112
      %v903 = vpop.permute.xlu0 %902
      %908 = vrot.lane.b32.xlu0 %v871, 104
      %v909 = vpop.permute.xlu0 %908
      %910 = vrot.lane.b32.xlu0 %v873, 104
      %v911 = vpop.permute.xlu0 %910
      %912 = vrot.lane.b32.xlu0 %v876, 104
      %v913 = vpop.permute.xlu0 %912
      %914 = vrot.lane.b32.xlu0 %v878, 104
      %v915 = vpop.permute.xlu0 %914
      %v920 = vpack.c.bf16 %v871, %v871
      %v921 = vpack.c.bf16 %v873, %v873
      %v922 = vpack.c.bf16 %v876, %v876
      %v923 = vpack.c.bf16 %v878, %v878
      %v924 = vpack.c.bf16 %v885, %v885
      %v925 = vpack.c.bf16 %v887, %v887
      %v926 = vpack.c.bf16 %v889, %v889
      %v927 = vpack.c.bf16 %v891, %v891
      %v928 = vpack.c.bf16 %v897, %v897
      %v929 = vpack.c.bf16 %v899, %v899
      %v930 = vpack.c.bf16 %v901, %v901
      %v931 = vpack.c.bf16 %v903, %v903
      %v932 = vpack.c.bf16 %v909, %v909
      %v933 = vpack.c.bf16 %v911, %v911
      %v934 = vpack.c.bf16 %v913, %v913
      %v935 = vpack.c.bf16 %v915, %v915
      %v938 = vunpack.c.l.b16 %v920
      %v939 = vunpack.c.l.b16 %v921
      %v940 = vpack.c.b16 %v939, %v938
      %941 = vrot.lane.b32.xlu0 %v940, 96
      %v942 = vpop.permute.xlu0 %941
      %vm943 = vcmask 64512
      %v945 = vsel %vm943, %v940, 0
      %v948 = vsel %vm943, %v942, 0
      %950 = vmatpush.bf16.xpose.msra.mxu0 0
      %951 = vmatpush.bf16.xpose.msra.mxu0 0
      %952 = vmatpush.bf16.xpose.msra.mxu0 0
      %953 = vmatpush.bf16.xpose.msra.mxu0 0
      %954 = vmatpush.bf16.xpose.msra.mxu0 0
      %955 = vmatpush.bf16.xpose.msra.mxu0 0
      %956 = vmatpush.bf16.xpose.msra.mxu0 0
      %957 = vmatpush.bf16.xpose.msra.mxu0 %v948
      %958 = vmatmul.bf16.gmra.mxu0 %v945
      %v959 = vpop.f32.mrf.mxu0
      %v960 = vadd.f32 0.0, %v959
      %v961 = vpop.f32.mrf.mxu0
      %v962 = vadd.f32 0.0, %v961
      %963 = vdwg.mxu0
      %v966 = vunpack.c.l.b16 %v922
      %v967 = vunpack.c.l.b16 %v923
      %v968 = vpack.c.b16 %v967, %v966
      %969 = vrot.lane.b32.xlu0 %v968, 96
      %v970 = vpop.permute.xlu0 %969
      %v972 = vsel %vm943, %v968, 0
      %v975 = vsel %vm943, %v970, 0
      %977 = vmatpush.bf16.xpose.msra.mxu0 0
      %978 = vmatpush.bf16.xpose.msra.mxu0 0
      %979 = vmatpush.bf16.xpose.msra.mxu0 0
      %980 = vmatpush.bf16.xpose.msra.mxu0 0
      %981 = vmatpush.bf16.xpose.msra.mxu0 0
      %982 = vmatpush.bf16.xpose.msra.mxu0 0
      %983 = vmatpush.bf16.xpose.msra.mxu0 0
      %984 = vmatpush.bf16.xpose.msra.mxu0 %v975
      %985 = vmatmul.bf16.gmra.mxu0 %v972
      %v986 = vpop.f32.mrf.mxu0
      %v987 = vadd.f32 0.0, %v986
      %v988 = vpop.f32.mrf.mxu0
      %v989 = vadd.f32 0.0, %v988
      %990 = vdwg.mxu0
      %v993 = vunpack.c.l.b16 %v924
      %v994 = vunpack.c.l.b16 %v925
      %v995 = vpack.c.b16 %v994, %v993
      %996 = vrot.lane.b32.xlu0 %v995, 96
      %v997 = vpop.permute.xlu0 %996
      %v999 = vsel %vm943, %v995, 0
      %v1002 = vsel %vm943, %v997, 0
      %1004 = vmatpush.bf16.xpose.msra.mxu0 0
      %1005 = vmatpush.bf16.xpose.msra.mxu0 0
      %1006 = vmatpush.bf16.xpose.msra.mxu0 0
      %1007 = vmatpush.bf16.xpose.msra.mxu0 0
      %1008 = vmatpush.bf16.xpose.msra.mxu0 0
      %1009 = vmatpush.bf16.xpose.msra.mxu0 0
      %1010 = vmatpush.bf16.xpose.msra.mxu0 0
      %1011 = vmatpush.bf16.xpose.msra.mxu0 %v1002
      %1012 = vmatmul.bf16.gmra.mxu0 %v999
      %v1013 = vpop.f32.mrf.mxu0
      %v1014 = vadd.f32 0.0, %v1013
      %v1015 = vpop.f32.mrf.mxu0
      %v1016 = vadd.f32 0.0, %v1015
      %1017 = vdwg.mxu0
      %v1020 = vunpack.c.l.b16 %v926
      %v1021 = vunpack.c.l.b16 %v927
      %v1022 = vpack.c.b16 %v1021, %v1020
      %1023 = vrot.lane.b32.xlu0 %v1022, 96
      %v1024 = vpop.permute.xlu0 %1023
      %v1026 = vsel %vm943, %v1022, 0
      %v1029 = vsel %vm943, %v1024, 0
      %1031 = vmatpush.bf16.xpose.msra.mxu0 0
      %1032 = vmatpush.bf16.xpose.msra.mxu0 0
      %1033 = vmatpush.bf16.xpose.msra.mxu0 0
      %1034 = vmatpush.bf16.xpose.msra.mxu0 0
      %1035 = vmatpush.bf16.xpose.msra.mxu0 0
      %1036 = vmatpush.bf16.xpose.msra.mxu0 0
      %1037 = vmatpush.bf16.xpose.msra.mxu0 0
      %1038 = vmatpush.bf16.xpose.msra.mxu0 %v1029
      %1039 = vmatmul.bf16.gmra.mxu0 %v1026
      %v1040 = vpop.f32.mrf.mxu0
      %v1041 = vadd.f32 0.0, %v1040
      %v1042 = vpop.f32.mrf.mxu0
      %v1043 = vadd.f32 0.0, %v1042
      %1044 = vdwg.mxu0
      %v1047 = vunpack.c.l.b16 %v928
      %v1048 = vunpack.c.l.b16 %v929
      %v1049 = vpack.c.b16 %v1048, %v1047
      %1050 = vrot.lane.b32.xlu0 %v1049, 96
      %v1051 = vpop.permute.xlu0 %1050
      %v1053 = vsel %vm943, %v1049, 0
      %v1056 = vsel %vm943, %v1051, 0
      %1058 = vmatpush.bf16.xpose.msra.mxu0 0
      %1059 = vmatpush.bf16.xpose.msra.mxu0 0
      %1060 = vmatpush.bf16.xpose.msra.mxu0 0
      %1061 = vmatpush.bf16.xpose.msra.mxu0 0
      %1062 = vmatpush.bf16.xpose.msra.mxu0 0
      %1063 = vmatpush.bf16.xpose.msra.mxu0 0
      %1064 = vmatpush.bf16.xpose.msra.mxu0 0
      %1065 = vmatpush.bf16.xpose.msra.mxu0 %v1056
      %1066 = vmatmul.bf16.gmra.mxu0 %v1053
      %v1067 = vpop.f32.mrf.mxu0
      %v1068 = vadd.f32 0.0, %v1067
      %v1069 = vpop.f32.mrf.mxu0
      %v1070 = vadd.f32 0.0, %v1069
      %1071 = vdwg.mxu0
      %v1074 = vunpack.c.l.b16 %v930
      %v1075 = vunpack.c.l.b16 %v931
      %v1076 = vpack.c.b16 %v1075, %v1074
      %1077 = vrot.lane.b32.xlu0 %v1076, 96
      %v1078 = vpop.permute.xlu0 %1077
      %v1080 = vsel %vm943, %v1076, 0
      %v1083 = vsel %vm943, %v1078, 0
      %1085 = vmatpush.bf16.xpose.msra.mxu0 0
      %1086 = vmatpush.bf16.xpose.msra.mxu0 0
      %1087 = vmatpush.bf16.xpose.msra.mxu0 0
      %1088 = vmatpush.bf16.xpose.msra.mxu0 0
      %1089 = vmatpush.bf16.xpose.msra.mxu0 0
      %1090 = vmatpush.bf16.xpose.msra.mxu0 0
      %1091 = vmatpush.bf16.xpose.msra.mxu0 0
      %1092 = vmatpush.bf16.xpose.msra.mxu0 %v1083
      %1093 = vmatmul.bf16.gmra.mxu0 %v1080
      %v1094 = vpop.f32.mrf.mxu0
      %v1095 = vadd.f32 0.0, %v1094
      %v1096 = vpop.f32.mrf.mxu0
      %v1097 = vadd.f32 0.0, %v1096
      %1098 = vdwg.mxu0
      %v1101 = vunpack.c.l.b16 %v932
      %v1102 = vunpack.c.l.b16 %v933
      %v1103 = vpack.c.b16 %v1102, %v1101
      %1104 = vrot.lane.b32.xlu0 %v1103, 96
      %v1105 = vpop.permute.xlu0 %1104
      %v1107 = vsel %vm943, %v1103, 0
      %v1110 = vsel %vm943, %v1105, 0
      %1112 = vmatpush.bf16.xpose.msra.mxu0 0
      %1113 = vmatpush.bf16.xpose.msra.mxu0 0
      %1114 = vmatpush.bf16.xpose.msra.mxu0 0
      %1115 = vmatpush.bf16.xpose.msra.mxu0 0
      %1116 = vmatpush.bf16.xpose.msra.mxu0 0
      %1117 = vmatpush.bf16.xpose.msra.mxu0 0
      %1118 = vmatpush.bf16.xpose.msra.mxu0 0
      %1119 = vmatpush.bf16.xpose.msra.mxu0 %v1110
      %1120 = vmatmul.bf16.gmra.mxu0 %v1107
      %v1121 = vpop.f32.mrf.mxu0
      %v1122 = vadd.f32 0.0, %v1121
      %v1123 = vpop.f32.mrf.mxu0
      %v1124 = vadd.f32 0.0, %v1123
      %1125 = vdwg.mxu0
      %v1128 = vunpack.c.l.b16 %v934
      %v1129 = vunpack.c.l.b16 %v935
      %v1130 = vpack.c.b16 %v1129, %v1128
      %1131 = vrot.lane.b32.xlu0 %v1130, 96
      %v1132 = vpop.permute.xlu0 %1131
      %v1134 = vsel %vm943, %v1130, 0
      %v1137 = vsel %vm943, %v1132, 0
      %1139 = vmatpush.bf16.xpose.msra.mxu0 0
      %1140 = vmatpush.bf16.xpose.msra.mxu0 0
      %1141 = vmatpush.bf16.xpose.msra.mxu0 0
      %1142 = vmatpush.bf16.xpose.msra.mxu0 0
      %1143 = vmatpush.bf16.xpose.msra.mxu0 0
      %1144 = vmatpush.bf16.xpose.msra.mxu0 0
      %1145 = vmatpush.bf16.xpose.msra.mxu0 0
      %1146 = vmatpush.bf16.xpose.msra.mxu0 %v1137
      %1147 = vmatmul.bf16.gmra.mxu0 %v1134
      %v1148 = vpop.f32.mrf.mxu0
      %v1149 = vadd.f32 0.0, %v1148
      %v1150 = vpop.f32.mrf.mxu0
      %v1151 = vadd.f32 0.0, %v1150
      %1152 = vdwg.mxu0
      %v1153 = vld [vmem:[%s7] sm:$0xff]
      %v1154 = vld [vmem:[%s7 + $0x8] sm:$0xff]
      %v1155 = vld [vmem:[%s7 + $0x10] sm:$0xff]
      %v1156 = vld [vmem:[%s7 + $0x18] sm:$0xff]
      %v1157 = vld [vmem:[%s7 + $0x20] sm:$0xff]
      %v1158 = vld [vmem:[%s7 + $0x28] sm:$0xff]
      %v1159 = vld [vmem:[%s7 + $0x30] sm:$0xff]
      %v1160 = vld [vmem:[%s7 + $0x38] sm:$0xff]
      %v1161 = vadd.f32 %v960, %v1153
      %v1162 = vadd.f32 %v962, %v1154
      %v1163 = vadd.f32 %v987, %v1153
      %v1164 = vadd.f32 %v989, %v1154
      %v1165 = vadd.f32 %v1014, %v1155
      %v1166 = vadd.f32 %v1016, %v1156
      %v1167 = vadd.f32 %v1041, %v1155
      %v1168 = vadd.f32 %v1043, %v1156
      %v1169 = vadd.f32 %v1068, %v1157
      %v1170 = vadd.f32 %v1070, %v1158
      %v1171 = vadd.f32 %v1095, %v1157
      %v1172 = vadd.f32 %v1097, %v1158
      %v1173 = vadd.f32 %v1122, %v1159
      %v1174 = vadd.f32 %v1124, %v1160
      %v1175 = vadd.f32 %v1149, %v1159
      %v1176 = vadd.f32 %v1151, %v1160
      %vm1177 = vcmask 130048
      %v1178 = vsel %vm1177, %v1161, -inf
      %1179 = vmax.xlane.f32.xlu0 %v1178
      %v1180 = vpop.xlane.xlu0 %1179
      %v1181 = vsel %vm1177, %v1162, -inf
      %1182 = vmax.xlane.f32.xlu0 %v1181
      %v1183 = vpop.xlane.xlu0 %1182
      %v1184 = vsel %vm1177, %v1163, -inf
      %1185 = vmax.xlane.f32.xlu0 %v1184
      %v1186 = vpop.xlane.xlu0 %1185
      %v1187 = vsel %vm1177, %v1164, -inf
      %1188 = vmax.xlane.f32.xlu0 %v1187
      %v1189 = vpop.xlane.xlu0 %1188
      %v1190 = vsel %vm1177, %v1165, -inf
      %1191 = vmax.xlane.f32.xlu0 %v1190
      %v1192 = vpop.xlane.xlu0 %1191
      %v1193 = vsel %vm1177, %v1166, -inf
      %1194 = vmax.xlane.f32.xlu0 %v1193
      %v1195 = vpop.xlane.xlu0 %1194
      %v1196 = vsel %vm1177, %v1167, -inf
      %1197 = vmax.xlane.f32.xlu0 %v1196
      %v1198 = vpop.xlane.xlu0 %1197
      %v1199 = vsel %vm1177, %v1168, -inf
      %1200 = vmax.xlane.f32.xlu0 %v1199
      %v1201 = vpop.xlane.xlu0 %1200
      %v1202 = vsel %vm1177, %v1169, -inf
      %1203 = vmax.xlane.f32.xlu0 %v1202
      %v1204 = vpop.xlane.xlu0 %1203
      %v1205 = vsel %vm1177, %v1170, -inf
      %1206 = vmax.xlane.f32.xlu0 %v1205
      %v1207 = vpop.xlane.xlu0 %1206
      %v1208 = vsel %vm1177, %v1171, -inf
      %1209 = vmax.xlane.f32.xlu0 %v1208
      %v1210 = vpop.xlane.xlu0 %1209
      %v1211 = vsel %vm1177, %v1172, -inf
      %1212 = vmax.xlane.f32.xlu0 %v1211
      %v1213 = vpop.xlane.xlu0 %1212
      %v1214 = vsel %vm1177, %v1173, -inf
      %1215 = vmax.xlane.f32.xlu0 %v1214
      %v1216 = vpop.xlane.xlu0 %1215
      %v1217 = vsel %vm1177, %v1174, -inf
      %1218 = vmax.xlane.f32.xlu0 %v1217
      %v1219 = vpop.xlane.xlu0 %1218
      %v1220 = vsel %vm1177, %v1175, -inf
      %1221 = vmax.xlane.f32.xlu0 %v1220
      %v1222 = vpop.xlane.xlu0 %1221
      %v1223 = vsel %vm1177, %v1176, -inf
      %1224 = vmax.xlane.f32.xlu0 %v1223
      %v1225 = vpop.xlane.xlu0 %1224
      %v1226 = vsub.f32 %v1161, %v1180
      %v1227 = vsub.f32 %v1162, %v1183
      %v1228 = vsub.f32 %v1163, %v1186
      %v1229 = vsub.f32 %v1164, %v1189
      %v1230 = vsub.f32 %v1165, %v1192
      %v1231 = vsub.f32 %v1166, %v1195
      %v1232 = vsub.f32 %v1167, %v1198
      %v1233 = vsub.f32 %v1168, %v1201
      %v1234 = vsub.f32 %v1169, %v1204
      %v1235 = vsub.f32 %v1170, %v1207
      %v1236 = vsub.f32 %v1171, %v1210
      %v1237 = vsub.f32 %v1172, %v1213
      %v1238 = vsub.f32 %v1173, %v1216
      %v1239 = vsub.f32 %v1174, %v1219
      %v1240 = vsub.f32 %v1175, %v1222
      %v1241 = vsub.f32 %v1176, %v1225
      %v1242 = vmul.f32 %v1226, 1.442695
      %v1243 = vpow.pop %v1242
      %v1244 = vmul.f32 %v1227, 1.442695
      %v1245 = vpow.pop %v1244
      %v1246 = vmul.f32 %v1228, 1.442695
      %v1247 = vpow.pop %v1246
      %v1248 = vmul.f32 %v1229, 1.442695
      %v1249 = vpow.pop %v1248
      %v1250 = vmul.f32 %v1230, 1.442695
      %v1251 = vpow.pop %v1250
      %v1252 = vmul.f32 %v1231, 1.442695
      %v1253 = vpow.pop %v1252
      %v1254 = vmul.f32 %v1232, 1.442695
      %v1255 = vpow.pop %v1254
      %v1256 = vmul.f32 %v1233, 1.442695
      %v1257 = vpow.pop %v1256
      %v1258 = vmul.f32 %v1234, 1.442695
      %v1259 = vpow.pop %v1258
      %v1260 = vmul.f32 %v1235, 1.442695
      %v1261 = vpow.pop %v1260
      %v1262 = vmul.f32 %v1236, 1.442695
      %v1263 = vpow.pop %v1262
      %v1264 = vmul.f32 %v1237, 1.442695
      %v1265 = vpow.pop %v1264
      %v1266 = vmul.f32 %v1238, 1.442695
      %v1267 = vpow.pop %v1266
      %v1268 = vmul.f32 %v1239, 1.442695
      %v1269 = vpow.pop %v1268
      %v1270 = vmul.f32 %v1240, 1.442695
      %v1271 = vpow.pop %v1270
      %v1272 = vmul.f32 %v1241, 1.442695
      %v1273 = vpow.pop %v1272
      %v1274 = vsel %vm1177, %v1243, 0.0
      %1275 = vadd.xlane.f32.xlu0 %v1274
      %v1276 = vpop.xlane.xlu0 %1275
      %v1277 = vsel %vm1177, %v1245, 0.0
      %1278 = vadd.xlane.f32.xlu0 %v1277
      %v1279 = vpop.xlane.xlu0 %1278
      %v1280 = vsel %vm1177, %v1247, 0.0
      %1281 = vadd.xlane.f32.xlu0 %v1280
      %v1282 = vpop.xlane.xlu0 %1281
      %v1283 = vsel %vm1177, %v1249, 0.0
      %1284 = vadd.xlane.f32.xlu0 %v1283
      %v1285 = vpop.xlane.xlu0 %1284
      %v1286 = vsel %vm1177, %v1251, 0.0
      %1287 = vadd.xlane.f32.xlu0 %v1286
      %v1288 = vpop.xlane.xlu0 %1287
      %v1289 = vsel %vm1177, %v1253, 0.0
      %1290 = vadd.xlane.f32.xlu0 %v1289
      %v1291 = vpop.xlane.xlu0 %1290
      %v1292 = vsel %vm1177, %v1255, 0.0
      %1293 = vadd.xlane.f32.xlu0 %v1292
      %v1294 = vpop.xlane.xlu0 %1293
      %v1295 = vsel %vm1177, %v1257, 0.0
      %1296 = vadd.xlane.f32.xlu0 %v1295
      %v1297 = vpop.xlane.xlu0 %1296
      %v1298 = vsel %vm1177, %v1259, 0.0
      %1299 = vadd.xlane.f32.xlu0 %v1298
      %v1300 = vpop.xlane.xlu0 %1299
      %v1301 = vsel %vm1177, %v1261, 0.0
      %1302 = vadd.xlane.f32.xlu0 %v1301
      %v1303 = vpop.xlane.xlu0 %1302
      %v1304 = vsel %vm1177, %v1263, 0.0
      %1305 = vadd.xlane.f32.xlu0 %v1304
      %v1306 = vpop.xlane.xlu0 %1305
      %v1307 = vsel %vm1177, %v1265, 0.0
      %1308 = vadd.xlane.f32.xlu0 %v1307
      %v1309 = vpop.xlane.xlu0 %1308
      %v1310 = vsel %vm1177, %v1267, 0.0
      %1311 = vadd.xlane.f32.xlu0 %v1310
      %v1312 = vpop.xlane.xlu0 %1311
      %v1313 = vsel %vm1177, %v1269, 0.0
      %1314 = vadd.xlane.f32.xlu0 %v1313
      %v1315 = vpop.xlane.xlu0 %1314
      %v1316 = vsel %vm1177, %v1271, 0.0
      %1317 = vadd.xlane.f32.xlu0 %v1316
      %v1318 = vpop.xlane.xlu0 %1317
      %v1319 = vsel %vm1177, %v1273, 0.0
      %1320 = vadd.xlane.f32.xlu0 %v1319
      %v1321 = vpop.xlane.xlu0 %1320
      %v1322 = vrcp.pop %v1276
      %v1323 = vrcp.pop %v1279
      %v1324 = vrcp.pop %v1282
      %v1325 = vrcp.pop %v1285
      %v1326 = vrcp.pop %v1288
      %v1327 = vrcp.pop %v1291
      %v1328 = vrcp.pop %v1294
      %v1329 = vrcp.pop %v1297
      %v1330 = vrcp.pop %v1300
      %v1331 = vrcp.pop %v1303
      %v1332 = vrcp.pop %v1306
      %v1333 = vrcp.pop %v1309
      %v1334 = vrcp.pop %v1312
      %v1335 = vrcp.pop %v1315
      %v1336 = vrcp.pop %v1318
      %v1337 = vrcp.pop %v1321
      %v1338 = vmul.f32 %v1243, %v1322
      %v1339 = vmul.f32 %v1245, %v1323
      %v1340 = vmul.f32 %v1247, %v1324
      %v1341 = vmul.f32 %v1249, %v1325
      %v1342 = vmul.f32 %v1251, %v1326
      %v1343 = vmul.f32 %v1253, %v1327
      %v1344 = vmul.f32 %v1255, %v1328
      %v1345 = vmul.f32 %v1257, %v1329
      %v1346 = vmul.f32 %v1259, %v1330
      %v1347 = vmul.f32 %v1261, %v1331
      %v1348 = vmul.f32 %v1263, %v1332
      %v1349 = vmul.f32 %v1265, %v1333
      %v1350 = vmul.f32 %v1267, %v1334
      %v1351 = vmul.f32 %v1269, %v1335
      %v1352 = vmul.f32 %v1271, %v1336
      %v1353 = vmul.f32 %v1273, %v1337
      %v1354 = vpack.c.bf16 %v1338, %v1338
      %v1355 = vpack.c.bf16 %v1339, %v1339
      %v1356 = vpack.c.bf16 %v1340, %v1340
      %v1357 = vpack.c.bf16 %v1341, %v1341
      %v1358 = vpack.c.bf16 %v1342, %v1342
      %v1359 = vpack.c.bf16 %v1343, %v1343
      %v1360 = vpack.c.bf16 %v1344, %v1344
      %v1361 = vpack.c.bf16 %v1345, %v1345
      %v1362 = vpack.c.bf16 %v1346, %v1346
      %v1363 = vpack.c.bf16 %v1347, %v1347
      %v1364 = vpack.c.bf16 %v1348, %v1348
      %v1365 = vpack.c.bf16 %v1349, %v1349
      %v1366 = vpack.c.bf16 %v1350, %v1350
      %v1367 = vpack.c.bf16 %v1351, %v1351
      %v1368 = vpack.c.bf16 %v1352, %v1352
      %v1369 = vpack.c.bf16 %v1353, %v1353
      %v1372 = vunpack.c.l.b16 %v1354
      %v1373 = vunpack.c.l.b16 %v1355
      %v1374 = vpack.c.b16 %v1373, %v1372
      %1375 = vrot.lane.b32.xlu0 %v940, 64
      %v1376 = vpop.permute.xlu0 %1375
      %v1379 = vsel %vm1177, %v1374, 0
      %1381 = vmatpush.bf16.msra.mxu0 0
      %1382 = vmatpush.bf16.msra.mxu0 0
      %1383 = vmatpush.bf16.msra.mxu0 0
      %1384 = vmatpush.bf16.msra.mxu0 0
      %1385 = vmatpush.bf16.msra.mxu0 0
      %1386 = vmatpush.bf16.msra.mxu0 0
      %1387 = vmatpush.bf16.msra.mxu0 0
      %1388 = vmatpush.bf16.msra.mxu0 %v1376
      %1389 = vmatmul.bf16.gmra.mxu0 %v1379
      %v1390 = vpop.f32.mrf.mxu0
      %v1391 = vadd.f32 0.0, %v1390
      %v1392 = vpop.f32.mrf.mxu0
      %v1393 = vadd.f32 0.0, %v1392
      %1394 = vdwg.mxu0
      %v1397 = vunpack.c.l.b16 %v1356
      %v1398 = vunpack.c.l.b16 %v1357
      %v1399 = vpack.c.b16 %v1398, %v1397
      %1400 = vrot.lane.b32.xlu0 %v968, 64
      %v1401 = vpop.permute.xlu0 %1400
      %v1404 = vsel %vm1177, %v1399, 0
      %1406 = vmatpush.bf16.msra.mxu0 0
      %1407 = vmatpush.bf16.msra.mxu0 0
      %1408 = vmatpush.bf16.msra.mxu0 0
      %1409 = vmatpush.bf16.msra.mxu0 0
      %1410 = vmatpush.bf16.msra.mxu0 0
      %1411 = vmatpush.bf16.msra.mxu0 0
      %1412 = vmatpush.bf16.msra.mxu0 0
      %1413 = vmatpush.bf16.msra.mxu0 %v1401
      %1414 = vmatmul.bf16.gmra.mxu0 %v1404
      %v1415 = vpop.f32.mrf.mxu0
      %v1416 = vadd.f32 0.0, %v1415
      %v1417 = vpop.f32.mrf.mxu0
      %v1418 = vadd.f32 0.0, %v1417
      %1419 = vdwg.mxu0
      %v1422 = vunpack.c.l.b16 %v1358
      %v1423 = vunpack.c.l.b16 %v1359
      %v1424 = vpack.c.b16 %v1423, %v1422
      %1425 = vrot.lane.b32.xlu0 %v995, 64
      %v1426 = vpop.permute.xlu0 %1425
      %v1429 = vsel %vm1177, %v1424, 0
      %1431 = vmatpush.bf16.msra.mxu0 0
      %1432 = vmatpush.bf16.msra.mxu0 0
      %1433 = vmatpush.bf16.msra.mxu0 0
      %1434 = vmatpush.bf16.msra.mxu0 0
      %1435 = vmatpush.bf16.msra.mxu0 0
      %1436 = vmatpush.bf16.msra.mxu0 0
      %1437 = vmatpush.bf16.msra.mxu0 0
      %1438 = vmatpush.bf16.msra.mxu0 %v1426
      %1439 = vmatmul.bf16.gmra.mxu0 %v1429
      %v1440 = vpop.f32.mrf.mxu0
      %v1441 = vadd.f32 0.0, %v1440
      %v1442 = vpop.f32.mrf.mxu0
      %v1443 = vadd.f32 0.0, %v1442
      %1444 = vdwg.mxu0
      %v1447 = vunpack.c.l.b16 %v1360
      %v1448 = vunpack.c.l.b16 %v1361
      %v1449 = vpack.c.b16 %v1448, %v1447
      %1450 = vrot.lane.b32.xlu0 %v1022, 64
      %v1451 = vpop.permute.xlu0 %1450
      %v1454 = vsel %vm1177, %v1449, 0
      %1456 = vmatpush.bf16.msra.mxu0 0
      %1457 = vmatpush.bf16.msra.mxu0 0
      %1458 = vmatpush.bf16.msra.mxu0 0
      %1459 = vmatpush.bf16.msra.mxu0 0
      %1460 = vmatpush.bf16.msra.mxu0 0
      %1461 = vmatpush.bf16.msra.mxu0 0
      %1462 = vmatpush.bf16.msra.mxu0 0
      %1463 = vmatpush.bf16.msra.mxu0 %v1451
      %1464 = vmatmul.bf16.gmra.mxu0 %v1454
      %v1465 = vpop.f32.mrf.mxu0
      %v1466 = vadd.f32 0.0, %v1465
      %v1467 = vpop.f32.mrf.mxu0
      %v1468 = vadd.f32 0.0, %v1467
      %1469 = vdwg.mxu0
      %v1472 = vunpack.c.l.b16 %v1362
      %v1473 = vunpack.c.l.b16 %v1363
      %v1474 = vpack.c.b16 %v1473, %v1472
      %1475 = vrot.lane.b32.xlu0 %v1049, 64
      %v1476 = vpop.permute.xlu0 %1475
      %v1479 = vsel %vm1177, %v1474, 0
      %1481 = vmatpush.bf16.msra.mxu0 0
      %1482 = vmatpush.bf16.msra.mxu0 0
      %1483 = vmatpush.bf16.msra.mxu0 0
      %1484 = vmatpush.bf16.msra.mxu0 0
      %1485 = vmatpush.bf16.msra.mxu0 0
      %1486 = vmatpush.bf16.msra.mxu0 0
      %1487 = vmatpush.bf16.msra.mxu0 0
      %1488 = vmatpush.bf16.msra.mxu0 %v1476
      %1489 = vmatmul.bf16.gmra.mxu0 %v1479
      %v1490 = vpop.f32.mrf.mxu0
      %v1491 = vadd.f32 0.0, %v1490
      %v1492 = vpop.f32.mrf.mxu0
      %v1493 = vadd.f32 0.0, %v1492
      %1494 = vdwg.mxu0
      %v1497 = vunpack.c.l.b16 %v1364
      %v1498 = vunpack.c.l.b16 %v1365
      %v1499 = vpack.c.b16 %v1498, %v1497
      %1500 = vrot.lane.b32.xlu0 %v1076, 64
      %v1501 = vpop.permute.xlu0 %1500
      %v1504 = vsel %vm1177, %v1499, 0
      %1506 = vmatpush.bf16.msra.mxu0 0
      %1507 = vmatpush.bf16.msra.mxu0 0
      %1508 = vmatpush.bf16.msra.mxu0 0
      %1509 = vmatpush.bf16.msra.mxu0 0
      %1510 = vmatpush.bf16.msra.mxu0 0
      %1511 = vmatpush.bf16.msra.mxu0 0
      %1512 = vmatpush.bf16.msra.mxu0 0
      %1513 = vmatpush.bf16.msra.mxu0 %v1501
      %1514 = vmatmul.bf16.gmra.mxu0 %v1504
      %v1515 = vpop.f32.mrf.mxu0
      %v1516 = vadd.f32 0.0, %v1515
      %v1517 = vpop.f32.mrf.mxu0
      %v1518 = vadd.f32 0.0, %v1517
      %1519 = vdwg.mxu0
      %v1522 = vunpack.c.l.b16 %v1366
      %v1523 = vunpack.c.l.b16 %v1367
      %v1524 = vpack.c.b16 %v1523, %v1522
      %1525 = vrot.lane.b32.xlu0 %v1103, 64
      %v1526 = vpop.permute.xlu0 %1525
      %v1529 = vsel %vm1177, %v1524, 0
      %1531 = vmatpush.bf16.msra.mxu0 0
      %1532 = vmatpush.bf16.msra.mxu0 0
      %1533 = vmatpush.bf16.msra.mxu0 0
      %1534 = vmatpush.bf16.msra.mxu0 0
      %1535 = vmatpush.bf16.msra.mxu0 0
      %1536 = vmatpush.bf16.msra.mxu0 0
      %1537 = vmatpush.bf16.msra.mxu0 0
      %1538 = vmatpush.bf16.msra.mxu0 %v1526
      %1539 = vmatmul.bf16.gmra.mxu0 %v1529
      %v1540 = vpop.f32.mrf.mxu0
      %v1541 = vadd.f32 0.0, %v1540
      %v1542 = vpop.f32.mrf.mxu0
      %v1543 = vadd.f32 0.0, %v1542
      %1544 = vdwg.mxu0
      %v1547 = vunpack.c.l.b16 %v1368
      %v1548 = vunpack.c.l.b16 %v1369
      %v1549 = vpack.c.b16 %v1548, %v1547
      %1550 = vrot.lane.b32.xlu0 %v1130, 64
      %v1551 = vpop.permute.xlu0 %1550
      %v1554 = vsel %vm1177, %v1549, 0
      %1556 = vmatpush.bf16.msra.mxu0 0
      %1557 = vmatpush.bf16.msra.mxu0 0
      %1558 = vmatpush.bf16.msra.mxu0 0
      %1559 = vmatpush.bf16.msra.mxu0 0
      %1560 = vmatpush.bf16.msra.mxu0 0
      %1561 = vmatpush.bf16.msra.mxu0 0
      %1562 = vmatpush.bf16.msra.mxu0 0
      %1563 = vmatpush.bf16.msra.mxu0 %v1551
      %1564 = vmatmul.bf16.gmra.mxu0 %v1554
      %v1565 = vpop.f32.mrf.mxu0
      %v1566 = vadd.f32 0.0, %v1565
      %v1567 = vpop.f32.mrf.mxu0
      %v1568 = vadd.f32 0.0, %v1567
      %1569 = vdwg.mxu0
      %1574 = vrot.lane.b32.xlu0 %v1441, 8
      %v1575 = vpop.permute.xlu0 %1574
      %1576 = vrot.lane.b32.xlu0 %v1443, 8
      %v1577 = vpop.permute.xlu0 %1576
      %1578 = vrot.lane.b32.xlu0 %v1466, 8
      %v1579 = vpop.permute.xlu0 %1578
      %1580 = vrot.lane.b32.xlu0 %v1468, 8
      %v1581 = vpop.permute.xlu0 %1580
      %1590 = vrot.lane.b32.xlu0 %v1491, 16
      %v1591 = vpop.permute.xlu0 %1590
      %1592 = vrot.lane.b32.xlu0 %v1493, 16
      %v1593 = vpop.permute.xlu0 %1592
      %1594 = vrot.lane.b32.xlu0 %v1516, 16
      %v1595 = vpop.permute.xlu0 %1594
      %1596 = vrot.lane.b32.xlu0 %v1518, 16
      %v1597 = vpop.permute.xlu0 %1596
      %1606 = vrot.lane.b32.xlu0 %v1541, 24
      %v1607 = vpop.permute.xlu0 %1606
      %1608 = vrot.lane.b32.xlu0 %v1543, 24
      %v1609 = vpop.permute.xlu0 %1608
      %1610 = vrot.lane.b32.xlu0 %v1566, 24
      %v1611 = vpop.permute.xlu0 %1610
      %1612 = vrot.lane.b32.xlu0 %v1568, 24
      %v1613 = vpop.permute.xlu0 %1612
      %v1618 = vsel %vm943, %v1391, %v1575
      %v1619 = vsel %vm943, %v1393, %v1577
      %v1620 = vsel %vm943, %v1416, %v1579
      %v1621 = vsel %vm943, %v1418, %v1581
      %v1622 = vsel %vm1177, %v1618, %v1591
      %v1623 = vsel %vm1177, %v1619, %v1593
      %v1624 = vsel %vm1177, %v1620, %v1595
      %v1625 = vsel %vm1177, %v1621, %v1597
      %vm1626 = vcmask 195584
      %v1627 = vsel %vm1626, %v1622, %v1607
      %v1628 = vsel %vm1626, %v1623, %v1609
      %v1629 = vsel %vm1626, %v1624, %v1611
      %v1630 = vsel %vm1626, %v1625, %v1613
      %v1631 = vpack.c.bf16 %v1628, %v1627
      %v1632 = vpack.c.bf16 %v1630, %v1629
      %v1633 = vld [vmem:[%s5] sm:$0xf]
      %v1634 = vld [vmem:[%s5 + $0x4] sm:$0xf]
      %v1635 = vld [vmem:[%s5 + $0x8] sm:$0xf]
      %v1636 = vld [vmem:[%s5 + $0xc] sm:$0xf]
      %v1637 = vld [vmem:[%s6] sm:$0x1]
      %v1639 = vperm.slane %v1637, 0
      %v1645 = vunpack.c.l.b16 %v1633
      %v1646 = vunpack.c.l.b16 %v1634
      %v1647 = vunpack.c.l.b16 %v1635
      %v1648 = vunpack.c.l.b16 %v1636
      %v1649 = vpack.c.b16 %v1646, %v1645
      %v1650 = vpack.c.b16 %v1648, %v1647
      %v1654 = vsel %vm547, %v1631, 0
      %v1657 = vsel %vm547, %v1632, 0
      %1659 = vmatpush.bf16.msra.mxu0 0
      %1660 = vmatpush.bf16.msra.mxu0 0
      %1661 = vmatpush.bf16.msra.mxu0 0
      %1662 = vmatpush.bf16.msra.mxu0 0
      %1663 = vmatpush.bf16.msra.mxu0 0
      %1664 = vmatpush.bf16.msra.mxu0 0
      %1665 = vmatpush.bf16.msra.mxu0 %v1650
      %1666 = vmatpush.bf16.msra.mxu0 %v1649
      %1667 = vmatmul.bf16.gmra.mxu0 %v1654
      %v1668 = vpop.f32.mrf.mxu0
      %v1669 = vadd.f32 %v1639, %v1668
      %v1670 = vpop.f32.mrf.mxu0
      %v1671 = vadd.f32 %v1639, %v1670
      %1672 = vmatmul.bf16.gmra.mxu0 %v1657
      %v1673 = vpop.f32.mrf.mxu0
      %v1674 = vadd.f32 %v1639, %v1673
      %v1675 = vpop.f32.mrf.mxu0
      %v1676 = vadd.f32 %v1639, %v1675
      %1677 = vdwg.mxu0
      %v1682 = vrot.slane %v1669, 4
      %v1683 = vrot.slane %v1671, 4
      %v1684 = vrot.slane %v1674, 4
      %v1685 = vrot.slane %v1676, 4
      %v1690 = vadd.f32 %v508, %v1669
      %v1691 = vadd.f32 %v509, %v1682
      %v1692 = vadd.f32 %v510, %v1671
      %v1693 = vadd.f32 %v511, %v1683
      %v1694 = vadd.f32 %v516, %v1674
      %v1695 = vadd.f32 %v517, %v1684
      %v1696 = vadd.f32 %v518, %v1676
      %v1697 = vadd.f32 %v519, %v1685
      %1706 = vst [vmem:[#allocation1] ss:$2 sm:$0xff] %v1690
      %s1707 = scalar_lea.vmem [#allocation1], 1
      %1708 = vst [vmem:[%s1707] ss:$2 sm:$0xff] %v1691
      %s1709 = scalar_lea.vmem [#allocation1], 16
      %1710 = vst [vmem:[%s1709] ss:$2 sm:$0xff] %v1692
      %s1711 = scalar_lea.vmem [#allocation1], 17
      %1712 = vst [vmem:[%s1711] ss:$2 sm:$0xff] %v1693
      %s1713 = scalar_lea.vmem [#allocation1], 32
      %1714 = vst [vmem:[%s1713] ss:$2 sm:$0xff] %v1694
      %s1715 = scalar_lea.vmem [#allocation1], 33
      %1716 = vst [vmem:[%s1715] ss:$2 sm:$0xff] %v1695
      %s1717 = scalar_lea.vmem [#allocation1], 48
      %1718 = vst [vmem:[%s1717] ss:$2 sm:$0xff] %v1696
      %s1719 = scalar_lea.vmem [#allocation1], 49
      %1720 = vst [vmem:[%s1719] ss:$2 sm:$0xff] %v1697
      %v1721 = vld.sshfl [vmem:[#allocation1] sm:$0xff pattern:$0x75316420]
      %v1722 = vld.sshfl [vmem:[#allocation1 + $0x10] sm:$0xff pattern:$0x75316420]
      %v1723 = vld.sshfl [vmem:[#allocation1 + $0x20] sm:$0xff pattern:$0x75316420]
      %v1724 = vld.sshfl [vmem:[#allocation1 + $0x30] sm:$0xff pattern:$0x75316420]
      %v1729 = vsel %vm547, %v1721, 0.0
      %1730 = vadd.xlane.f32.xlu0 %v1729
      %v1731 = vpop.xlane.xlu0 %1730
      %v1732 = vsel %vm547, %v1722, 0.0
      %1733 = vadd.xlane.f32.xlu0 %v1732
      %v1734 = vpop.xlane.xlu0 %1733
      %v1735 = vsel %vm547, %v1723, 0.0
      %1736 = vadd.xlane.f32.xlu0 %v1735
      %v1737 = vpop.xlane.xlu0 %1736
      %v1738 = vsel %vm547, %v1724, 0.0
      %1739 = vadd.xlane.f32.xlu0 %v1738
      %v1740 = vpop.xlane.xlu0 %1739
      %v1741 = vmul.f32 %v1731, %v566
      %v1742 = vmul.f32 %v1734, %v566
      %v1743 = vmul.f32 %v1737, %v566
      %v1744 = vmul.f32 %v1740, %v566
      %v1750 = vunpack.c.l.s4 839922192
      %v1751 = vunpack.c.0.s8 %v1750
      %v1752 = vperm.slane %v1741, %v1751
      %v1754 = vunpack.c.l.s4 1985246804
      %v1755 = vunpack.c.0.s8 %v1754
      %v1756 = vperm.slane %v1741, %v1755
      %v1758 = vunpack.c.l.s4 839922192
      %v1759 = vunpack.c.0.s8 %v1758
      %v1760 = vperm.slane %v1742, %v1759
      %v1762 = vunpack.c.l.s4 1985246804
      %v1763 = vunpack.c.0.s8 %v1762
      %v1764 = vperm.slane %v1742, %v1763
      %v1766 = vunpack.c.l.s4 839922192
      %v1767 = vunpack.c.0.s8 %v1766
      %v1768 = vperm.slane %v1743, %v1767
      %v1770 = vunpack.c.l.s4 1985246804
      %v1771 = vunpack.c.0.s8 %v1770
      %v1772 = vperm.slane %v1743, %v1771
      %v1774 = vunpack.c.l.s4 839922192
      %v1775 = vunpack.c.0.s8 %v1774
      %v1776 = vperm.slane %v1744, %v1775
      %v1778 = vunpack.c.l.s4 1985246804
      %v1779 = vunpack.c.0.s8 %v1778
      %v1780 = vperm.slane %v1744, %v1779
      %v1789 = vsub.f32 %v1690, %v1752
      %v1790 = vsub.f32 %v1691, %v1756
      %v1791 = vsub.f32 %v1692, %v1760
      %v1792 = vsub.f32 %v1693, %v1764
      %v1793 = vsub.f32 %v1694, %v1768
      %v1794 = vsub.f32 %v1695, %v1772
      %v1795 = vsub.f32 %v1696, %v1776
      %v1796 = vsub.f32 %v1697, %v1780
      %v1797 = vmul.f32 %v1789, %v1789
      %v1798 = vmul.f32 %v1790, %v1790
      %v1799 = vmul.f32 %v1791, %v1791
      %v1800 = vmul.f32 %v1792, %v1792
      %v1801 = vmul.f32 %v1793, %v1793
      %v1802 = vmul.f32 %v1794, %v1794
      %v1803 = vmul.f32 %v1795, %v1795
      %v1804 = vmul.f32 %v1796, %v1796
      %1813 = vst [vmem:[#allocation1] ss:$2 sm:$0xff] %v1797
      %s1814 = scalar_lea.vmem [#allocation1], 1
      %1815 = vst [vmem:[%s1814] ss:$2 sm:$0xff] %v1798
      %s1816 = scalar_lea.vmem [#allocation1], 16
      %1817 = vst [vmem:[%s1816] ss:$2 sm:$0xff] %v1799
      %s1818 = scalar_lea.vmem [#allocation1], 17
      %1819 = vst [vmem:[%s1818] ss:$2 sm:$0xff] %v1800
      %s1820 = scalar_lea.vmem [#allocation1], 32
      %1821 = vst [vmem:[%s1820] ss:$2 sm:$0xff] %v1801
      %s1822 = scalar_lea.vmem [#allocation1], 33
      %1823 = vst [vmem:[%s1822] ss:$2 sm:$0xff] %v1802
      %s1824 = scalar_lea.vmem [#allocation1], 48
      %1825 = vst [vmem:[%s1824] ss:$2 sm:$0xff] %v1803
      %s1826 = scalar_lea.vmem [#allocation1], 49
      %1827 = vst [vmem:[%s1826] ss:$2 sm:$0xff] %v1804
      %v1828 = vld.sshfl [vmem:[#allocation1] sm:$0xff pattern:$0x75316420]
      %v1829 = vld.sshfl [vmem:[#allocation1 + $0x10] sm:$0xff pattern:$0x75316420]
      %v1830 = vld.sshfl [vmem:[#allocation1 + $0x20] sm:$0xff pattern:$0x75316420]
      %v1831 = vld.sshfl [vmem:[#allocation1 + $0x30] sm:$0xff pattern:$0x75316420]
      %v1836 = vsel %vm547, %v1828, 0.0
      %1837 = vadd.xlane.f32.xlu0 %v1836
      %v1838 = vpop.xlane.xlu0 %1837
      %v1839 = vsel %vm547, %v1829, 0.0
      %1840 = vadd.xlane.f32.xlu0 %v1839
      %v1841 = vpop.xlane.xlu0 %1840
      %v1842 = vsel %vm547, %v1830, 0.0
      %1843 = vadd.xlane.f32.xlu0 %v1842
      %v1844 = vpop.xlane.xlu0 %1843
      %v1845 = vsel %vm547, %v1831, 0.0
      %1846 = vadd.xlane.f32.xlu0 %v1845
      %v1847 = vpop.xlane.xlu0 %1846
      %v1848 = vmul.f32 %v1838, %v566
      %v1849 = vmul.f32 %v1841, %v566
      %v1850 = vmul.f32 %v1844, %v566
      %v1851 = vmul.f32 %v1847, %v566
      %v1852 = vadd.f32 %v1848, 1e-05
      %v1853 = vadd.f32 %v1849, 1e-05
      %v1854 = vadd.f32 %v1850, 1e-05
      %v1855 = vadd.f32 %v1851, 1e-05
      %v1856 = vrsqrt.pop %v1852
      %v1857 = vmul.f32 %v1856, %v1852
      %v1858 = vmul.f32 %v1857, %v1856
      %v1859 = vmul.f32 0.5, %v1858
      %v1860 = vsub.f32 1.5, %v1859
      %v1861 = vmul.f32 %v1856, %v1860
      %vm1862 = vweird.f32 %v1852
      %vm1863 = vweird.f32 %v1856
      %vm1864 = vmor %vm1862, %vm1863
      %v1865 = vsel %vm1864, %v1856, %v1861
      %v1866 = vrsqrt.pop %v1853
      %v1867 = vmul.f32 %v1866, %v1853
      %v1868 = vmul.f32 %v1867, %v1866
      %v1869 = vmul.f32 0.5, %v1868
      %v1870 = vsub.f32 1.5, %v1869
      %v1871 = vmul.f32 %v1866, %v1870
      %vm1872 = vweird.f32 %v1853
      %vm1873 = vweird.f32 %v1866
      %vm1874 = vmor %vm1872, %vm1873
      %v1875 = vsel %vm1874, %v1866, %v1871
      %v1876 = vrsqrt.pop %v1854
      %v1877 = vmul.f32 %v1876, %v1854
      %v1878 = vmul.f32 %v1877, %v1876
      %v1879 = vmul.f32 0.5, %v1878
      %v1880 = vsub.f32 1.5, %v1879
      %v1881 = vmul.f32 %v1876, %v1880
      %vm1882 = vweird.f32 %v1854
      %vm1883 = vweird.f32 %v1876
      %vm1884 = vmor %vm1882, %vm1883
      %v1885 = vsel %vm1884, %v1876, %v1881
      %v1886 = vrsqrt.pop %v1855
      %v1887 = vmul.f32 %v1886, %v1855
      %v1888 = vmul.f32 %v1887, %v1886
      %v1889 = vmul.f32 0.5, %v1888
      %v1890 = vsub.f32 1.5, %v1889
      %v1891 = vmul.f32 %v1886, %v1890
      %vm1892 = vweird.f32 %v1855
      %vm1893 = vweird.f32 %v1886
      %vm1894 = vmor %vm1892, %vm1893
      %v1895 = vsel %vm1894, %v1886, %v1891
      %v1901 = vunpack.c.l.s4 839922192
      %v1902 = vunpack.c.0.s8 %v1901
      %v1903 = vperm.slane %v1865, %v1902
      %v1905 = vunpack.c.l.s4 1985246804
      %v1906 = vunpack.c.0.s8 %v1905
      %v1907 = vperm.slane %v1865, %v1906
      %v1909 = vunpack.c.l.s4 839922192
      %v1910 = vunpack.c.0.s8 %v1909
      %v1911 = vperm.slane %v1875, %v1910
      %v1913 = vunpack.c.l.s4 1985246804
      %v1914 = vunpack.c.0.s8 %v1913
      %v1915 = vperm.slane %v1875, %v1914
      %v1917 = vunpack.c.l.s4 839922192
      %v1918 = vunpack.c.0.s8 %v1917
      %v1919 = vperm.slane %v1885, %v1918
      %v1921 = vunpack.c.l.s4 1985246804
      %v1922 = vunpack.c.0.s8 %v1921
      %v1923 = vperm.slane %v1885, %v1922
      %v1925 = vunpack.c.l.s4 839922192
      %v1926 = vunpack.c.0.s8 %v1925
      %v1927 = vperm.slane %v1895, %v1926
      %v1929 = vunpack.c.l.s4 1985246804
      %v1930 = vunpack.c.0.s8 %v1929
      %v1931 = vperm.slane %v1895, %v1930
      %v1940 = vmul.f32 %v1789, %v1903
      %v1941 = vmul.f32 %v1790, %v1907
      %v1942 = vmul.f32 %v1791, %v1911
      %v1943 = vmul.f32 %v1792, %v1915
      %v1944 = vmul.f32 %v1793, %v1919
      %v1945 = vmul.f32 %v1794, %v1923
      %v1946 = vmul.f32 %v1795, %v1927
      %v1947 = vmul.f32 %v1796, %v1931
      %v1948 = vld [vmem:[%s8] sm:$0x1]
      %v1950 = vperm.slane %v1948, 0
      %v1952 = vrot.slane %v1950, 4
      %v1954 = vmul.f32 %v1940, %v1950
      %v1955 = vmul.f32 %v1941, %v1952
      %v1956 = vmul.f32 %v1942, %v1950
      %v1957 = vmul.f32 %v1943, %v1952
      %v1958 = vmul.f32 %v1944, %v1950
      %v1959 = vmul.f32 %v1945, %v1952
      %v1960 = vmul.f32 %v1946, %v1950
      %v1961 = vmul.f32 %v1947, %v1952
      %v1962 = vld [vmem:[%s9] sm:$0x1]
      %v1964 = vperm.slane %v1962, 0
      %v1966 = vrot.slane %v1964, 4
      %v1968 = vadd.f32 %v1954, %v1964
      %v1969 = vadd.f32 %v1955, %v1966
      %v1970 = vadd.f32 %v1956, %v1964
      %v1971 = vadd.f32 %v1957, %v1966
      %v1972 = vadd.f32 %v1958, %v1964
      %v1973 = vadd.f32 %v1959, %v1966
      %v1974 = vadd.f32 %v1960, %v1964
      %v1975 = vadd.f32 %v1961, %v1966
      %1984 = vst [vmem:[#allocation1] ss:$2 sm:$0xff] %v1968
      %s1985 = scalar_lea.vmem [#allocation1], 1
      %1986 = vst [vmem:[%s1985] ss:$2 sm:$0xff] %v1969
      %s1987 = scalar_lea.vmem [#allocation1], 16
      %1988 = vst [vmem:[%s1987] ss:$2 sm:$0xff] %v1970
      %s1989 = scalar_lea.vmem [#allocation1], 17
      %1990 = vst [vmem:[%s1989] ss:$2 sm:$0xff] %v1971
      %s1991 = scalar_lea.vmem [#allocation1], 32
      %1992 = vst [vmem:[%s1991] ss:$2 sm:$0xff] %v1972
      %s1993 = scalar_lea.vmem [#allocation1], 33
      %1994 = vst [vmem:[%s1993] ss:$2 sm:$0xff] %v1973
      %s1995 = scalar_lea.vmem [#allocation1], 48
      %1996 = vst [vmem:[%s1995] ss:$2 sm:$0xff] %v1974
      %s1997 = scalar_lea.vmem [#allocation1], 49
      %1998 = vst [vmem:[%s1997] ss:$2 sm:$0xff] %v1975
      %v1999 = vld.sshfl [vmem:[#allocation1] sm:$0xff pattern:$0x75316420]
      %v2000 = vld.sshfl [vmem:[#allocation1 + $0x10] sm:$0xff pattern:$0x75316420]
      %v2001 = vld.sshfl [vmem:[#allocation1 + $0x20] sm:$0xff pattern:$0x75316420]
      %v2002 = vld.sshfl [vmem:[#allocation1 + $0x30] sm:$0xff pattern:$0x75316420]
      %v2007 = vpack.c.bf16 %v2000, %v1999
      %v2008 = vpack.c.bf16 %v2002, %v2001
      %v2009 = vld [vmem:[%s10] sm:$0xf]
      %v2010 = vld [vmem:[%s10 + $0x4] sm:$0xf]
      %v2011 = vld [vmem:[%s10 + $0x8] sm:$0xf]
      %v2012 = vld [vmem:[%s10 + $0xc] sm:$0xf]
      %v2013 = vld [vmem:[%s11] sm:$0x1]
      %v2015 = vperm.slane %v2013, 0
      %v2021 = vunpack.c.l.b16 %v2009
      %v2022 = vunpack.c.l.b16 %v2010
      %v2023 = vunpack.c.l.b16 %v2011
      %v2024 = vunpack.c.l.b16 %v2012
      %v2025 = vpack.c.b16 %v2022, %v2021
      %v2026 = vpack.c.b16 %v2024, %v2023
      %v2030 = vsel %vm547, %v2007, 0
      %v2033 = vsel %vm547, %v2008, 0
      %2035 = vmatpush.bf16.msra.mxu0 0
      %2036 = vmatpush.bf16.msra.mxu0 0
      %2037 = vmatpush.bf16.msra.mxu0 0
      %2038 = vmatpush.bf16.msra.mxu0 0
      %2039 = vmatpush.bf16.msra.mxu0 0
      %2040 = vmatpush.bf16.msra.mxu0 0
      %2041 = vmatpush.bf16.msra.mxu0 %v2026
      %2042 = vmatpush.bf16.msra.mxu0 %v2025
      %2043 = vmatmul.bf16.gmra.mxu0 %v2030
      %v2044 = vpop.f32.mrf.mxu0
      %v2045 = vadd.f32 %v2015, %v2044
      %v2046 = vpop.f32.mrf.mxu0
      %v2047 = vadd.f32 %v2015, %v2046
      %2048 = vmatmul.bf16.gmra.mxu0 %v2033
      %v2049 = vpop.f32.mrf.mxu0
      %v2050 = vadd.f32 %v2015, %v2049
      %v2051 = vpop.f32.mrf.mxu0
      %v2052 = vadd.f32 %v2015, %v2051
      %2053 = vdwg.mxu0
      %v2054 = vmul.f32 %v2045, 0.5
      %v2055 = vmul.f32 %v2047, 0.5
      %v2056 = vmul.f32 %v2050, 0.5
      %v2057 = vmul.f32 %v2052, 0.5
      %v2058 = vmul.f32 %v2045, 0.044715
      %v2059 = vmul.f32 %v2047, 0.044715
      %v2060 = vmul.f32 %v2050, 0.044715
      %v2061 = vmul.f32 %v2052, 0.044715
      %v2062 = vmul.f32 %v2058, %v2045
      %v2063 = vmul.f32 %v2059, %v2047
      %v2064 = vmul.f32 %v2060, %v2050
      %v2065 = vmul.f32 %v2061, %v2052
      %v2066 = vmul.f32 %v2062, %v2045
      %v2067 = vmul.f32 %v2063, %v2047
      %v2068 = vmul.f32 %v2064, %v2050
      %v2069 = vmul.f32 %v2065, %v2052
      %v2070 = vadd.f32 %v2045, %v2066
      %v2071 = vadd.f32 %v2047, %v2067
      %v2072 = vadd.f32 %v2050, %v2068
      %v2073 = vadd.f32 %v2052, %v2069
      %v2074 = vmul.f32 %v2070, 0.7978846
      %v2075 = vmul.f32 %v2071, 0.7978846
      %v2076 = vmul.f32 %v2072, 0.7978846
      %v2077 = vmul.f32 %v2073, 0.7978846
      %v2078 = vtanh.pop %v2074
      %v2079 = vtanh.pop %v2075
      %v2080 = vtanh.pop %v2076
      %v2081 = vtanh.pop %v2077
      %v2082 = vadd.f32 %v2078, 1.0
      %v2083 = vadd.f32 %v2079, 1.0
      %v2084 = vadd.f32 %v2080, 1.0
      %v2085 = vadd.f32 %v2081, 1.0
      %v2086 = vmul.f32 %v2054, %v2082
      %v2087 = vmul.f32 %v2055, %v2083
      %v2088 = vmul.f32 %v2056, %v2084
      %v2089 = vmul.f32 %v2057, %v2085
      %v2090 = vpack.c.bf16 %v2087, %v2086
      %v2091 = vpack.c.bf16 %v2089, %v2088
      %v2092 = vld [vmem:[%s12] sm:$0xf]
      %v2093 = vld [vmem:[%s12 + $0x4] sm:$0xf]
      %v2094 = vld [vmem:[%s12 + $0x8] sm:$0xf]
      %v2095 = vld [vmem:[%s12 + $0xc] sm:$0xf]
      %v2096 = vld [vmem:[%s12 + $0x10] sm:$0xf]
      %v2097 = vld [vmem:[%s12 + $0x14] sm:$0xf]
      %v2098 = vld [vmem:[%s12 + $0x18] sm:$0xf]
      %v2099 = vld [vmem:[%s12 + $0x1c] sm:$0xf]
      %v2100 = vld [vmem:[%s12 + $0x20] sm:$0xf]
      %v2101 = vld [vmem:[%s12 + $0x24] sm:$0xf]
      %v2102 = vld [vmem:[%s12 + $0x28] sm:$0xf]
      %v2103 = vld [vmem:[%s12 + $0x2c] sm:$0xf]
      %v2104 = vld [vmem:[%s12 + $0x30] sm:$0xf]
      %v2105 = vld [vmem:[%s12 + $0x34] sm:$0xf]
      %v2106 = vld [vmem:[%s12 + $0x38] sm:$0xf]
      %v2107 = vld [vmem:[%s12 + $0x3c] sm:$0xf]
      %v2108 = vld [vmem:[%s13] sm:$0x1]
      %v2110 = vperm.slane %v2108, 0
      %v2128 = vunpack.c.l.b16 %v2092
      %v2129 = vunpack.c.l.b16 %v2093
      %v2130 = vunpack.c.l.b16 %v2094
      %v2131 = vunpack.c.l.b16 %v2095
      %v2132 = vunpack.c.l.b16 %v2096
      %v2133 = vunpack.c.l.b16 %v2097
      %v2134 = vunpack.c.l.b16 %v2098
      %v2135 = vunpack.c.l.b16 %v2099
      %v2136 = vunpack.c.l.b16 %v2100
      %v2137 = vunpack.c.l.b16 %v2101
      %v2138 = vunpack.c.l.b16 %v2102
      %v2139 = vunpack.c.l.b16 %v2103
      %v2140 = vunpack.c.l.b16 %v2104
      %v2141 = vunpack.c.l.b16 %v2105
      %v2142 = vunpack.c.l.b16 %v2106
      %v2143 = vunpack.c.l.b16 %v2107
      %v2144 = vpack.c.b16 %v2129, %v2128
      %v2145 = vpack.c.b16 %v2131, %v2130
      %v2146 = vpack.c.b16 %v2133, %v2132
      %v2147 = vpack.c.b16 %v2135, %v2134
      %v2148 = vpack.c.b16 %v2137, %v2136
      %v2149 = vpack.c.b16 %v2139, %v2138
      %v2150 = vpack.c.b16 %v2141, %v2140
      %v2151 = vpack.c.b16 %v2143, %v2142
      %2160 = vmatpush.bf16.msra.mxu0 %v2151
      %2161 = vmatpush.bf16.msra.mxu0 %v2150
      %2162 = vmatpush.bf16.msra.mxu0 %v2149
      %2163 = vmatpush.bf16.msra.mxu0 %v2148
      %2164 = vmatpush.bf16.msra.mxu0 %v2147
      %2165 = vmatpush.bf16.msra.mxu0 %v2146
      %2166 = vmatpush.bf16.msra.mxu0 %v2145
      %2167 = vmatpush.bf16.msra.mxu0 %v2144
      %2168 = vmatmul.bf16.gmra.mxu0 %v2090
      %v2169 = vpop.f32.mrf.mxu0
      %v2170 = vadd.f32 %v2110, %v2169
      %v2171 = vpop.f32.mrf.mxu0
      %v2172 = vadd.f32 %v2110, %v2171
      %2173 = vmatmul.bf16.gmra.mxu0 %v2091
      %v2174 = vpop.f32.mrf.mxu0
      %v2175 = vadd.f32 %v2110, %v2174
      %v2176 = vpop.f32.mrf.mxu0
      %v2177 = vadd.f32 %v2110, %v2176
      %2178 = vdwg.mxu0
      %v2183 = vrot.slane %v2170, 4
      %v2184 = vrot.slane %v2172, 4
      %v2185 = vrot.slane %v2175, 4
      %v2186 = vrot.slane %v2177, 4
      %v2191 = vadd.f32 %v1690, %v2170
      %v2192 = vadd.f32 %v1691, %v2183
      %v2193 = vadd.f32 %v1692, %v2172
      %v2194 = vadd.f32 %v1693, %v2184
      %v2195 = vadd.f32 %v1694, %v2175
      %v2196 = vadd.f32 %v1695, %v2185
      %v2197 = vadd.f32 %v1696, %v2177
      %v2198 = vadd.f32 %v1697, %v2186
      %2207 = vst [vmem:[#allocation1] ss:$2 sm:$0xff] %v2191
      %s2208 = scalar_lea.vmem [#allocation1], 1
      %2209 = vst [vmem:[%s2208] ss:$2 sm:$0xff] %v2195
      %v2210 = vld.sshfl [vmem:[#allocation1] sm:$0xff pattern:$0x75316420]
      %s2211 = scalar_lea.vmem [#allocation1], 16
      %2212 = vst [vmem:[%s2211] ss:$2 sm:$0xff] %v2192
      %s2213 = scalar_lea.vmem [#allocation1], 17
      %2214 = vst [vmem:[%s2213] ss:$2 sm:$0xff] %v2196
      %v2215 = vld.sshfl [vmem:[#allocation1 + $0x10] sm:$0xff pattern:$0x75316420]
      %s2216 = scalar_lea.vmem [#allocation1], 32
      %2217 = vst [vmem:[%s2216] ss:$2 sm:$0xff] %v2193
      %s2218 = scalar_lea.vmem [#allocation1], 33
      %2219 = vst [vmem:[%s2218] ss:$2 sm:$0xff] %v2197
      %v2220 = vld.sshfl [vmem:[#allocation1 + $0x20] sm:$0xff pattern:$0x75316420]
      %s2221 = scalar_lea.vmem [#allocation1], 48
      %2222 = vst [vmem:[%s2221] ss:$2 sm:$0xff] %v2194
      %s2223 = scalar_lea.vmem [#allocation1], 49
      %2224 = vst [vmem:[%s2223] ss:$2 sm:$0xff] %v2198
      %v2225 = vld.sshfl [vmem:[#allocation1 + $0x30] sm:$0xff pattern:$0x75316420]
      %2230 = vst.msk [vmem:[%s505] sm:$0xff] %vm547, %v2210
      %2231 = vst.msk [vmem:[%s505 + $0x8] sm:$0xff] %vm547, %v2215
      %2232 = vst.msk [vmem:[%s505 + $0x10] sm:$0xff] %vm547, %v2220
      %2233 = vst.msk [vmem:[%s505 + $0x18] sm:$0xff] %vm547, %v2225
      %s2234 = smul.u32 4, %s30
      %p2235 = scmp.lt.s32.totalorder %s29, 1
      %s2236 = scalar_select %p2235, %s29, 1
      %p2237 = scmp.lt.s32.totalorder %s2234, 7
      %s2238 = scalar_select %p2237, %s2234, 7
      %s2239 = smul.addr %s2236, 8
      %s2240 = sadd.s32 %s2238, %s2239
      %s2241 = smul.addr %s2240, 8
      %s2242 = scalar_lea.vmem %s14, %s2241
      // Predicated region
      $region77: #{_lambda_.2} parent=75 // pred_check
        %p2243 = pneg %p358
      $region78: #{_lambda_.2} parent=75 // pred_check_branch
        %2245 = sbr.rel (%p2243) target = $region80
      $region79: #{_lambda_.2} parent=75 // pred_region
        %s2246 = smul.u32 4, %s30
      $region80: #{_lambda_.2} parent=75 // pred_fallthru
        _
    $region76: #{_lambda_.2} parent=5 // pred_fallthru
      _
    %p2247 = scmp.le.s32.totalorder 2, %s20
    // Predicated region
    $region81: #{_lambda_.2} parent=5 // pred_check
      %p2248 = pneg %p2247
    $region82: #{_lambda_.2} parent=5 // pred_check_branch
      %2250 = sbr.rel (%p2248) target = $region84
    $region83: #{_lambda_.2} parent=5 // pred_region
      %s2251 = ssub.s32 %s20, 2
      // Predicated region
      $region85: #{_lambda_.2} parent=83 // pred_check
        %p2252 = pneg %p364
      $region86: #{_lambda_.2} parent=83 // pred_check_branch
        %2254 = sbr.rel (%p2252) target = $region88
      $region87: #{_lambda_.2} parent=83 // pred_region
        %s2255 = smul.u32 4, %s32
        %p2256 = scmp.lt.s32.totalorder %s31, 1
        %s2257 = scalar_select %p2256, %s31, 1
        %p2258 = scmp.lt.s32.totalorder %s2255, 7
        %s2259 = scalar_select %p2258, %s2255, 7
        %s2260 = smul.addr %s2257, 8
        %s2261 = sadd.s32 %s2259, %s2260
        %s2262 = smul.addr %s2261, 8
        %s2263 = scalar_lea.vmem %s14, %s2262
      $region88: #{_lambda_.2} parent=83 // pred_fallthru
        _
    $region84: #{_lambda_.2} parent=5 // pred_fallthru
      _
  $region6: #{_lambda_.2} parent=0 // loop_footer
    %s24 = sadd.s32 1, %s20
  $region7: #{_lambda_.2} parent=0 // loop_footer_branch
    %19 = sbr.rel target = $region3
  $region8: #{_lambda_.2} parent=0 // loop_exit
    _

// kernel: _lambda_.3
$region0: #{_lambda_.3}
  #allocation0 [shape = 'u32[]', space=smem, size = 0x4, offset = 0x4, fixed_abs, tag = 'smem constant byte address 0x4 - core index']
  #allocation1 [shape = 'u32[72,128]{1,0:T(1,128)}', space=vmem, size = 0x9000, scoped, tag = 'internal scratch']
  %s0 = inlined_call_operand.vmem [shape: f32[2,8,8,32], index: 0, kind: input, shape index: {}]
  %s1 = inlined_call_operand.vmem [shape: f32[1,32], index: 1, kind: input, shape index: {}]
  %s2 = inlined_call_operand.vmem [shape: f32[1,32], index: 2, kind: input, shape index: {}]
  %s3 = inlined_call_operand.vmem [shape: bf16[32,96], index: 3, kind: input, shape index: {}]
  %s4 = inlined_call_operand.vmem [shape: f32[1,96], index: 4, kind: input, shape index: {}]
  %s5 = inlined_call_operand.vmem [shape: bf16[32,32], index: 5, kind: input, shape index: {}]
  %s6 = inlined_call_operand.vmem [shape: f32[1,32], index: 6, kind: input, shape index: {}]
  %s7 = inlined_call_operand.vmem [shape: f32[4,16,16], index: 7, kind: input, shape index: {}]
  %s8 = inlined_call_operand.vmem [shape: f32[1,32], index: 8, kind: input, shape index: {}]
  %s9 = inlined_call_operand.vmem [shape: f32[1,32], index: 9, kind: input, shape index: {}]
  %s10 = inlined_call_operand.vmem [shape: bf16[32,128], index: 10, kind: input, shape index: {}]
  %s11 = inlined_call_operand.vmem [shape: f32[1,128], index: 11, kind: input, shape index: {}]
  %s12 = inlined_call_operand.vmem [shape: bf16[128,32], index: 12, kind: input, shape index: {}]
  %s13 = inlined_call_operand.vmem [shape: f32[1,32], index: 13, kind: input, shape index: {}]
  %s14 = inlined_call_operand.vmem [shape: f32[4,16,16], index: 14, kind: input, shape index: {}]
  %s15 = inlined_call_operand.vmem [shape: f32[2,8,8,32], index: 15, kind: output, shape index: {}]
  %s16 = sld [smem:[#allocation0]]
  $region93: #{_lambda_.3} parent=0
    _
  %s18 = ssub.s32 1, %s16
  %s19 = scalar_select 0, %s18, %s16
  loop: start=0, step=1, limit=6
  $region2: #{_lambda_.3} parent=0 // loop_pre_header
    _
  $region3: #{_lambda_.3} parent=0 // loop_header
    %s21 = sphi 0, %s25
    %p22 = scmp.ge.s32.totalorder %s21, 6
    %s28 = sphi 0, %s40
    %s29 = sphi 0, %s36
    %s30 = sphi 0, %s28
    %s31 = sphi 0, %s29
    %s32 = sphi 0, %s30
    %s33 = sphi 0, %s31
    %s45 = sphi 0, %s47
    %s48 = sphi 0, %s45
    %s49 = sphi 0, %s48
    %s65 = sphi 0, %s49
    %s69 = sphi 0, %s69
    %s71 = sphi 0, %s69
    %s72 = sphi 0, %s71
    %s86 = sphi 0, %s72
    %s90 = sphi 0, %s90
    %s92 = sphi 0, %s90
    %s93 = sphi 0, %s92
    %s107 = sphi 0, %s93
    %s111 = sphi 0, %s111
    %s113 = sphi 0, %s111
    %s114 = sphi 0, %s113
    %s128 = sphi 0, %s114
    %s132 = sphi 0, %s132
    %s134 = sphi 0, %s132
    %s135 = sphi 0, %s134
    %s149 = sphi 0, %s135
    %s153 = sphi 0, %s153
    %s155 = sphi 0, %s153
    %s156 = sphi 0, %s155
    %s170 = sphi 0, %s156
    %s174 = sphi 0, %s174
    %s176 = sphi 0, %s174
    %s177 = sphi 0, %s176
    %s191 = sphi 0, %s177
    %s195 = sphi 0, %s195
    %s197 = sphi 0, %s195
    %s198 = sphi 0, %s197
    %s212 = sphi 0, %s198
    %s216 = sphi 0, %s216
    %s218 = sphi 0, %s216
    %s219 = sphi 0, %s218
    %s233 = sphi 0, %s219
    %s237 = sphi 0, %s237
    %s239 = sphi 0, %s237
    %s240 = sphi 0, %s239
    %s254 = sphi 0, %s240
    %s258 = sphi 0, %s258
    %s260 = sphi 0, %s258
    %s261 = sphi 0, %s260
    %s275 = sphi 0, %s261
    %s279 = sphi 0, %s279
    %s281 = sphi 0, %s279
    %s282 = sphi 0, %s281
    %s296 = sphi 0, %s282
    %s300 = sphi 0, %s300
    %s302 = sphi 0, %s300
    %s303 = sphi 0, %s302
    %s317 = sphi 0, %s303
    %s321 = sphi 0, %s321
    %s323 = sphi 0, %s321
    %s324 = sphi 0, %s323
    %s338 = sphi 0, %s324
    %s342 = sphi 0, %s342
    %s344 = sphi 0, %s342
    %s345 = sphi 0, %s344
    %s359 = sphi 0, %s345
    %s367 = sphi 0, %s369
    %s370 = sphi 0, %s367
    %s371 = sphi 0, %s370
    %s387 = sphi 0, %s371
  $region4: #{_lambda_.3} parent=0 // loop_header_branch
    %24 = sbr.rel (%p22) target = $region8
  $region5: #{_lambda_.3} parent=0 // loop_body
    %s26 = ssub.s32 %s21, 1
    %s27 = ssub.s32 %s21, 2
    %s34 = sadd.s32 1, %s29
    %p35 = scmp.ge.s32.totalorder %s34, 2
    %s36 = scalar_select %p35, 0, %s34
    %s37 = sadd.s32 1, %s28
    %s38 = scalar_select %p35, %s37, %s28
    %p39 = scmp.ge.s32.totalorder %s38, 2
    %s40 = scalar_select %p39, 0, %s38
    %s41 = ssub.s32 %s28, %s40
    %s42 = ssub.s32 %s29, %s36
    %s43 = sor.u32 %s41, %s42
    %p44 = scmp.eq.s32.totalorder %s43, 0
    %s46 = sadd.s32 %s45, 1
    %s47 = scalar_select %p44, %s45, %s46
    %p50 = pneg %p44
    %p51 = scmp.eq.s32.totalorder %s21, 3
    %p52 = por %p50, %p51
    %p53 = scmp.ne.s32.totalorder %s45, %s48
    %p54 = scmp.eq.s32.totalorder %s21, 0
    %p55 = por %p53, %p54
    %p56 = scmp.ne.s32.totalorder %s45, %s48
    %p57 = scmp.eq.s32.totalorder %s26, 3
    %p58 = por %p56, %p57
    %p59 = scmp.ne.s32.totalorder %s48, %s49
    %p60 = scmp.eq.s32.totalorder %s26, 0
    %p61 = por %p59, %p60
    %p62 = scmp.ne.s32.totalorder %s48, %s49
    %p63 = scmp.eq.s32.totalorder %s27, 3
    %p64 = por %p62, %p63
    %p66 = scmp.ne.s32.totalorder %s49, %s65
    %p67 = scmp.eq.s32.totalorder %s27, 0
    %p68 = por %p66, %p67
    %s70 = sadd.s32 %s69, 1
    %p73 = scmp.eq.s32.totalorder %s21, 3
    %p74 = scmp.ne.s32.totalorder %s69, %s71
    %p75 = scmp.eq.s32.totalorder %s21, 0
    %p76 = por %p74, %p75
    %p77 = scmp.ne.s32.totalorder %s69, %s71
    %p78 = scmp.eq.s32.totalorder %s26, 3
    %p79 = por %p77, %p78
    %p80 = scmp.ne.s32.totalorder %s71, %s72
    %p81 = scmp.eq.s32.totalorder %s26, 0
    %p82 = por %p80, %p81
    %p83 = scmp.ne.s32.totalorder %s71, %s72
    %p84 = scmp.eq.s32.totalorder %s27, 3
    %p85 = por %p83, %p84
    %p87 = scmp.ne.s32.totalorder %s72, %s86
    %p88 = scmp.eq.s32.totalorder %s27, 0
    %p89 = por %p87, %p88
    %s91 = sadd.s32 %s90, 1
    %p94 = scmp.eq.s32.totalorder %s21, 3
    %p95 = scmp.ne.s32.totalorder %s90, %s92
    %p96 = scmp.eq.s32.totalorder %s21, 0
    %p97 = por %p95, %p96
    %p98 = scmp.ne.s32.totalorder %s90, %s92
    %p99 = scmp.eq.s32.totalorder %s26, 3
    %p100 = por %p98, %p99
    %p101 = scmp.ne.s32.totalorder %s92, %s93
    %p102 = scmp.eq.s32.totalorder %s26, 0
    %p103 = por %p101, %p102
    %p104 = scmp.ne.s32.totalorder %s92, %s93
    %p105 = scmp.eq.s32.totalorder %s27, 3
    %p106 = por %p104, %p105
    %p108 = scmp.ne.s32.totalorder %s93, %s107
    %p109 = scmp.eq.s32.totalorder %s27, 0
    %p110 = por %p108, %p109
    %s112 = sadd.s32 %s111, 1
    %p115 = scmp.eq.s32.totalorder %s21, 3
    %p116 = scmp.ne.s32.totalorder %s111, %s113
    %p117 = scmp.eq.s32.totalorder %s21, 0
    %p118 = por %p116, %p117
    %p119 = scmp.ne.s32.totalorder %s111, %s113
    %p120 = scmp.eq.s32.totalorder %s26, 3
    %p121 = por %p119, %p120
    %p122 = scmp.ne.s32.totalorder %s113, %s114
    %p123 = scmp.eq.s32.totalorder %s26, 0
    %p124 = por %p122, %p123
    %p125 = scmp.ne.s32.totalorder %s113, %s114
    %p126 = scmp.eq.s32.totalorder %s27, 3
    %p127 = por %p125, %p126
    %p129 = scmp.ne.s32.totalorder %s114, %s128
    %p130 = scmp.eq.s32.totalorder %s27, 0
    %p131 = por %p129, %p130
    %s133 = sadd.s32 %s132, 1
    %p136 = scmp.eq.s32.totalorder %s21, 3
    %p137 = scmp.ne.s32.totalorder %s132, %s134
    %p138 = scmp.eq.s32.totalorder %s21, 0
    %p139 = por %p137, %p138
    %p140 = scmp.ne.s32.totalorder %s132, %s134
    %p141 = scmp.eq.s32.totalorder %s26, 3
    %p142 = por %p140, %p141
    %p143 = scmp.ne.s32.totalorder %s134, %s135
    %p144 = scmp.eq.s32.totalorder %s26, 0
    %p145 = por %p143, %p144
    %p146 = scmp.ne.s32.totalorder %s134, %s135
    %p147 = scmp.eq.s32.totalorder %s27, 3
    %p148 = por %p146, %p147
    %p150 = scmp.ne.s32.totalorder %s135, %s149
    %p151 = scmp.eq.s32.totalorder %s27, 0
    %p152 = por %p150, %p151
    %s154 = sadd.s32 %s153, 1
    %p157 = scmp.eq.s32.totalorder %s21, 3
    %p158 = scmp.ne.s32.totalorder %s153, %s155
    %p159 = scmp.eq.s32.totalorder %s21, 0
    %p160 = por %p158, %p159
    %p161 = scmp.ne.s32.totalorder %s153, %s155
    %p162 = scmp.eq.s32.totalorder %s26, 3
    %p163 = por %p161, %p162
    %p164 = scmp.ne.s32.totalorder %s155, %s156
    %p165 = scmp.eq.s32.totalorder %s26, 0
    %p166 = por %p164, %p165
    %p167 = scmp.ne.s32.totalorder %s155, %s156
    %p168 = scmp.eq.s32.totalorder %s27, 3
    %p169 = por %p167, %p168
    %p171 = scmp.ne.s32.totalorder %s156, %s170
    %p172 = scmp.eq.s32.totalorder %s27, 0
    %p173 = por %p171, %p172
    %s175 = sadd.s32 %s174, 1
    %p178 = scmp.eq.s32.totalorder %s21, 3
    %p179 = scmp.ne.s32.totalorder %s174, %s176
    %p180 = scmp.eq.s32.totalorder %s21, 0
    %p181 = por %p179, %p180
    %p182 = scmp.ne.s32.totalorder %s174, %s176
    %p183 = scmp.eq.s32.totalorder %s26, 3
    %p184 = por %p182, %p183
    %p185 = scmp.ne.s32.totalorder %s176, %s177
    %p186 = scmp.eq.s32.totalorder %s26, 0
    %p187 = por %p185, %p186
    %p188 = scmp.ne.s32.totalorder %s176, %s177
    %p189 = scmp.eq.s32.totalorder %s27, 3
    %p190 = por %p188, %p189
    %p192 = scmp.ne.s32.totalorder %s177, %s191
    %p193 = scmp.eq.s32.totalorder %s27, 0
    %p194 = por %p192, %p193
    %s196 = sadd.s32 %s195, 1
    %p199 = scmp.eq.s32.totalorder %s21, 3
    %p200 = scmp.ne.s32.totalorder %s195, %s197
    %p201 = scmp.eq.s32.totalorder %s21, 0
    %p202 = por %p200, %p201
    %p203 = scmp.ne.s32.totalorder %s195, %s197
    %p204 = scmp.eq.s32.totalorder %s26, 3
    %p205 = por %p203, %p204
    %p206 = scmp.ne.s32.totalorder %s197, %s198
    %p207 = scmp.eq.s32.totalorder %s26, 0
    %p208 = por %p206, %p207
    %p209 = scmp.ne.s32.totalorder %s197, %s198
    %p210 = scmp.eq.s32.totalorder %s27, 3
    %p211 = por %p209, %p210
    %p213 = scmp.ne.s32.totalorder %s198, %s212
    %p214 = scmp.eq.s32.totalorder %s27, 0
    %p215 = por %p213, %p214
    %s217 = sadd.s32 %s216, 1
    %p220 = scmp.eq.s32.totalorder %s21, 3
    %p221 = scmp.ne.s32.totalorder %s216, %s218
    %p222 = scmp.eq.s32.totalorder %s21, 0
    %p223 = por %p221, %p222
    %p224 = scmp.ne.s32.totalorder %s216, %s218
    %p225 = scmp.eq.s32.totalorder %s26, 3
    %p226 = por %p224, %p225
    %p227 = scmp.ne.s32.totalorder %s218, %s219
    %p228 = scmp.eq.s32.totalorder %s26, 0
    %p229 = por %p227, %p228
    %p230 = scmp.ne.s32.totalorder %s218, %s219
    %p231 = scmp.eq.s32.totalorder %s27, 3
    %p232 = por %p230, %p231
    %p234 = scmp.ne.s32.totalorder %s219, %s233
    %p235 = scmp.eq.s32.totalorder %s27, 0
    %p236 = por %p234, %p235
    %s238 = sadd.s32 %s237, 1
    %p241 = scmp.eq.s32.totalorder %s21, 3
    %p242 = scmp.ne.s32.totalorder %s237, %s239
    %p243 = scmp.eq.s32.totalorder %s21, 0
    %p244 = por %p242, %p243
    %p245 = scmp.ne.s32.totalorder %s237, %s239
    %p246 = scmp.eq.s32.totalorder %s26, 3
    %p247 = por %p245, %p246
    %p248 = scmp.ne.s32.totalorder %s239, %s240
    %p249 = scmp.eq.s32.totalorder %s26, 0
    %p250 = por %p248, %p249
    %p251 = scmp.ne.s32.totalorder %s239, %s240
    %p252 = scmp.eq.s32.totalorder %s27, 3
    %p253 = por %p251, %p252
    %p255 = scmp.ne.s32.totalorder %s240, %s254
    %p256 = scmp.eq.s32.totalorder %s27, 0
    %p257 = por %p255, %p256
    %s259 = sadd.s32 %s258, 1
    %p262 = scmp.eq.s32.totalorder %s21, 3
    %p263 = scmp.ne.s32.totalorder %s258, %s260
    %p264 = scmp.eq.s32.totalorder %s21, 0
    %p265 = por %p263, %p264
    %p266 = scmp.ne.s32.totalorder %s258, %s260
    %p267 = scmp.eq.s32.totalorder %s26, 3
    %p268 = por %p266, %p267
    %p269 = scmp.ne.s32.totalorder %s260, %s261
    %p270 = scmp.eq.s32.totalorder %s26, 0
    %p271 = por %p269, %p270
    %p272 = scmp.ne.s32.totalorder %s260, %s261
    %p273 = scmp.eq.s32.totalorder %s27, 3
    %p274 = por %p272, %p273
    %p276 = scmp.ne.s32.totalorder %s261, %s275
    %p277 = scmp.eq.s32.totalorder %s27, 0
    %p278 = por %p276, %p277
    %s280 = sadd.s32 %s279, 1
    %p283 = scmp.eq.s32.totalorder %s21, 3
    %p284 = scmp.ne.s32.totalorder %s279, %s281
    %p285 = scmp.eq.s32.totalorder %s21, 0
    %p286 = por %p284, %p285
    %p287 = scmp.ne.s32.totalorder %s279, %s281
    %p288 = scmp.eq.s32.totalorder %s26, 3
    %p289 = por %p287, %p288
    %p290 = scmp.ne.s32.totalorder %s281, %s282
    %p291 = scmp.eq.s32.totalorder %s26, 0
    %p292 = por %p290, %p291
    %p293 = scmp.ne.s32.totalorder %s281, %s282
    %p294 = scmp.eq.s32.totalorder %s27, 3
    %p295 = por %p293, %p294
    %p297 = scmp.ne.s32.totalorder %s282, %s296
    %p298 = scmp.eq.s32.totalorder %s27, 0
    %p299 = por %p297, %p298
    %s301 = sadd.s32 %s300, 1
    %p304 = scmp.eq.s32.totalorder %s21, 3
    %p305 = scmp.ne.s32.totalorder %s300, %s302
    %p306 = scmp.eq.s32.totalorder %s21, 0
    %p307 = por %p305, %p306
    %p308 = scmp.ne.s32.totalorder %s300, %s302
    %p309 = scmp.eq.s32.totalorder %s26, 3
    %p310 = por %p308, %p309
    %p311 = scmp.ne.s32.totalorder %s302, %s303
    %p312 = scmp.eq.s32.totalorder %s26, 0
    %p313 = por %p311, %p312
    %p314 = scmp.ne.s32.totalorder %s302, %s303
    %p315 = scmp.eq.s32.totalorder %s27, 3
    %p316 = por %p314, %p315
    %p318 = scmp.ne.s32.totalorder %s303, %s317
    %p319 = scmp.eq.s32.totalorder %s27, 0
    %p320 = por %p318, %p319
    %s322 = sadd.s32 %s321, 1
    %p325 = scmp.eq.s32.totalorder %s21, 3
    %p326 = scmp.ne.s32.totalorder %s321, %s323
    %p327 = scmp.eq.s32.totalorder %s21, 0
    %p328 = por %p326, %p327
    %p329 = scmp.ne.s32.totalorder %s321, %s323
    %p330 = scmp.eq.s32.totalorder %s26, 3
    %p331 = por %p329, %p330
    %p332 = scmp.ne.s32.totalorder %s323, %s324
    %p333 = scmp.eq.s32.totalorder %s26, 0
    %p334 = por %p332, %p333
    %p335 = scmp.ne.s32.totalorder %s323, %s324
    %p336 = scmp.eq.s32.totalorder %s27, 3
    %p337 = por %p335, %p336
    %p339 = scmp.ne.s32.totalorder %s324, %s338
    %p340 = scmp.eq.s32.totalorder %s27, 0
    %p341 = por %p339, %p340
    %s343 = sadd.s32 %s342, 1
    %p346 = scmp.eq.s32.totalorder %s21, 3
    %p347 = scmp.ne.s32.totalorder %s342, %s344
    %p348 = scmp.eq.s32.totalorder %s21, 0
    %p349 = por %p347, %p348
    %p350 = scmp.ne.s32.totalorder %s342, %s344
    %p351 = scmp.eq.s32.totalorder %s26, 3
    %p352 = por %p350, %p351
    %p353 = scmp.ne.s32.totalorder %s344, %s345
    %p354 = scmp.eq.s32.totalorder %s26, 0
    %p355 = por %p353, %p354
    %p356 = scmp.ne.s32.totalorder %s344, %s345
    %p357 = scmp.eq.s32.totalorder %s27, 3
    %p358 = por %p356, %p357
    %p360 = scmp.ne.s32.totalorder %s345, %s359
    %p361 = scmp.eq.s32.totalorder %s27, 0
    %p362 = por %p360, %p361
    %s363 = ssub.s32 %s28, %s40
    %s364 = ssub.s32 %s29, %s36
    %s365 = sor.u32 %s363, %s364
    %p366 = scmp.eq.s32.totalorder %s365, 0
    %s368 = sadd.s32 %s367, 1
    %s369 = scalar_select %p366, %s367, %s368
    %p372 = pneg %p366
    %p373 = scmp.eq.s32.totalorder %s21, 3
    %p374 = por %p372, %p373
    %p375 = scmp.ne.s32.totalorder %s367, %s370
    %p376 = scmp.eq.s32.totalorder %s21, 0
    %p377 = por %p375, %p376
    %p378 = scmp.ne.s32.totalorder %s367, %s370
    %p379 = scmp.eq.s32.totalorder %s26, 3
    %p380 = por %p378, %p379
    %p381 = scmp.ne.s32.totalorder %s370, %s371
    %p382 = scmp.eq.s32.totalorder %s26, 0
    %p383 = por %p381, %p382
    %p384 = scmp.ne.s32.totalorder %s370, %s371
    %p385 = scmp.eq.s32.totalorder %s27, 3
    %p386 = por %p384, %p385
    %p388 = scmp.ne.s32.totalorder %s371, %s387
    %p389 = scmp.eq.s32.totalorder %s27, 0
    %p390 = por %p388, %p389
    %p391 = scmp.le.s32.totalorder 1, %s21
    %p392 = scmp.lt.s32.totalorder %s21, 5
    %p393 = pnand %p391, %p392
    %p394 = pneg %p393
    // Predicated region
    $region9: #{_lambda_.3} parent=5 // pred_check
      _
    $region10: #{_lambda_.3} parent=5 // pred_check_branch
      %396 = sbr.rel (%p393) target = $region12
    $region11: #{_lambda_.3} parent=5 // pred_region
      %s397 = ssub.s32 %s21, 1
      // Predicated region
      $region13: #{_lambda_.3} parent=11 // pred_check
        %p398 = pneg %p82
      $region14: #{_lambda_.3} parent=11 // pred_check_branch
        %400 = sbr.rel (%p398) target = $region16
      $region15: #{_lambda_.3} parent=11 // pred_region
        _
      $region16: #{_lambda_.3} parent=11 // pred_fallthru
        _
      // Predicated region
      $region17: #{_lambda_.3} parent=11 // pred_check
        %p401 = pneg %p103
      $region18: #{_lambda_.3} parent=11 // pred_check_branch
        %403 = sbr.rel (%p401) target = $region20
      $region19: #{_lambda_.3} parent=11 // pred_region
        _
      $region20: #{_lambda_.3} parent=11 // pred_fallthru
        _
      // Predicated region
      $region21: #{_lambda_.3} parent=11 // pred_check
        %p404 = pneg %p124
      $region22: #{_lambda_.3} parent=11 // pred_check_branch
        %406 = sbr.rel (%p404) target = $region24
      $region23: #{_lambda_.3} parent=11 // pred_region
        _
      $region24: #{_lambda_.3} parent=11 // pred_fallthru
        _
      // Predicated region
      $region25: #{_lambda_.3} parent=11 // pred_check
        %p407 = pneg %p145
      $region26: #{_lambda_.3} parent=11 // pred_check_branch
        %409 = sbr.rel (%p407) target = $region28
      $region27: #{_lambda_.3} parent=11 // pred_region
        _
      $region28: #{_lambda_.3} parent=11 // pred_fallthru
        _
      // Predicated region
      $region29: #{_lambda_.3} parent=11 // pred_check
        %p410 = pneg %p166
      $region30: #{_lambda_.3} parent=11 // pred_check_branch
        %412 = sbr.rel (%p410) target = $region32
      $region31: #{_lambda_.3} parent=11 // pred_region
        _
      $region32: #{_lambda_.3} parent=11 // pred_fallthru
        _
      // Predicated region
      $region33: #{_lambda_.3} parent=11 // pred_check
        %p413 = pneg %p187
      $region34: #{_lambda_.3} parent=11 // pred_check_branch
        %415 = sbr.rel (%p413) target = $region36
      $region35: #{_lambda_.3} parent=11 // pred_region
        _
      $region36: #{_lambda_.3} parent=11 // pred_fallthru
        _
      // Predicated region
      $region37: #{_lambda_.3} parent=11 // pred_check
        %p416 = pneg %p208
      $region38: #{_lambda_.3} parent=11 // pred_check_branch
        %418 = sbr.rel (%p416) target = $region40
      $region39: #{_lambda_.3} parent=11 // pred_region
        _
      $region40: #{_lambda_.3} parent=11 // pred_fallthru
        _
      // Predicated region
      $region41: #{_lambda_.3} parent=11 // pred_check
        %p419 = pneg %p229
      $region42: #{_lambda_.3} parent=11 // pred_check_branch
        %421 = sbr.rel (%p419) target = $region44
      $region43: #{_lambda_.3} parent=11 // pred_region
        _
      $region44: #{_lambda_.3} parent=11 // pred_fallthru
        _
      // Predicated region
      $region45: #{_lambda_.3} parent=11 // pred_check
        %p422 = pneg %p250
      $region46: #{_lambda_.3} parent=11 // pred_check_branch
        %424 = sbr.rel (%p422) target = $region48
      $region47: #{_lambda_.3} parent=11 // pred_region
        _
      $region48: #{_lambda_.3} parent=11 // pred_fallthru
        _
      // Predicated region
      $region49: #{_lambda_.3} parent=11 // pred_check
        %p425 = pneg %p271
      $region50: #{_lambda_.3} parent=11 // pred_check_branch
        %427 = sbr.rel (%p425) target = $region52
      $region51: #{_lambda_.3} parent=11 // pred_region
        _
      $region52: #{_lambda_.3} parent=11 // pred_fallthru
        _
      // Predicated region
      $region53: #{_lambda_.3} parent=11 // pred_check
        %p428 = pneg %p292
      $region54: #{_lambda_.3} parent=11 // pred_check_branch
        %430 = sbr.rel (%p428) target = $region56
      $region55: #{_lambda_.3} parent=11 // pred_region
        _
      $region56: #{_lambda_.3} parent=11 // pred_fallthru
        _
      // Predicated region
      $region57: #{_lambda_.3} parent=11 // pred_check
        %p431 = pneg %p313
      $region58: #{_lambda_.3} parent=11 // pred_check_branch
        %433 = sbr.rel (%p431) target = $region60
      $region59: #{_lambda_.3} parent=11 // pred_region
        _
      $region60: #{_lambda_.3} parent=11 // pred_fallthru
        _
      // Predicated region
      $region61: #{_lambda_.3} parent=11 // pred_check
        %p434 = pneg %p334
      $region62: #{_lambda_.3} parent=11 // pred_check_branch
        %436 = sbr.rel (%p434) target = $region64
      $region63: #{_lambda_.3} parent=11 // pred_region
        _
      $region64: #{_lambda_.3} parent=11 // pred_fallthru
        _
      // Predicated region
      $region65: #{_lambda_.3} parent=11 // pred_check
        %p437 = pneg %p355
      $region66: #{_lambda_.3} parent=11 // pred_check_branch
        %439 = sbr.rel (%p437) target = $region68
      $region67: #{_lambda_.3} parent=11 // pred_region
        _
      $region68: #{_lambda_.3} parent=11 // pred_fallthru
        _
    $region12: #{_lambda_.3} parent=5 // pred_fallthru
      _
    %p440 = scmp.lt.s32.totalorder %s21, 4
    // Predicated region
    $region69: #{_lambda_.3} parent=5 // pred_check
      %p441 = pneg %p440
    $region70: #{_lambda_.3} parent=5 // pred_check_branch
      %443 = sbr.rel (%p441) target = $region72
    $region71: #{_lambda_.3} parent=5 // pred_region
      // Predicated region
      $region73: #{_lambda_.3} parent=71 // pred_check
        %p444 = pneg %p55
      $region74: #{_lambda_.3} parent=71 // pred_check_branch
        %446 = sbr.rel (%p444) target = $region76
      $region75: #{_lambda_.3} parent=71 // pred_region
        %s447 = smul.u32 4, %s29
        %p448 = scmp.lt.s32.totalorder %s28, 1
        %s449 = scalar_select %p448, %s28, 1
        %p450 = scmp.lt.s32.totalorder %s447, 7
        %s451 = scalar_select %p450, %s447, 7
        %s452 = smul.addr %s449, 8
        %s453 = sadd.s32 %s451, %s452
        %s454 = smul.addr %s453, 8
        %s455 = scalar_lea.vmem %s0, %s454
        %s456 = smul.u32 4, %s29
      $region76: #{_lambda_.3} parent=71 // pred_fallthru
        _
    $region72: #{_lambda_.3} parent=5 // pred_fallthru
      _
    %p457 = scmp.le.s32.totalorder 1, %s21
    %p458 = scmp.lt.s32.totalorder %s21, 5
    %p459 = pnand %p457, %p458
    %p460 = pneg %p459
    // Predicated region
    $region77: #{_lambda_.3} parent=5 // pred_check
      _
    $region78: #{_lambda_.3} parent=5 // pred_check_branch
      %462 = sbr.rel (%p459) target = $region80
    $region79: #{_lambda_.3} parent=5 // pred_region
      %s463 = ssub.s32 %s21, 1
      %s464 = smul.u32 4, %s31
      %p465 = scmp.lt.s32.totalorder %s30, 1
      %s466 = scalar_select %p465, %s30, 1
      %p467 = scmp.lt.s32.totalorder %s464, 7
      %s468 = scalar_select %p467, %s464, 7
      %s469 = smul.addr %s466, 8
      %s470 = sadd.s32 %s468, %s469
      %s471 = smul.addr %s470, 8
      %s472 = scalar_lea.vmem %s0, %s471
      %p473 = pneg %p61
      %p474 = pneg %p58
      %p475 = pneg %p82
      %p476 = pneg %p79
      %p477 = pneg %p103
      %p478 = pneg %p100
      %p479 = pneg %p124
      %p480 = pneg %p121
      %p481 = pneg %p145
      %p482 = pneg %p142
      %p483 = pneg %p166
      %p484 = pneg %p163
      %p485 = pneg %p187
      %p486 = pneg %p184
      %p487 = pneg %p208
      %p488 = pneg %p205
      %p489 = pneg %p229
      %p490 = pneg %p226
      %p491 = pneg %p250
      %p492 = pneg %p247
      %p493 = pneg %p271
      %p494 = pneg %p268
      %p495 = pneg %p292
      %p496 = pneg %p289
      %p497 = pneg %p313
      %p498 = pneg %p310
      %p499 = pneg %p334
      %p500 = pneg %p331
      %p501 = pneg %p355
      %p502 = pneg %p352
      %p503 = pneg %p383
      %p504 = pneg %p380
      %s505 = smul.u32 4, %s31
      %p506 = scmp.lt.s32.totalorder %s30, 1
      %s507 = scalar_select %p506, %s30, 1
      %p508 = scmp.lt.s32.totalorder %s505, 7
      %s509 = scalar_select %p508, %s505, 7
      %s510 = smul.addr %s507, 8
      %s511 = sadd.s32 %s509, %s510
      %s512 = smul.addr %s511, 8
      %s513 = scalar_lea.vmem %s15, %s512
      %s514 = smul.u32 4, %s31
      %p515 = scmp.lt.s32.totalorder %s30, 1
      %s516 = scalar_select %p515, %s30, 1
      %p517 = scmp.lt.s32.totalorder %s514, 7
      %s518 = scalar_select %p517, %s514, 7
      %s519 = smul.addr %s516, 8
      %s520 = sadd.s32 %s518, %s519
      %s521 = smul.addr %s520, 8
      %s522 = scalar_lea.vmem %s0, %s521
      %s523 = smul.u32 4, %s31
      %s524 = smul.u32 4, %s31
      %p525 = scmp.lt.s32.totalorder %s30, 1
      %s526 = scalar_select %p525, %s30, 1
      %p527 = scmp.lt.s32.totalorder %s524, 7
      %s528 = scalar_select %p527, %s524, 7
      %s529 = smul.addr %s526, 8
      %s530 = sadd.s32 %s528, %s529
      %s531 = smul.addr %s530, 8
      %s532 = scalar_lea.vmem %s15, %s531
      %s533 = smul.u32 4, %s31
      %v535 = vld [vmem:[%s522] sm:$0xff]
      %v536 = vld [vmem:[%s522 + $0x8] sm:$0xff]
      %v537 = vld [vmem:[%s522 + $0x10] sm:$0xff]
      %v538 = vld [vmem:[%s522 + $0x18] sm:$0xff]
      %v543 = vrot.slane %v535, 4
      %v544 = vrot.slane %v536, 4
      %v545 = vrot.slane %v537, 4
      %v546 = vrot.slane %v538, 4
      %551 = vst [vmem:[#allocation1] ss:$2 sm:$0xff] %v535
      %s552 = scalar_lea.vmem [#allocation1], 1
      %553 = vst [vmem:[%s552] ss:$2 sm:$0xff] %v536
      %s554 = scalar_lea.vmem [#allocation1], 16
      %555 = vst [vmem:[%s554] ss:$2 sm:$0xff] %v537
      %s556 = scalar_lea.vmem [#allocation1], 17
      %557 = vst [vmem:[%s556] ss:$2 sm:$0xff] %v538
      %s558 = scalar_lea.vmem [#allocation1], 32
      %559 = vst [vmem:[%s558] ss:$2 sm:$0xff] %v543
      %s560 = scalar_lea.vmem [#allocation1], 33
      %561 = vst [vmem:[%s560] ss:$2 sm:$0xff] %v544
      %s562 = scalar_lea.vmem [#allocation1], 48
      %563 = vst [vmem:[%s562] ss:$2 sm:$0xff] %v545
      %s564 = scalar_lea.vmem [#allocation1], 49
      %565 = vst [vmem:[%s564] ss:$2 sm:$0xff] %v546
      %v566 = vld.sshfl [vmem:[#allocation1] sm:$0xff pattern:$0x75316420]
      %v567 = vld.sshfl [vmem:[#allocation1 + $0x10] sm:$0xff pattern:$0x75316420]
      %v568 = vld.sshfl [vmem:[#allocation1 + $0x20] sm:$0xff pattern:$0x75316420]
      %v569 = vld.sshfl [vmem:[#allocation1 + $0x30] sm:$0xff pattern:$0x75316420]
      %vm574 = vcmask 261120
      %v575 = vsel %vm574, %v566, 0.0
      %576 = vadd.xlane.f32.xlu0 %v575
      %v577 = vpop.xlane.xlu0 %576
      %v578 = vsel %vm574, %v567, 0.0
      %579 = vadd.xlane.f32.xlu0 %v578
      %v580 = vpop.xlane.xlu0 %579
      %v581 = vsel %vm574, %v568, 0.0
      %582 = vadd.xlane.f32.xlu0 %v581
      %v583 = vpop.xlane.xlu0 %582
      %v584 = vsel %vm574, %v569, 0.0
      %585 = vadd.xlane.f32.xlu0 %v584
      %v586 = vpop.xlane.xlu0 %585
      %v587 = vrcp.pop 32.0
      %v588 = vmul.f32 32.0, %v587
      %v589 = vsub.f32 1.0, %v588
      %v590 = vmul.f32 %v587, %v589
      %v591 = vadd.f32 %v587, %v590
      %vm592 = vweird.f32 %v587
      %v593 = vsel %vm592, %v587, %v591
      %v594 = vmul.f32 %v577, %v593
      %v595 = vmul.f32 %v580, %v593
      %v596 = vmul.f32 %v583, %v593
      %v597 = vmul.f32 %v586, %v593
      %v603 = vunpack.c.l.s4 839922192
      %v604 = vunpack.c.0.s8 %v603
      %v605 = vperm.slane %v594, %v604
      %v607 = vunpack.c.l.s4 1985246804
      %v608 = vunpack.c.0.s8 %v607
      %v609 = vperm.slane %v594, %v608
      %v611 = vunpack.c.l.s4 839922192
      %v612 = vunpack.c.0.s8 %v611
      %v613 = vperm.slane %v595, %v612
      %v615 = vunpack.c.l.s4 1985246804
      %v616 = vunpack.c.0.s8 %v615
      %v617 = vperm.slane %v595, %v616
      %v619 = vunpack.c.l.s4 839922192
      %v620 = vunpack.c.0.s8 %v619
      %v621 = vperm.slane %v596, %v620
      %v623 = vunpack.c.l.s4 1985246804
      %v624 = vunpack.c.0.s8 %v623
      %v625 = vperm.slane %v596, %v624
      %v627 = vunpack.c.l.s4 839922192
      %v628 = vunpack.c.0.s8 %v627
      %v629 = vperm.slane %v597, %v628
      %v631 = vunpack.c.l.s4 1985246804
      %v632 = vunpack.c.0.s8 %v631
      %v633 = vperm.slane %v597, %v632
      %v642 = vsub.f32 %v535, %v605
      %v643 = vsub.f32 %v536, %v609
      %v644 = vsub.f32 %v537, %v613
      %v645 = vsub.f32 %v538, %v617
      %v646 = vsub.f32 %v543, %v621
      %v647 = vsub.f32 %v544, %v625
      %v648 = vsub.f32 %v545, %v629
      %v649 = vsub.f32 %v546, %v633
      %v650 = vmul.f32 %v642, %v642
      %v651 = vmul.f32 %v643, %v643
      %v652 = vmul.f32 %v644, %v644
      %v653 = vmul.f32 %v645, %v645
      %v654 = vmul.f32 %v646, %v646
      %v655 = vmul.f32 %v647, %v647
      %v656 = vmul.f32 %v648, %v648
      %v657 = vmul.f32 %v649, %v649
      %666 = vst [vmem:[#allocation1] ss:$2 sm:$0xff] %v650
      %s667 = scalar_lea.vmem [#allocation1], 1
      %668 = vst [vmem:[%s667] ss:$2 sm:$0xff] %v651
      %s669 = scalar_lea.vmem [#allocation1], 16
      %670 = vst [vmem:[%s669] ss:$2 sm:$0xff] %v652
      %s671 = scalar_lea.vmem [#allocation1], 17
      %672 = vst [vmem:[%s671] ss:$2 sm:$0xff] %v653
      %s673 = scalar_lea.vmem [#allocation1], 32
      %674 = vst [vmem:[%s673] ss:$2 sm:$0xff] %v654
      %s675 = scalar_lea.vmem [#allocation1], 33
      %676 = vst [vmem:[%s675] ss:$2 sm:$0xff] %v655
      %s677 = scalar_lea.vmem [#allocation1], 48
      %678 = vst [vmem:[%s677] ss:$2 sm:$0xff] %v656
      %s679 = scalar_lea.vmem [#allocation1], 49
      %680 = vst [vmem:[%s679] ss:$2 sm:$0xff] %v657
      %v681 = vld.sshfl [vmem:[#allocation1] sm:$0xff pattern:$0x75316420]
      %v682 = vld.sshfl [vmem:[#allocation1 + $0x10] sm:$0xff pattern:$0x75316420]
      %v683 = vld.sshfl [vmem:[#allocation1 + $0x20] sm:$0xff pattern:$0x75316420]
      %v684 = vld.sshfl [vmem:[#allocation1 + $0x30] sm:$0xff pattern:$0x75316420]
      %v689 = vsel %vm574, %v681, 0.0
      %690 = vadd.xlane.f32.xlu0 %v689
      %v691 = vpop.xlane.xlu0 %690
      %v692 = vsel %vm574, %v682, 0.0
      %693 = vadd.xlane.f32.xlu0 %v692
      %v694 = vpop.xlane.xlu0 %693
      %v695 = vsel %vm574, %v683, 0.0
      %696 = vadd.xlane.f32.xlu0 %v695
      %v697 = vpop.xlane.xlu0 %696
      %v698 = vsel %vm574, %v684, 0.0
      %699 = vadd.xlane.f32.xlu0 %v698
      %v700 = vpop.xlane.xlu0 %699
      %v701 = vmul.f32 %v691, %v593
      %v702 = vmul.f32 %v694, %v593
      %v703 = vmul.f32 %v697, %v593
      %v704 = vmul.f32 %v700, %v593
      %v705 = vadd.f32 %v701, 1e-05
      %v706 = vadd.f32 %v702, 1e-05
      %v707 = vadd.f32 %v703, 1e-05
      %v708 = vadd.f32 %v704, 1e-05
      %v709 = vrsqrt.pop %v705
      %v710 = vmul.f32 %v709, %v705
      %v711 = vmul.f32 %v710, %v709
      %v712 = vmul.f32 0.5, %v711
      %v713 = vsub.f32 1.5, %v712
      %v714 = vmul.f32 %v709, %v713
      %vm715 = vweird.f32 %v705
      %vm716 = vweird.f32 %v709
      %vm717 = vmor %vm715, %vm716
      %v718 = vsel %vm717, %v709, %v714
      %v719 = vrsqrt.pop %v706
      %v720 = vmul.f32 %v719, %v706
      %v721 = vmul.f32 %v720, %v719
      %v722 = vmul.f32 0.5, %v721
      %v723 = vsub.f32 1.5, %v722
      %v724 = vmul.f32 %v719, %v723
      %vm725 = vweird.f32 %v706
      %vm726 = vweird.f32 %v719
      %vm727 = vmor %vm725, %vm726
      %v728 = vsel %vm727, %v719, %v724
      %v729 = vrsqrt.pop %v707
      %v730 = vmul.f32 %v729, %v707
      %v731 = vmul.f32 %v730, %v729
      %v732 = vmul.f32 0.5, %v731
      %v733 = vsub.f32 1.5, %v732
      %v734 = vmul.f32 %v729, %v733
      %vm735 = vweird.f32 %v707
      %vm736 = vweird.f32 %v729
      %vm737 = vmor %vm735, %vm736
      %v738 = vsel %vm737, %v729, %v734
      %v739 = vrsqrt.pop %v708
      %v740 = vmul.f32 %v739, %v708
      %v741 = vmul.f32 %v740, %v739
      %v742 = vmul.f32 0.5, %v741
      %v743 = vsub.f32 1.5, %v742
      %v744 = vmul.f32 %v739, %v743
      %vm745 = vweird.f32 %v708
      %vm746 = vweird.f32 %v739
      %vm747 = vmor %vm745, %vm746
      %v748 = vsel %vm747, %v739, %v744
      %v754 = vunpack.c.l.s4 839922192
      %v755 = vunpack.c.0.s8 %v754
      %v756 = vperm.slane %v718, %v755
      %v758 = vunpack.c.l.s4 1985246804
      %v759 = vunpack.c.0.s8 %v758
      %v760 = vperm.slane %v718, %v759
      %v762 = vunpack.c.l.s4 839922192
      %v763 = vunpack.c.0.s8 %v762
      %v764 = vperm.slane %v728, %v763
      %v766 = vunpack.c.l.s4 1985246804
      %v767 = vunpack.c.0.s8 %v766
      %v768 = vperm.slane %v728, %v767
      %v770 = vunpack.c.l.s4 839922192
      %v771 = vunpack.c.0.s8 %v770
      %v772 = vperm.slane %v738, %v771
      %v774 = vunpack.c.l.s4 1985246804
      %v775 = vunpack.c.0.s8 %v774
      %v776 = vperm.slane %v738, %v775
      %v778 = vunpack.c.l.s4 839922192
      %v779 = vunpack.c.0.s8 %v778
      %v780 = vperm.slane %v748, %v779
      %v782 = vunpack.c.l.s4 1985246804
      %v783 = vunpack.c.0.s8 %v782
      %v784 = vperm.slane %v748, %v783
      %v793 = vmul.f32 %v642, %v756
      %v794 = vmul.f32 %v643, %v760
      %v795 = vmul.f32 %v644, %v764
      %v796 = vmul.f32 %v645, %v768
      %v797 = vmul.f32 %v646, %v772
      %v798 = vmul.f32 %v647, %v776
      %v799 = vmul.f32 %v648, %v780
      %v800 = vmul.f32 %v649, %v784
      %v801 = vld [vmem:[%s1] sm:$0x1]
      %v803 = vperm.slane %v801, 0
      %v805 = vrot.slane %v803, 4
      %v807 = vmul.f32 %v793, %v803
      %v808 = vmul.f32 %v794, %v805
      %v809 = vmul.f32 %v795, %v803
      %v810 = vmul.f32 %v796, %v805
      %v811 = vmul.f32 %v797, %v803
      %v812 = vmul.f32 %v798, %v805
      %v813 = vmul.f32 %v799, %v803
      %v814 = vmul.f32 %v800, %v805
      %v815 = vld [vmem:[%s2] sm:$0x1]
      %v817 = vperm.slane %v815, 0
      %v819 = vrot.slane %v817, 4
      %v821 = vadd.f32 %v807, %v817
      %v822 = vadd.f32 %v808, %v819
      %v823 = vadd.f32 %v809, %v817
      %v824 = vadd.f32 %v810, %v819
      %v825 = vadd.f32 %v811, %v817
      %v826 = vadd.f32 %v812, %v819
      %v827 = vadd.f32 %v813, %v817
      %v828 = vadd.f32 %v814, %v819
      %837 = vst [vmem:[#allocation1] ss:$2 sm:$0xff] %v821
      %s838 = scalar_lea.vmem [#allocation1], 1
      %839 = vst [vmem:[%s838] ss:$2 sm:$0xff] %v822
      %s840 = scalar_lea.vmem [#allocation1], 16
      %841 = vst [vmem:[%s840] ss:$2 sm:$0xff] %v823
      %s842 = scalar_lea.vmem [#allocation1], 17
      %843 = vst [vmem:[%s842] ss:$2 sm:$0xff] %v824
      %s844 = scalar_lea.vmem [#allocation1], 32
      %845 = vst [vmem:[%s844] ss:$2 sm:$0xff] %v825
      %s846 = scalar_lea.vmem [#allocation1], 33
      %847 = vst [vmem:[%s846] ss:$2 sm:$0xff] %v826
      %s848 = scalar_lea.vmem [#allocation1], 48
      %849 = vst [vmem:[%s848] ss:$2 sm:$0xff] %v827
      %s850 = scalar_lea.vmem [#allocation1], 49
      %851 = vst [vmem:[%s850] ss:$2 sm:$0xff] %v828
      %v852 = vld.sshfl [vmem:[#allocation1] sm:$0xff pattern:$0x75316420]
      %v853 = vld.sshfl [vmem:[#allocation1 + $0x10] sm:$0xff pattern:$0x75316420]
      %v854 = vld.sshfl [vmem:[#allocation1 + $0x20] sm:$0xff pattern:$0x75316420]
      %v855 = vld.sshfl [vmem:[#allocation1 + $0x30] sm:$0xff pattern:$0x75316420]
      %v860 = vpack.c.bf16 %v853, %v852
      %v861 = vpack.c.bf16 %v855, %v854
      %v862 = vld [vmem:[%s3] sm:$0xf]
      %v863 = vld [vmem:[%s3 + $0x4] sm:$0xf]
      %v864 = vld [vmem:[%s3 + $0x8] sm:$0xf]
      %v865 = vld [vmem:[%s3 + $0xc] sm:$0xf]
      %v866 = vld [vmem:[%s4] sm:$0x1]
      %v868 = vperm.slane %v866, 0
      %v874 = vunpack.c.l.b16 %v862
      %v875 = vunpack.c.l.b16 %v863
      %v876 = vunpack.c.l.b16 %v864
      %v877 = vunpack.c.l.b16 %v865
      %v878 = vpack.c.b16 %v875, %v874
      %v879 = vpack.c.b16 %v877, %v876
      %v883 = vsel %vm574, %v860, 0
      %v886 = vsel %vm574, %v861, 0
      %888 = vmatpush.bf16.msra.mxu0 0
      %889 = vmatpush.bf16.msra.mxu0 0
      %890 = vmatpush.bf16.msra.mxu0 0
      %891 = vmatpush.bf16.msra.mxu0 0
      %892 = vmatpush.bf16.msra.mxu0 0
      %893 = vmatpush.bf16.msra.mxu0 0
      %894 = vmatpush.bf16.msra.mxu0 %v879
      %895 = vmatpush.bf16.msra.mxu0 %v878
      %896 = vmatmul.bf16.gmra.mxu0 %v883
      %v897 = vpop.f32.mrf.mxu0
      %v898 = vadd.f32 %v868, %v897
      %v899 = vpop.f32.mrf.mxu0
      %v900 = vadd.f32 %v868, %v899
      %901 = vmatmul.bf16.gmra.mxu0 %v886
      %v902 = vpop.f32.mrf.mxu0
      %v903 = vadd.f32 %v868, %v902
      %v904 = vpop.f32.mrf.mxu0
      %v905 = vadd.f32 %v868, %v904
      %906 = vdwg.mxu0
      %911 = vrot.lane.b32.xlu0 %v898, 120
      %v912 = vpop.permute.xlu0 %911
      %913 = vrot.lane.b32.xlu0 %v900, 120
      %v914 = vpop.permute.xlu0 %913
      %915 = vrot.lane.b32.xlu0 %v903, 120
      %v916 = vpop.permute.xlu0 %915
      %917 = vrot.lane.b32.xlu0 %v905, 120
      %v918 = vpop.permute.xlu0 %917
      %923 = vrot.lane.b32.xlu0 %v898, 112
      %v924 = vpop.permute.xlu0 %923
      %925 = vrot.lane.b32.xlu0 %v900, 112
      %v926 = vpop.permute.xlu0 %925
      %927 = vrot.lane.b32.xlu0 %v903, 112
      %v928 = vpop.permute.xlu0 %927
      %929 = vrot.lane.b32.xlu0 %v905, 112
      %v930 = vpop.permute.xlu0 %929
      %935 = vrot.lane.b32.xlu0 %v898, 104
      %v936 = vpop.permute.xlu0 %935
      %937 = vrot.lane.b32.xlu0 %v900, 104
      %v938 = vpop.permute.xlu0 %937
      %939 = vrot.lane.b32.xlu0 %v903, 104
      %v940 = vpop.permute.xlu0 %939
      %941 = vrot.lane.b32.xlu0 %v905, 104
      %v942 = vpop.permute.xlu0 %941
      %v947 = vpack.c.bf16 %v898, %v898
      %v948 = vpack.c.bf16 %v900, %v900
      %v949 = vpack.c.bf16 %v903, %v903
      %v950 = vpack.c.bf16 %v905, %v905
      %v951 = vpack.c.bf16 %v912, %v912
      %v952 = vpack.c.bf16 %v914, %v914
      %v953 = vpack.c.bf16 %v916, %v916
      %v954 = vpack.c.bf16 %v918, %v918
      %v955 = vpack.c.bf16 %v924, %v924
      %v956 = vpack.c.bf16 %v926, %v926
      %v957 = vpack.c.bf16 %v928, %v928
      %v958 = vpack.c.bf16 %v930, %v930
      %v959 = vpack.c.bf16 %v936, %v936
      %v960 = vpack.c.bf16 %v938, %v938
      %v961 = vpack.c.bf16 %v940, %v940
      %v962 = vpack.c.bf16 %v942, %v942
      %v965 = vunpack.c.l.b16 %v947
      %v966 = vunpack.c.l.b16 %v948
      %v967 = vpack.c.b16 %v966, %v965
      %968 = vrot.lane.b32.xlu0 %v967, 96
      %v969 = vpop.permute.xlu0 %968
      %vm970 = vcmask 64512
      %v972 = vsel %vm970, %v967, 0
      %v975 = vsel %vm970, %v969, 0
      %977 = vmatpush.bf16.xpose.msra.mxu0 0
      %978 = vmatpush.bf16.xpose.msra.mxu0 0
      %979 = vmatpush.bf16.xpose.msra.mxu0 0
      %980 = vmatpush.bf16.xpose.msra.mxu0 0
      %981 = vmatpush.bf16.xpose.msra.mxu0 0
      %982 = vmatpush.bf16.xpose.msra.mxu0 0
      %983 = vmatpush.bf16.xpose.msra.mxu0 0
      %984 = vmatpush.bf16.xpose.msra.mxu0 %v975
      %985 = vmatmul.bf16.gmra.mxu0 %v972
      %v986 = vpop.f32.mrf.mxu0
      %v987 = vadd.f32 0.0, %v986
      %v988 = vpop.f32.mrf.mxu0
      %v989 = vadd.f32 0.0, %v988
      %990 = vdwg.mxu0
      %v993 = vunpack.c.l.b16 %v949
      %v994 = vunpack.c.l.b16 %v950
      %v995 = vpack.c.b16 %v994, %v993
      %996 = vrot.lane.b32.xlu0 %v995, 96
      %v997 = vpop.permute.xlu0 %996
      %v999 = vsel %vm970, %v995, 0
      %v1002 = vsel %vm970, %v997, 0
      %1004 = vmatpush.bf16.xpose.msra.mxu0 0
      %1005 = vmatpush.bf16.xpose.msra.mxu0 0
      %1006 = vmatpush.bf16.xpose.msra.mxu0 0
      %1007 = vmatpush.bf16.xpose.msra.mxu0 0
      %1008 = vmatpush.bf16.xpose.msra.mxu0 0
      %1009 = vmatpush.bf16.xpose.msra.mxu0 0
      %1010 = vmatpush.bf16.xpose.msra.mxu0 0
      %1011 = vmatpush.bf16.xpose.msra.mxu0 %v1002
      %1012 = vmatmul.bf16.gmra.mxu0 %v999
      %v1013 = vpop.f32.mrf.mxu0
      %v1014 = vadd.f32 0.0, %v1013
      %v1015 = vpop.f32.mrf.mxu0
      %v1016 = vadd.f32 0.0, %v1015
      %1017 = vdwg.mxu0
      %v1020 = vunpack.c.l.b16 %v951
      %v1021 = vunpack.c.l.b16 %v952
      %v1022 = vpack.c.b16 %v1021, %v1020
      %1023 = vrot.lane.b32.xlu0 %v1022, 96
      %v1024 = vpop.permute.xlu0 %1023
      %v1026 = vsel %vm970, %v1022, 0
      %v1029 = vsel %vm970, %v1024, 0
      %1031 = vmatpush.bf16.xpose.msra.mxu0 0
      %1032 = vmatpush.bf16.xpose.msra.mxu0 0
      %1033 = vmatpush.bf16.xpose.msra.mxu0 0
      %1034 = vmatpush.bf16.xpose.msra.mxu0 0
      %1035 = vmatpush.bf16.xpose.msra.mxu0 0
      %1036 = vmatpush.bf16.xpose.msra.mxu0 0
      %1037 = vmatpush.bf16.xpose.msra.mxu0 0
      %1038 = vmatpush.bf16.xpose.msra.mxu0 %v1029
      %1039 = vmatmul.bf16.gmra.mxu0 %v1026
      %v1040 = vpop.f32.mrf.mxu0
      %v1041 = vadd.f32 0.0, %v1040
      %v1042 = vpop.f32.mrf.mxu0
      %v1043 = vadd.f32 0.0, %v1042
      %1044 = vdwg.mxu0
      %v1047 = vunpack.c.l.b16 %v953
      %v1048 = vunpack.c.l.b16 %v954
      %v1049 = vpack.c.b16 %v1048, %v1047
      %1050 = vrot.lane.b32.xlu0 %v1049, 96
      %v1051 = vpop.permute.xlu0 %1050
      %v1053 = vsel %vm970, %v1049, 0
      %v1056 = vsel %vm970, %v1051, 0
      %1058 = vmatpush.bf16.xpose.msra.mxu0 0
      %1059 = vmatpush.bf16.xpose.msra.mxu0 0
      %1060 = vmatpush.bf16.xpose.msra.mxu0 0
      %1061 = vmatpush.bf16.xpose.msra.mxu0 0
      %1062 = vmatpush.bf16.xpose.msra.mxu0 0
      %1063 = vmatpush.bf16.xpose.msra.mxu0 0
      %1064 = vmatpush.bf16.xpose.msra.mxu0 0
      %1065 = vmatpush.bf16.xpose.msra.mxu0 %v1056
      %1066 = vmatmul.bf16.gmra.mxu0 %v1053
      %v1067 = vpop.f32.mrf.mxu0
      %v1068 = vadd.f32 0.0, %v1067
      %v1069 = vpop.f32.mrf.mxu0
      %v1070 = vadd.f32 0.0, %v1069
      %1071 = vdwg.mxu0
      %v1074 = vunpack.c.l.b16 %v955
      %v1075 = vunpack.c.l.b16 %v956
      %v1076 = vpack.c.b16 %v1075, %v1074
      %1077 = vrot.lane.b32.xlu0 %v1076, 96
      %v1078 = vpop.permute.xlu0 %1077
      %v1080 = vsel %vm970, %v1076, 0
      %v1083 = vsel %vm970, %v1078, 0
      %1085 = vmatpush.bf16.xpose.msra.mxu0 0
      %1086 = vmatpush.bf16.xpose.msra.mxu0 0
      %1087 = vmatpush.bf16.xpose.msra.mxu0 0
      %1088 = vmatpush.bf16.xpose.msra.mxu0 0
      %1089 = vmatpush.bf16.xpose.msra.mxu0 0
      %1090 = vmatpush.bf16.xpose.msra.mxu0 0
      %1091 = vmatpush.bf16.xpose.msra.mxu0 0
      %1092 = vmatpush.bf16.xpose.msra.mxu0 %v1083
      %1093 = vmatmul.bf16.gmra.mxu0 %v1080
      %v1094 = vpop.f32.mrf.mxu0
      %v1095 = vadd.f32 0.0, %v1094
      %v1096 = vpop.f32.mrf.mxu0
      %v1097 = vadd.f32 0.0, %v1096
      %1098 = vdwg.mxu0
      %v1101 = vunpack.c.l.b16 %v957
      %v1102 = vunpack.c.l.b16 %v958
      %v1103 = vpack.c.b16 %v1102, %v1101
      %1104 = vrot.lane.b32.xlu0 %v1103, 96
      %v1105 = vpop.permute.xlu0 %1104
      %v1107 = vsel %vm970, %v1103, 0
      %v1110 = vsel %vm970, %v1105, 0
      %1112 = vmatpush.bf16.xpose.msra.mxu0 0
      %1113 = vmatpush.bf16.xpose.msra.mxu0 0
      %1114 = vmatpush.bf16.xpose.msra.mxu0 0
      %1115 = vmatpush.bf16.xpose.msra.mxu0 0
      %1116 = vmatpush.bf16.xpose.msra.mxu0 0
      %1117 = vmatpush.bf16.xpose.msra.mxu0 0
      %1118 = vmatpush.bf16.xpose.msra.mxu0 0
      %1119 = vmatpush.bf16.xpose.msra.mxu0 %v1110
      %1120 = vmatmul.bf16.gmra.mxu0 %v1107
      %v1121 = vpop.f32.mrf.mxu0
      %v1122 = vadd.f32 0.0, %v1121
      %v1123 = vpop.f32.mrf.mxu0
      %v1124 = vadd.f32 0.0, %v1123
      %1125 = vdwg.mxu0
      %v1128 = vunpack.c.l.b16 %v959
      %v1129 = vunpack.c.l.b16 %v960
      %v1130 = vpack.c.b16 %v1129, %v1128
      %1131 = vrot.lane.b32.xlu0 %v1130, 96
      %v1132 = vpop.permute.xlu0 %1131
      %v1134 = vsel %vm970, %v1130, 0
      %v1137 = vsel %vm970, %v1132, 0
      %1139 = vmatpush.bf16.xpose.msra.mxu0 0
      %1140 = vmatpush.bf16.xpose.msra.mxu0 0
      %1141 = vmatpush.bf16.xpose.msra.mxu0 0
      %1142 = vmatpush.bf16.xpose.msra.mxu0 0
      %1143 = vmatpush.bf16.xpose.msra.mxu0 0
      %1144 = vmatpush.bf16.xpose.msra.mxu0 0
      %1145 = vmatpush.bf16.xpose.msra.mxu0 0
      %1146 = vmatpush.bf16.xpose.msra.mxu0 %v1137
      %1147 = vmatmul.bf16.gmra.mxu0 %v1134
      %v1148 = vpop.f32.mrf.mxu0
      %v1149 = vadd.f32 0.0, %v1148
      %v1150 = vpop.f32.mrf.mxu0
      %v1151 = vadd.f32 0.0, %v1150
      %1152 = vdwg.mxu0
      %v1155 = vunpack.c.l.b16 %v961
      %v1156 = vunpack.c.l.b16 %v962
      %v1157 = vpack.c.b16 %v1156, %v1155
      %1158 = vrot.lane.b32.xlu0 %v1157, 96
      %v1159 = vpop.permute.xlu0 %1158
      %v1161 = vsel %vm970, %v1157, 0
      %v1164 = vsel %vm970, %v1159, 0
      %1166 = vmatpush.bf16.xpose.msra.mxu0 0
      %1167 = vmatpush.bf16.xpose.msra.mxu0 0
      %1168 = vmatpush.bf16.xpose.msra.mxu0 0
      %1169 = vmatpush.bf16.xpose.msra.mxu0 0
      %1170 = vmatpush.bf16.xpose.msra.mxu0 0
      %1171 = vmatpush.bf16.xpose.msra.mxu0 0
      %1172 = vmatpush.bf16.xpose.msra.mxu0 0
      %1173 = vmatpush.bf16.xpose.msra.mxu0 %v1164
      %1174 = vmatmul.bf16.gmra.mxu0 %v1161
      %v1175 = vpop.f32.mrf.mxu0
      %v1176 = vadd.f32 0.0, %v1175
      %v1177 = vpop.f32.mrf.mxu0
      %v1178 = vadd.f32 0.0, %v1177
      %1179 = vdwg.mxu0
      %v1180 = vld [vmem:[%s7] sm:$0xff]
      %v1181 = vld [vmem:[%s7 + $0x8] sm:$0xff]
      %v1182 = vld [vmem:[%s7 + $0x10] sm:$0xff]
      %v1183 = vld [vmem:[%s7 + $0x18] sm:$0xff]
      %v1184 = vld [vmem:[%s7 + $0x20] sm:$0xff]
      %v1185 = vld [vmem:[%s7 + $0x28] sm:$0xff]
      %v1186 = vld [vmem:[%s7 + $0x30] sm:$0xff]
      %v1187 = vld [vmem:[%s7 + $0x38] sm:$0xff]
      %v1188 = vadd.f32 %v987, %v1180
      %v1189 = vadd.f32 %v989, %v1181
      %v1190 = vadd.f32 %v1014, %v1180
      %v1191 = vadd.f32 %v1016, %v1181
      %v1192 = vadd.f32 %v1041, %v1182
      %v1193 = vadd.f32 %v1043, %v1183
      %v1194 = vadd.f32 %v1068, %v1182
      %v1195 = vadd.f32 %v1070, %v1183
      %v1196 = vadd.f32 %v1095, %v1184
      %v1197 = vadd.f32 %v1097, %v1185
      %v1198 = vadd.f32 %v1122, %v1184
      %v1199 = vadd.f32 %v1124, %v1185
      %v1200 = vadd.f32 %v1149, %v1186
      %v1201 = vadd.f32 %v1151, %v1187
      %v1202 = vadd.f32 %v1176, %v1186
      %v1203 = vadd.f32 %v1178, %v1187
      %s1204 = smul.u32 %s31, 2
      %s1205 = smul.u32 %s1204, 16
      %s1206 = scalar_lea.vmem %s14, %s1205
      %v1207 = vld [vmem:[%s1206] sm:$0xff]
      %v1208 = vld [vmem:[%s1206 + $0x8] sm:$0xff]
      %v1209 = vld [vmem:[%s1206 + $0x10] sm:$0xff]
      %v1210 = vld [vmem:[%s1206 + $0x18] sm:$0xff]
      %v1211 = vadd.f32 %v1188, %v1207
      %v1212 = vadd.f32 %v1189, %v1208
      %v1213 = vadd.f32 %v1190, %v1209
      %v1214 = vadd.f32 %v1191, %v1210
      %v1215 = vadd.f32 %v1192, %v1207
      %v1216 = vadd.f32 %v1193, %v1208
      %v1217 = vadd.f32 %v1194, %v1209
      %v1218 = vadd.f32 %v1195, %v1210
      %v1219 = vadd.f32 %v1196, %v1207
      %v1220 = vadd.f32 %v1197, %v1208
      %v1221 = vadd.f32 %v1198, %v1209
      %v1222 = vadd.f32 %v1199, %v1210
      %v1223 = vadd.f32 %v1200, %v1207
      %v1224 = vadd.f32 %v1201, %v1208
      %v1225 = vadd.f32 %v1202, %v1209
      %v1226 = vadd.f32 %v1203, %v1210
      %vm1227 = vcmask 130048
      %v1228 = vsel %vm1227, %v1211, -inf
      %1229 = vmax.xlane.f32.xlu0 %v1228
      %v1230 = vpop.xlane.xlu0 %1229
      %v1231 = vsel %vm1227, %v1212, -inf
      %1232 = vmax.xlane.f32.xlu0 %v1231
      %v1233 = vpop.xlane.xlu0 %1232
      %v1234 = vsel %vm1227, %v1213, -inf
      %1235 = vmax.xlane.f32.xlu0 %v1234
      %v1236 = vpop.xlane.xlu0 %1235
      %v1237 = vsel %vm1227, %v1214, -inf
      %1238 = vmax.xlane.f32.xlu0 %v1237
      %v1239 = vpop.xlane.xlu0 %1238
      %v1240 = vsel %vm1227, %v1215, -inf
      %1241 = vmax.xlane.f32.xlu0 %v1240
      %v1242 = vpop.xlane.xlu0 %1241
      %v1243 = vsel %vm1227, %v1216, -inf
      %1244 = vmax.xlane.f32.xlu0 %v1243
      %v1245 = vpop.xlane.xlu0 %1244
      %v1246 = vsel %vm1227, %v1217, -inf
      %1247 = vmax.xlane.f32.xlu0 %v1246
      %v1248 = vpop.xlane.xlu0 %1247
      %v1249 = vsel %vm1227, %v1218, -inf
      %1250 = vmax.xlane.f32.xlu0 %v1249
      %v1251 = vpop.xlane.xlu0 %1250
      %v1252 = vsel %vm1227, %v1219, -inf
      %1253 = vmax.xlane.f32.xlu0 %v1252
      %v1254 = vpop.xlane.xlu0 %1253
      %v1255 = vsel %vm1227, %v1220, -inf
      %1256 = vmax.xlane.f32.xlu0 %v1255
      %v1257 = vpop.xlane.xlu0 %1256
      %v1258 = vsel %vm1227, %v1221, -inf
      %1259 = vmax.xlane.f32.xlu0 %v1258
      %v1260 = vpop.xlane.xlu0 %1259
      %v1261 = vsel %vm1227, %v1222, -inf
      %1262 = vmax.xlane.f32.xlu0 %v1261
      %v1263 = vpop.xlane.xlu0 %1262
      %v1264 = vsel %vm1227, %v1223, -inf
      %1265 = vmax.xlane.f32.xlu0 %v1264
      %v1266 = vpop.xlane.xlu0 %1265
      %v1267 = vsel %vm1227, %v1224, -inf
      %1268 = vmax.xlane.f32.xlu0 %v1267
      %v1269 = vpop.xlane.xlu0 %1268
      %v1270 = vsel %vm1227, %v1225, -inf
      %1271 = vmax.xlane.f32.xlu0 %v1270
      %v1272 = vpop.xlane.xlu0 %1271
      %v1273 = vsel %vm1227, %v1226, -inf
      %1274 = vmax.xlane.f32.xlu0 %v1273
      %v1275 = vpop.xlane.xlu0 %1274
      %v1276 = vsub.f32 %v1211, %v1230
      %v1277 = vsub.f32 %v1212, %v1233
      %v1278 = vsub.f32 %v1213, %v1236
      %v1279 = vsub.f32 %v1214, %v1239
      %v1280 = vsub.f32 %v1215, %v1242
      %v1281 = vsub.f32 %v1216, %v1245
      %v1282 = vsub.f32 %v1217, %v1248
      %v1283 = vsub.f32 %v1218, %v1251
      %v1284 = vsub.f32 %v1219, %v1254
      %v1285 = vsub.f32 %v1220, %v1257
      %v1286 = vsub.f32 %v1221, %v1260
      %v1287 = vsub.f32 %v1222, %v1263
      %v1288 = vsub.f32 %v1223, %v1266
      %v1289 = vsub.f32 %v1224, %v1269
      %v1290 = vsub.f32 %v1225, %v1272
      %v1291 = vsub.f32 %v1226, %v1275
      %v1292 = vmul.f32 %v1276, 1.442695
      %v1293 = vpow.pop %v1292
      %v1294 = vmul.f32 %v1277, 1.442695
      %v1295 = vpow.pop %v1294
      %v1296 = vmul.f32 %v1278, 1.442695
      %v1297 = vpow.pop %v1296
      %v1298 = vmul.f32 %v1279, 1.442695
      %v1299 = vpow.pop %v1298
      %v1300 = vmul.f32 %v1280, 1.442695
      %v1301 = vpow.pop %v1300
      %v1302 = vmul.f32 %v1281, 1.442695
      %v1303 = vpow.pop %v1302
      %v1304 = vmul.f32 %v1282, 1.442695
      %v1305 = vpow.pop %v1304
      %v1306 = vmul.f32 %v1283, 1.442695
      %v1307 = vpow.pop %v1306
      %v1308 = vmul.f32 %v1284, 1.442695
      %v1309 = vpow.pop %v1308
      %v1310 = vmul.f32 %v1285, 1.442695
      %v1311 = vpow.pop %v1310
      %v1312 = vmul.f32 %v1286, 1.442695
      %v1313 = vpow.pop %v1312
      %v1314 = vmul.f32 %v1287, 1.442695
      %v1315 = vpow.pop %v1314
      %v1316 = vmul.f32 %v1288, 1.442695
      %v1317 = vpow.pop %v1316
      %v1318 = vmul.f32 %v1289, 1.442695
      %v1319 = vpow.pop %v1318
      %v1320 = vmul.f32 %v1290, 1.442695
      %v1321 = vpow.pop %v1320
      %v1322 = vmul.f32 %v1291, 1.442695
      %v1323 = vpow.pop %v1322
      %v1324 = vsel %vm1227, %v1293, 0.0
      %1325 = vadd.xlane.f32.xlu0 %v1324
      %v1326 = vpop.xlane.xlu0 %1325
      %v1327 = vsel %vm1227, %v1295, 0.0
      %1328 = vadd.xlane.f32.xlu0 %v1327
      %v1329 = vpop.xlane.xlu0 %1328
      %v1330 = vsel %vm1227, %v1297, 0.0
      %1331 = vadd.xlane.f32.xlu0 %v1330
      %v1332 = vpop.xlane.xlu0 %1331
      %v1333 = vsel %vm1227, %v1299, 0.0
      %1334 = vadd.xlane.f32.xlu0 %v1333
      %v1335 = vpop.xlane.xlu0 %1334
      %v1336 = vsel %vm1227, %v1301, 0.0
      %1337 = vadd.xlane.f32.xlu0 %v1336
      %v1338 = vpop.xlane.xlu0 %1337
      %v1339 = vsel %vm1227, %v1303, 0.0
      %1340 = vadd.xlane.f32.xlu0 %v1339
      %v1341 = vpop.xlane.xlu0 %1340
      %v1342 = vsel %vm1227, %v1305, 0.0
      %1343 = vadd.xlane.f32.xlu0 %v1342
      %v1344 = vpop.xlane.xlu0 %1343
      %v1345 = vsel %vm1227, %v1307, 0.0
      %1346 = vadd.xlane.f32.xlu0 %v1345
      %v1347 = vpop.xlane.xlu0 %1346
      %v1348 = vsel %vm1227, %v1309, 0.0
      %1349 = vadd.xlane.f32.xlu0 %v1348
      %v1350 = vpop.xlane.xlu0 %1349
      %v1351 = vsel %vm1227, %v1311, 0.0
      %1352 = vadd.xlane.f32.xlu0 %v1351
      %v1353 = vpop.xlane.xlu0 %1352
      %v1354 = vsel %vm1227, %v1313, 0.0
      %1355 = vadd.xlane.f32.xlu0 %v1354
      %v1356 = vpop.xlane.xlu0 %1355
      %v1357 = vsel %vm1227, %v1315, 0.0
      %1358 = vadd.xlane.f32.xlu0 %v1357
      %v1359 = vpop.xlane.xlu0 %1358
      %v1360 = vsel %vm1227, %v1317, 0.0
      %1361 = vadd.xlane.f32.xlu0 %v1360
      %v1362 = vpop.xlane.xlu0 %1361
      %v1363 = vsel %vm1227, %v1319, 0.0
      %1364 = vadd.xlane.f32.xlu0 %v1363
      %v1365 = vpop.xlane.xlu0 %1364
      %v1366 = vsel %vm1227, %v1321, 0.0
      %1367 = vadd.xlane.f32.xlu0 %v1366
      %v1368 = vpop.xlane.xlu0 %1367
      %v1369 = vsel %vm1227, %v1323, 0.0
      %1370 = vadd.xlane.f32.xlu0 %v1369
      %v1371 = vpop.xlane.xlu0 %1370
      %v1372 = vrcp.pop %v1326
      %v1373 = vrcp.pop %v1329
      %v1374 = vrcp.pop %v1332
      %v1375 = vrcp.pop %v1335
      %v1376 = vrcp.pop %v1338
      %v1377 = vrcp.pop %v1341
      %v1378 = vrcp.pop %v1344
      %v1379 = vrcp.pop %v1347
      %v1380 = vrcp.pop %v1350
      %v1381 = vrcp.pop %v1353
      %v1382 = vrcp.pop %v1356
      %v1383 = vrcp.pop %v1359
      %v1384 = vrcp.pop %v1362
      %v1385 = vrcp.pop %v1365
      %v1386 = vrcp.pop %v1368
      %v1387 = vrcp.pop %v1371
      %v1388 = vmul.f32 %v1293, %v1372
      %v1389 = vmul.f32 %v1295, %v1373
      %v1390 = vmul.f32 %v1297, %v1374
      %v1391 = vmul.f32 %v1299, %v1375
      %v1392 = vmul.f32 %v1301, %v1376
      %v1393 = vmul.f32 %v1303, %v1377
      %v1394 = vmul.f32 %v1305, %v1378
      %v1395 = vmul.f32 %v1307, %v1379
      %v1396 = vmul.f32 %v1309, %v1380
      %v1397 = vmul.f32 %v1311, %v1381
      %v1398 = vmul.f32 %v1313, %v1382
      %v1399 = vmul.f32 %v1315, %v1383
      %v1400 = vmul.f32 %v1317, %v1384
      %v1401 = vmul.f32 %v1319, %v1385
      %v1402 = vmul.f32 %v1321, %v1386
      %v1403 = vmul.f32 %v1323, %v1387
      %v1404 = vpack.c.bf16 %v1388, %v1388
      %v1405 = vpack.c.bf16 %v1389, %v1389
      %v1406 = vpack.c.bf16 %v1390, %v1390
      %v1407 = vpack.c.bf16 %v1391, %v1391
      %v1408 = vpack.c.bf16 %v1392, %v1392
      %v1409 = vpack.c.bf16 %v1393, %v1393
      %v1410 = vpack.c.bf16 %v1394, %v1394
      %v1411 = vpack.c.bf16 %v1395, %v1395
      %v1412 = vpack.c.bf16 %v1396, %v1396
      %v1413 = vpack.c.bf16 %v1397, %v1397
      %v1414 = vpack.c.bf16 %v1398, %v1398
      %v1415 = vpack.c.bf16 %v1399, %v1399
      %v1416 = vpack.c.bf16 %v1400, %v1400
      %v1417 = vpack.c.bf16 %v1401, %v1401
      %v1418 = vpack.c.bf16 %v1402, %v1402
      %v1419 = vpack.c.bf16 %v1403, %v1403
      %v1422 = vunpack.c.l.b16 %v1404
      %v1423 = vunpack.c.l.b16 %v1405
      %v1424 = vpack.c.b16 %v1423, %v1422
      %1425 = vrot.lane.b32.xlu0 %v967, 64
      %v1426 = vpop.permute.xlu0 %1425
      %v1429 = vsel %vm1227, %v1424, 0
      %1431 = vmatpush.bf16.msra.mxu0 0
      %1432 = vmatpush.bf16.msra.mxu0 0
      %1433 = vmatpush.bf16.msra.mxu0 0
      %1434 = vmatpush.bf16.msra.mxu0 0
      %1435 = vmatpush.bf16.msra.mxu0 0
      %1436 = vmatpush.bf16.msra.mxu0 0
      %1437 = vmatpush.bf16.msra.mxu0 0
      %1438 = vmatpush.bf16.msra.mxu0 %v1426
      %1439 = vmatmul.bf16.gmra.mxu0 %v1429
      %v1440 = vpop.f32.mrf.mxu0
      %v1441 = vadd.f32 0.0, %v1440
      %v1442 = vpop.f32.mrf.mxu0
      %v1443 = vadd.f32 0.0, %v1442
      %1444 = vdwg.mxu0
      %v1447 = vunpack.c.l.b16 %v1406
      %v1448 = vunpack.c.l.b16 %v1407
      %v1449 = vpack.c.b16 %v1448, %v1447
      %1450 = vrot.lane.b32.xlu0 %v995, 64
      %v1451 = vpop.permute.xlu0 %1450
      %v1454 = vsel %vm1227, %v1449, 0
      %1456 = vmatpush.bf16.msra.mxu0 0
      %1457 = vmatpush.bf16.msra.mxu0 0
      %1458 = vmatpush.bf16.msra.mxu0 0
      %1459 = vmatpush.bf16.msra.mxu0 0
      %1460 = vmatpush.bf16.msra.mxu0 0
      %1461 = vmatpush.bf16.msra.mxu0 0
      %1462 = vmatpush.bf16.msra.mxu0 0
      %1463 = vmatpush.bf16.msra.mxu0 %v1451
      %1464 = vmatmul.bf16.gmra.mxu0 %v1454
      %v1465 = vpop.f32.mrf.mxu0
      %v1466 = vadd.f32 0.0, %v1465
      %v1467 = vpop.f32.mrf.mxu0
      %v1468 = vadd.f32 0.0, %v1467
      %1469 = vdwg.mxu0
      %v1472 = vunpack.c.l.b16 %v1408
      %v1473 = vunpack.c.l.b16 %v1409
      %v1474 = vpack.c.b16 %v1473, %v1472
      %1475 = vrot.lane.b32.xlu0 %v1022, 64
      %v1476 = vpop.permute.xlu0 %1475
      %v1479 = vsel %vm1227, %v1474, 0
      %1481 = vmatpush.bf16.msra.mxu0 0
      %1482 = vmatpush.bf16.msra.mxu0 0
      %1483 = vmatpush.bf16.msra.mxu0 0
      %1484 = vmatpush.bf16.msra.mxu0 0
      %1485 = vmatpush.bf16.msra.mxu0 0
      %1486 = vmatpush.bf16.msra.mxu0 0
      %1487 = vmatpush.bf16.msra.mxu0 0
      %1488 = vmatpush.bf16.msra.mxu0 %v1476
      %1489 = vmatmul.bf16.gmra.mxu0 %v1479
      %v1490 = vpop.f32.mrf.mxu0
      %v1491 = vadd.f32 0.0, %v1490
      %v1492 = vpop.f32.mrf.mxu0
      %v1493 = vadd.f32 0.0, %v1492
      %1494 = vdwg.mxu0
      %v1497 = vunpack.c.l.b16 %v1410
      %v1498 = vunpack.c.l.b16 %v1411
      %v1499 = vpack.c.b16 %v1498, %v1497
      %1500 = vrot.lane.b32.xlu0 %v1049, 64
      %v1501 = vpop.permute.xlu0 %1500
      %v1504 = vsel %vm1227, %v1499, 0
      %1506 = vmatpush.bf16.msra.mxu0 0
      %1507 = vmatpush.bf16.msra.mxu0 0
      %1508 = vmatpush.bf16.msra.mxu0 0
      %1509 = vmatpush.bf16.msra.mxu0 0
      %1510 = vmatpush.bf16.msra.mxu0 0
      %1511 = vmatpush.bf16.msra.mxu0 0
      %1512 = vmatpush.bf16.msra.mxu0 0
      %1513 = vmatpush.bf16.msra.mxu0 %v1501
      %1514 = vmatmul.bf16.gmra.mxu0 %v1504
      %v1515 = vpop.f32.mrf.mxu0
      %v1516 = vadd.f32 0.0, %v1515
      %v1517 = vpop.f32.mrf.mxu0
      %v1518 = vadd.f32 0.0, %v1517
      %1519 = vdwg.mxu0
      %v1522 = vunpack.c.l.b16 %v1412
      %v1523 = vunpack.c.l.b16 %v1413
      %v1524 = vpack.c.b16 %v1523, %v1522
      %1525 = vrot.lane.b32.xlu0 %v1076, 64
      %v1526 = vpop.permute.xlu0 %1525
      %v1529 = vsel %vm1227, %v1524, 0
      %1531 = vmatpush.bf16.msra.mxu0 0
      %1532 = vmatpush.bf16.msra.mxu0 0
      %1533 = vmatpush.bf16.msra.mxu0 0
      %1534 = vmatpush.bf16.msra.mxu0 0
      %1535 = vmatpush.bf16.msra.mxu0 0
      %1536 = vmatpush.bf16.msra.mxu0 0
      %1537 = vmatpush.bf16.msra.mxu0 0
      %1538 = vmatpush.bf16.msra.mxu0 %v1526
      %1539 = vmatmul.bf16.gmra.mxu0 %v1529
      %v1540 = vpop.f32.mrf.mxu0
      %v1541 = vadd.f32 0.0, %v1540
      %v1542 = vpop.f32.mrf.mxu0
      %v1543 = vadd.f32 0.0, %v1542
      %1544 = vdwg.mxu0
      %v1547 = vunpack.c.l.b16 %v1414
      %v1548 = vunpack.c.l.b16 %v1415
      %v1549 = vpack.c.b16 %v1548, %v1547
      %1550 = vrot.lane.b32.xlu0 %v1103, 64
      %v1551 = vpop.permute.xlu0 %1550
      %v1554 = vsel %vm1227, %v1549, 0
      %1556 = vmatpush.bf16.msra.mxu0 0
      %1557 = vmatpush.bf16.msra.mxu0 0
      %1558 = vmatpush.bf16.msra.mxu0 0
      %1559 = vmatpush.bf16.msra.mxu0 0
      %1560 = vmatpush.bf16.msra.mxu0 0
      %1561 = vmatpush.bf16.msra.mxu0 0
      %1562 = vmatpush.bf16.msra.mxu0 0
      %1563 = vmatpush.bf16.msra.mxu0 %v1551
      %1564 = vmatmul.bf16.gmra.mxu0 %v1554
      %v1565 = vpop.f32.mrf.mxu0
      %v1566 = vadd.f32 0.0, %v1565
      %v1567 = vpop.f32.mrf.mxu0
      %v1568 = vadd.f32 0.0, %v1567
      %1569 = vdwg.mxu0
      %v1572 = vunpack.c.l.b16 %v1416
      %v1573 = vunpack.c.l.b16 %v1417
      %v1574 = vpack.c.b16 %v1573, %v1572
      %1575 = vrot.lane.b32.xlu0 %v1130, 64
      %v1576 = vpop.permute.xlu0 %1575
      %v1579 = vsel %vm1227, %v1574, 0
      %1581 = vmatpush.bf16.msra.mxu0 0
      %1582 = vmatpush.bf16.msra.mxu0 0
      %1583 = vmatpush.bf16.msra.mxu0 0
      %1584 = vmatpush.bf16.msra.mxu0 0
      %1585 = vmatpush.bf16.msra.mxu0 0
      %1586 = vmatpush.bf16.msra.mxu0 0
      %1587 = vmatpush.bf16.msra.mxu0 0
      %1588 = vmatpush.bf16.msra.mxu0 %v1576
      %1589 = vmatmul.bf16.gmra.mxu0 %v1579
      %v1590 = vpop.f32.mrf.mxu0
      %v1591 = vadd.f32 0.0, %v1590
      %v1592 = vpop.f32.mrf.mxu0
      %v1593 = vadd.f32 0.0, %v1592
      %1594 = vdwg.mxu0
      %v1597 = vunpack.c.l.b16 %v1418
      %v1598 = vunpack.c.l.b16 %v1419
      %v1599 = vpack.c.b16 %v1598, %v1597
      %1600 = vrot.lane.b32.xlu0 %v1157, 64
      %v1601 = vpop.permute.xlu0 %1600
      %v1604 = vsel %vm1227, %v1599, 0
      %1606 = vmatpush.bf16.msra.mxu0 0
      %1607 = vmatpush.bf16.msra.mxu0 0
      %1608 = vmatpush.bf16.msra.mxu0 0
      %1609 = vmatpush.bf16.msra.mxu0 0
      %1610 = vmatpush.bf16.msra.mxu0 0
      %1611 = vmatpush.bf16.msra.mxu0 0
      %1612 = vmatpush.bf16.msra.mxu0 0
      %1613 = vmatpush.bf16.msra.mxu0 %v1601
      %1614 = vmatmul.bf16.gmra.mxu0 %v1604
      %v1615 = vpop.f32.mrf.mxu0
      %v1616 = vadd.f32 0.0, %v1615
      %v1617 = vpop.f32.mrf.mxu0
      %v1618 = vadd.f32 0.0, %v1617
      %1619 = vdwg.mxu0
      %1624 = vrot.lane.b32.xlu0 %v1491, 8
      %v1625 = vpop.permute.xlu0 %1624
      %1626 = vrot.lane.b32.xlu0 %v1493, 8
      %v1627 = vpop.permute.xlu0 %1626
      %1628 = vrot.lane.b32.xlu0 %v1516, 8
      %v1629 = vpop.permute.xlu0 %1628
      %1630 = vrot.lane.b32.xlu0 %v1518, 8
      %v1631 = vpop.permute.xlu0 %1630
      %1640 = vrot.lane.b32.xlu0 %v1541, 16
      %v1641 = vpop.permute.xlu0 %1640
      %1642 = vrot.lane.b32.xlu0 %v1543, 16
      %v1643 = vpop.permute.xlu0 %1642
      %1644 = vrot.lane.b32.xlu0 %v1566, 16
      %v1645 = vpop.permute.xlu0 %1644
      %1646 = vrot.lane.b32.xlu0 %v1568, 16
      %v1647 = vpop.permute.xlu0 %1646
      %1656 = vrot.lane.b32.xlu0 %v1591, 24
      %v1657 = vpop.permute.xlu0 %1656
      %1658 = vrot.lane.b32.xlu0 %v1593, 24
      %v1659 = vpop.permute.xlu0 %1658
      %1660 = vrot.lane.b32.xlu0 %v1616, 24
      %v1661 = vpop.permute.xlu0 %1660
      %1662 = vrot.lane.b32.xlu0 %v1618, 24
      %v1663 = vpop.permute.xlu0 %1662
      %v1668 = vsel %vm970, %v1441, %v1625
      %v1669 = vsel %vm970, %v1443, %v1627
      %v1670 = vsel %vm970, %v1466, %v1629
      %v1671 = vsel %vm970, %v1468, %v1631
      %v1672 = vsel %vm1227, %v1668, %v1641
      %v1673 = vsel %vm1227, %v1669, %v1643
      %v1674 = vsel %vm1227, %v1670, %v1645
      %v1675 = vsel %vm1227, %v1671, %v1647
      %vm1676 = vcmask 195584
      %v1677 = vsel %vm1676, %v1672, %v1657
      %v1678 = vsel %vm1676, %v1673, %v1659
      %v1679 = vsel %vm1676, %v1674, %v1661
      %v1680 = vsel %vm1676, %v1675, %v1663
      %v1681 = vpack.c.bf16 %v1678, %v1677
      %v1682 = vpack.c.bf16 %v1680, %v1679
      %v1683 = vld [vmem:[%s5] sm:$0xf]
      %v1684 = vld [vmem:[%s5 + $0x4] sm:$0xf]
      %v1685 = vld [vmem:[%s5 + $0x8] sm:$0xf]
      %v1686 = vld [vmem:[%s5 + $0xc] sm:$0xf]
      %v1687 = vld [vmem:[%s6] sm:$0x1]
      %v1689 = vperm.slane %v1687, 0
      %v1695 = vunpack.c.l.b16 %v1683
      %v1696 = vunpack.c.l.b16 %v1684
      %v1697 = vunpack.c.l.b16 %v1685
      %v1698 = vunpack.c.l.b16 %v1686
      %v1699 = vpack.c.b16 %v1696, %v1695
      %v1700 = vpack.c.b16 %v1698, %v1697
      %v1704 = vsel %vm574, %v1681, 0
      %v1707 = vsel %vm574, %v1682, 0
      %1709 = vmatpush.bf16.msra.mxu0 0
      %1710 = vmatpush.bf16.msra.mxu0 0
      %1711 = vmatpush.bf16.msra.mxu0 0
      %1712 = vmatpush.bf16.msra.mxu0 0
      %1713 = vmatpush.bf16.msra.mxu0 0
      %1714 = vmatpush.bf16.msra.mxu0 0
      %1715 = vmatpush.bf16.msra.mxu0 %v1700
      %1716 = vmatpush.bf16.msra.mxu0 %v1699
      %1717 = vmatmul.bf16.gmra.mxu0 %v1704
      %v1718 = vpop.f32.mrf.mxu0
      %v1719 = vadd.f32 %v1689, %v1718
      %v1720 = vpop.f32.mrf.mxu0
      %v1721 = vadd.f32 %v1689, %v1720
      %1722 = vmatmul.bf16.gmra.mxu0 %v1707
      %v1723 = vpop.f32.mrf.mxu0
      %v1724 = vadd.f32 %v1689, %v1723
      %v1725 = vpop.f32.mrf.mxu0
      %v1726 = vadd.f32 %v1689, %v1725
      %1727 = vdwg.mxu0
      %v1732 = vrot.slane %v1719, 4
      %v1733 = vrot.slane %v1721, 4
      %v1734 = vrot.slane %v1724, 4
      %v1735 = vrot.slane %v1726, 4
      %v1740 = vadd.f32 %v535, %v1719
      %v1741 = vadd.f32 %v536, %v1732
      %v1742 = vadd.f32 %v537, %v1721
      %v1743 = vadd.f32 %v538, %v1733
      %v1744 = vadd.f32 %v543, %v1724
      %v1745 = vadd.f32 %v544, %v1734
      %v1746 = vadd.f32 %v545, %v1726
      %v1747 = vadd.f32 %v546, %v1735
      %1756 = vst [vmem:[#allocation1] ss:$2 sm:$0xff] %v1740
      %s1757 = scalar_lea.vmem [#allocation1], 1
      %1758 = vst [vmem:[%s1757] ss:$2 sm:$0xff] %v1741
      %s1759 = scalar_lea.vmem [#allocation1], 16
      %1760 = vst [vmem:[%s1759] ss:$2 sm:$0xff] %v1742
      %s1761 = scalar_lea.vmem [#allocation1], 17
      %1762 = vst [vmem:[%s1761] ss:$2 sm:$0xff] %v1743
      %s1763 = scalar_lea.vmem [#allocation1], 32
      %1764 = vst [vmem:[%s1763] ss:$2 sm:$0xff] %v1744
      %s1765 = scalar_lea.vmem [#allocation1], 33
      %1766 = vst [vmem:[%s1765] ss:$2 sm:$0xff] %v1745
      %s1767 = scalar_lea.vmem [#allocation1], 48
      %1768 = vst [vmem:[%s1767] ss:$2 sm:$0xff] %v1746
      %s1769 = scalar_lea.vmem [#allocation1], 49
      %1770 = vst [vmem:[%s1769] ss:$2 sm:$0xff] %v1747
      %v1771 = vld.sshfl [vmem:[#allocation1] sm:$0xff pattern:$0x75316420]
      %v1772 = vld.sshfl [vmem:[#allocation1 + $0x10] sm:$0xff pattern:$0x75316420]
      %v1773 = vld.sshfl [vmem:[#allocation1 + $0x20] sm:$0xff pattern:$0x75316420]
      %v1774 = vld.sshfl [vmem:[#allocation1 + $0x30] sm:$0xff pattern:$0x75316420]
      %v1779 = vsel %vm574, %v1771, 0.0
      %1780 = vadd.xlane.f32.xlu0 %v1779
      %v1781 = vpop.xlane.xlu0 %1780
      %v1782 = vsel %vm574, %v1772, 0.0
      %1783 = vadd.xlane.f32.xlu0 %v1782
      %v1784 = vpop.xlane.xlu0 %1783
      %v1785 = vsel %vm574, %v1773, 0.0
      %1786 = vadd.xlane.f32.xlu0 %v1785
      %v1787 = vpop.xlane.xlu0 %1786
      %v1788 = vsel %vm574, %v1774, 0.0
      %1789 = vadd.xlane.f32.xlu0 %v1788
      %v1790 = vpop.xlane.xlu0 %1789
      %v1791 = vmul.f32 %v1781, %v593
      %v1792 = vmul.f32 %v1784, %v593
      %v1793 = vmul.f32 %v1787, %v593
      %v1794 = vmul.f32 %v1790, %v593
      %v1800 = vunpack.c.l.s4 839922192
      %v1801 = vunpack.c.0.s8 %v1800
      %v1802 = vperm.slane %v1791, %v1801
      %v1804 = vunpack.c.l.s4 1985246804
      %v1805 = vunpack.c.0.s8 %v1804
      %v1806 = vperm.slane %v1791, %v1805
      %v1808 = vunpack.c.l.s4 839922192
      %v1809 = vunpack.c.0.s8 %v1808
      %v1810 = vperm.slane %v1792, %v1809
      %v1812 = vunpack.c.l.s4 1985246804
      %v1813 = vunpack.c.0.s8 %v1812
      %v1814 = vperm.slane %v1792, %v1813
      %v1816 = vunpack.c.l.s4 839922192
      %v1817 = vunpack.c.0.s8 %v1816
      %v1818 = vperm.slane %v1793, %v1817
      %v1820 = vunpack.c.l.s4 1985246804
      %v1821 = vunpack.c.0.s8 %v1820
      %v1822 = vperm.slane %v1793, %v1821
      %v1824 = vunpack.c.l.s4 839922192
      %v1825 = vunpack.c.0.s8 %v1824
      %v1826 = vperm.slane %v1794, %v1825
      %v1828 = vunpack.c.l.s4 1985246804
      %v1829 = vunpack.c.0.s8 %v1828
      %v1830 = vperm.slane %v1794, %v1829
      %v1839 = vsub.f32 %v1740, %v1802
      %v1840 = vsub.f32 %v1741, %v1806
      %v1841 = vsub.f32 %v1742, %v1810
      %v1842 = vsub.f32 %v1743, %v1814
      %v1843 = vsub.f32 %v1744, %v1818
      %v1844 = vsub.f32 %v1745, %v1822
      %v1845 = vsub.f32 %v1746, %v1826
      %v1846 = vsub.f32 %v1747, %v1830
      %v1847 = vmul.f32 %v1839, %v1839
      %v1848 = vmul.f32 %v1840, %v1840
      %v1849 = vmul.f32 %v1841, %v1841
      %v1850 = vmul.f32 %v1842, %v1842
      %v1851 = vmul.f32 %v1843, %v1843
      %v1852 = vmul.f32 %v1844, %v1844
      %v1853 = vmul.f32 %v1845, %v1845
      %v1854 = vmul.f32 %v1846, %v1846
      %1863 = vst [vmem:[#allocation1] ss:$2 sm:$0xff] %v1847
      %s1864 = scalar_lea.vmem [#allocation1], 1
      %1865 = vst [vmem:[%s1864] ss:$2 sm:$0xff] %v1848
      %s1866 = scalar_lea.vmem [#allocation1], 16
      %1867 = vst [vmem:[%s1866] ss:$2 sm:$0xff] %v1849
      %s1868 = scalar_lea.vmem [#allocation1], 17
      %1869 = vst [vmem:[%s1868] ss:$2 sm:$0xff] %v1850
      %s1870 = scalar_lea.vmem [#allocation1], 32
      %1871 = vst [vmem:[%s1870] ss:$2 sm:$0xff] %v1851
      %s1872 = scalar_lea.vmem [#allocation1], 33
      %1873 = vst [vmem:[%s1872] ss:$2 sm:$0xff] %v1852
      %s1874 = scalar_lea.vmem [#allocation1], 48
      %1875 = vst [vmem:[%s1874] ss:$2 sm:$0xff] %v1853
      %s1876 = scalar_lea.vmem [#allocation1], 49
      %1877 = vst [vmem:[%s1876] ss:$2 sm:$0xff] %v1854
      %v1878 = vld.sshfl [vmem:[#allocation1] sm:$0xff pattern:$0x75316420]
      %v1879 = vld.sshfl [vmem:[#allocation1 + $0x10] sm:$0xff pattern:$0x75316420]
      %v1880 = vld.sshfl [vmem:[#allocation1 + $0x20] sm:$0xff pattern:$0x75316420]
      %v1881 = vld.sshfl [vmem:[#allocation1 + $0x30] sm:$0xff pattern:$0x75316420]
      %v1886 = vsel %vm574, %v1878, 0.0
      %1887 = vadd.xlane.f32.xlu0 %v1886
      %v1888 = vpop.xlane.xlu0 %1887
      %v1889 = vsel %vm574, %v1879, 0.0
      %1890 = vadd.xlane.f32.xlu0 %v1889
      %v1891 = vpop.xlane.xlu0 %1890
      %v1892 = vsel %vm574, %v1880, 0.0
      %1893 = vadd.xlane.f32.xlu0 %v1892
      %v1894 = vpop.xlane.xlu0 %1893
      %v1895 = vsel %vm574, %v1881, 0.0
      %1896 = vadd.xlane.f32.xlu0 %v1895
      %v1897 = vpop.xlane.xlu0 %1896
      %v1898 = vmul.f32 %v1888, %v593
      %v1899 = vmul.f32 %v1891, %v593
      %v1900 = vmul.f32 %v1894, %v593
      %v1901 = vmul.f32 %v1897, %v593
      %v1902 = vadd.f32 %v1898, 1e-05
      %v1903 = vadd.f32 %v1899, 1e-05
      %v1904 = vadd.f32 %v1900, 1e-05
      %v1905 = vadd.f32 %v1901, 1e-05
      %v1906 = vrsqrt.pop %v1902
      %v1907 = vmul.f32 %v1906, %v1902
      %v1908 = vmul.f32 %v1907, %v1906
      %v1909 = vmul.f32 0.5, %v1908
      %v1910 = vsub.f32 1.5, %v1909
      %v1911 = vmul.f32 %v1906, %v1910
      %vm1912 = vweird.f32 %v1902
      %vm1913 = vweird.f32 %v1906
      %vm1914 = vmor %vm1912, %vm1913
      %v1915 = vsel %vm1914, %v1906, %v1911
      %v1916 = vrsqrt.pop %v1903
      %v1917 = vmul.f32 %v1916, %v1903
      %v1918 = vmul.f32 %v1917, %v1916
      %v1919 = vmul.f32 0.5, %v1918
      %v1920 = vsub.f32 1.5, %v1919
      %v1921 = vmul.f32 %v1916, %v1920
      %vm1922 = vweird.f32 %v1903
      %vm1923 = vweird.f32 %v1916
      %vm1924 = vmor %vm1922, %vm1923
      %v1925 = vsel %vm1924, %v1916, %v1921
      %v1926 = vrsqrt.pop %v1904
      %v1927 = vmul.f32 %v1926, %v1904
      %v1928 = vmul.f32 %v1927, %v1926
      %v1929 = vmul.f32 0.5, %v1928
      %v1930 = vsub.f32 1.5, %v1929
      %v1931 = vmul.f32 %v1926, %v1930
      %vm1932 = vweird.f32 %v1904
      %vm1933 = vweird.f32 %v1926
      %vm1934 = vmor %vm1932, %vm1933
      %v1935 = vsel %vm1934, %v1926, %v1931
      %v1936 = vrsqrt.pop %v1905
      %v1937 = vmul.f32 %v1936, %v1905
      %v1938 = vmul.f32 %v1937, %v1936
      %v1939 = vmul.f32 0.5, %v1938
      %v1940 = vsub.f32 1.5, %v1939
      %v1941 = vmul.f32 %v1936, %v1940
      %vm1942 = vweird.f32 %v1905
      %vm1943 = vweird.f32 %v1936
      %vm1944 = vmor %vm1942, %vm1943
      %v1945 = vsel %vm1944, %v1936, %v1941
      %v1951 = vunpack.c.l.s4 839922192
      %v1952 = vunpack.c.0.s8 %v1951
      %v1953 = vperm.slane %v1915, %v1952
      %v1955 = vunpack.c.l.s4 1985246804
      %v1956 = vunpack.c.0.s8 %v1955
      %v1957 = vperm.slane %v1915, %v1956
      %v1959 = vunpack.c.l.s4 839922192
      %v1960 = vunpack.c.0.s8 %v1959
      %v1961 = vperm.slane %v1925, %v1960
      %v1963 = vunpack.c.l.s4 1985246804
      %v1964 = vunpack.c.0.s8 %v1963
      %v1965 = vperm.slane %v1925, %v1964
      %v1967 = vunpack.c.l.s4 839922192
      %v1968 = vunpack.c.0.s8 %v1967
      %v1969 = vperm.slane %v1935, %v1968
      %v1971 = vunpack.c.l.s4 1985246804
      %v1972 = vunpack.c.0.s8 %v1971
      %v1973 = vperm.slane %v1935, %v1972
      %v1975 = vunpack.c.l.s4 839922192
      %v1976 = vunpack.c.0.s8 %v1975
      %v1977 = vperm.slane %v1945, %v1976
      %v1979 = vunpack.c.l.s4 1985246804
      %v1980 = vunpack.c.0.s8 %v1979
      %v1981 = vperm.slane %v1945, %v1980
      %v1990 = vmul.f32 %v1839, %v1953
      %v1991 = vmul.f32 %v1840, %v1957
      %v1992 = vmul.f32 %v1841, %v1961
      %v1993 = vmul.f32 %v1842, %v1965
      %v1994 = vmul.f32 %v1843, %v1969
      %v1995 = vmul.f32 %v1844, %v1973
      %v1996 = vmul.f32 %v1845, %v1977
      %v1997 = vmul.f32 %v1846, %v1981
      %v1998 = vld [vmem:[%s8] sm:$0x1]
      %v2000 = vperm.slane %v1998, 0
      %v2002 = vrot.slane %v2000, 4
      %v2004 = vmul.f32 %v1990, %v2000
      %v2005 = vmul.f32 %v1991, %v2002
      %v2006 = vmul.f32 %v1992, %v2000
      %v2007 = vmul.f32 %v1993, %v2002
      %v2008 = vmul.f32 %v1994, %v2000
      %v2009 = vmul.f32 %v1995, %v2002
      %v2010 = vmul.f32 %v1996, %v2000
      %v2011 = vmul.f32 %v1997, %v2002
      %v2012 = vld [vmem:[%s9] sm:$0x1]
      %v2014 = vperm.slane %v2012, 0
      %v2016 = vrot.slane %v2014, 4
      %v2018 = vadd.f32 %v2004, %v2014
      %v2019 = vadd.f32 %v2005, %v2016
      %v2020 = vadd.f32 %v2006, %v2014
      %v2021 = vadd.f32 %v2007, %v2016
      %v2022 = vadd.f32 %v2008, %v2014
      %v2023 = vadd.f32 %v2009, %v2016
      %v2024 = vadd.f32 %v2010, %v2014
      %v2025 = vadd.f32 %v2011, %v2016
      %2034 = vst [vmem:[#allocation1] ss:$2 sm:$0xff] %v2018
      %s2035 = scalar_lea.vmem [#allocation1], 1
      %2036 = vst [vmem:[%s2035] ss:$2 sm:$0xff] %v2019
      %s2037 = scalar_lea.vmem [#allocation1], 16
      %2038 = vst [vmem:[%s2037] ss:$2 sm:$0xff] %v2020
      %s2039 = scalar_lea.vmem [#allocation1], 17
      %2040 = vst [vmem:[%s2039] ss:$2 sm:$0xff] %v2021
      %s2041 = scalar_lea.vmem [#allocation1], 32
      %2042 = vst [vmem:[%s2041] ss:$2 sm:$0xff] %v2022
      %s2043 = scalar_lea.vmem [#allocation1], 33
      %2044 = vst [vmem:[%s2043] ss:$2 sm:$0xff] %v2023
      %s2045 = scalar_lea.vmem [#allocation1], 48
      %2046 = vst [vmem:[%s2045] ss:$2 sm:$0xff] %v2024
      %s2047 = scalar_lea.vmem [#allocation1], 49
      %2048 = vst [vmem:[%s2047] ss:$2 sm:$0xff] %v2025
      %v2049 = vld.sshfl [vmem:[#allocation1] sm:$0xff pattern:$0x75316420]
      %v2050 = vld.sshfl [vmem:[#allocation1 + $0x10] sm:$0xff pattern:$0x75316420]
      %v2051 = vld.sshfl [vmem:[#allocation1 + $0x20] sm:$0xff pattern:$0x75316420]
      %v2052 = vld.sshfl [vmem:[#allocation1 + $0x30] sm:$0xff pattern:$0x75316420]
      %v2057 = vpack.c.bf16 %v2050, %v2049
      %v2058 = vpack.c.bf16 %v2052, %v2051
      %v2059 = vld [vmem:[%s10] sm:$0xf]
      %v2060 = vld [vmem:[%s10 + $0x4] sm:$0xf]
      %v2061 = vld [vmem:[%s10 + $0x8] sm:$0xf]
      %v2062 = vld [vmem:[%s10 + $0xc] sm:$0xf]
      %v2063 = vld [vmem:[%s11] sm:$0x1]
      %v2065 = vperm.slane %v2063, 0
      %v2071 = vunpack.c.l.b16 %v2059
      %v2072 = vunpack.c.l.b16 %v2060
      %v2073 = vunpack.c.l.b16 %v2061
      %v2074 = vunpack.c.l.b16 %v2062
      %v2075 = vpack.c.b16 %v2072, %v2071
      %v2076 = vpack.c.b16 %v2074, %v2073
      %v2080 = vsel %vm574, %v2057, 0
      %v2083 = vsel %vm574, %v2058, 0
      %2085 = vmatpush.bf16.msra.mxu0 0
      %2086 = vmatpush.bf16.msra.mxu0 0
      %2087 = vmatpush.bf16.msra.mxu0 0
      %2088 = vmatpush.bf16.msra.mxu0 0
      %2089 = vmatpush.bf16.msra.mxu0 0
      %2090 = vmatpush.bf16.msra.mxu0 0
      %2091 = vmatpush.bf16.msra.mxu0 %v2076
      %2092 = vmatpush.bf16.msra.mxu0 %v2075
      %2093 = vmatmul.bf16.gmra.mxu0 %v2080
      %v2094 = vpop.f32.mrf.mxu0
      %v2095 = vadd.f32 %v2065, %v2094
      %v2096 = vpop.f32.mrf.mxu0
      %v2097 = vadd.f32 %v2065, %v2096
      %2098 = vmatmul.bf16.gmra.mxu0 %v2083
      %v2099 = vpop.f32.mrf.mxu0
      %v2100 = vadd.f32 %v2065, %v2099
      %v2101 = vpop.f32.mrf.mxu0
      %v2102 = vadd.f32 %v2065, %v2101
      %2103 = vdwg.mxu0
      %v2104 = vmul.f32 %v2095, 0.5
      %v2105 = vmul.f32 %v2097, 0.5
      %v2106 = vmul.f32 %v2100, 0.5
      %v2107 = vmul.f32 %v2102, 0.5
      %v2108 = vmul.f32 %v2095, 0.044715
      %v2109 = vmul.f32 %v2097, 0.044715
      %v2110 = vmul.f32 %v2100, 0.044715
      %v2111 = vmul.f32 %v2102, 0.044715
      %v2112 = vmul.f32 %v2108, %v2095
      %v2113 = vmul.f32 %v2109, %v2097
      %v2114 = vmul.f32 %v2110, %v2100
      %v2115 = vmul.f32 %v2111, %v2102
      %v2116 = vmul.f32 %v2112, %v2095
      %v2117 = vmul.f32 %v2113, %v2097
      %v2118 = vmul.f32 %v2114, %v2100
      %v2119 = vmul.f32 %v2115, %v2102
      %v2120 = vadd.f32 %v2095, %v2116
      %v2121 = vadd.f32 %v2097, %v2117
      %v2122 = vadd.f32 %v2100, %v2118
      %v2123 = vadd.f32 %v2102, %v2119
      %v2124 = vmul.f32 %v2120, 0.7978846
      %v2125 = vmul.f32 %v2121, 0.7978846
      %v2126 = vmul.f32 %v2122, 0.7978846
      %v2127 = vmul.f32 %v2123, 0.7978846
      %v2128 = vtanh.pop %v2124
      %v2129 = vtanh.pop %v2125
      %v2130 = vtanh.pop %v2126
      %v2131 = vtanh.pop %v2127
      %v2132 = vadd.f32 %v2128, 1.0
      %v2133 = vadd.f32 %v2129, 1.0
      %v2134 = vadd.f32 %v2130, 1.0
      %v2135 = vadd.f32 %v2131, 1.0
      %v2136 = vmul.f32 %v2104, %v2132
      %v2137 = vmul.f32 %v2105, %v2133
      %v2138 = vmul.f32 %v2106, %v2134
      %v2139 = vmul.f32 %v2107, %v2135
      %v2140 = vpack.c.bf16 %v2137, %v2136
      %v2141 = vpack.c.bf16 %v2139, %v2138
      %v2142 = vld [vmem:[%s12] sm:$0xf]
      %v2143 = vld [vmem:[%s12 + $0x4] sm:$0xf]
      %v2144 = vld [vmem:[%s12 + $0x8] sm:$0xf]
      %v2145 = vld [vmem:[%s12 + $0xc] sm:$0xf]
      %v2146 = vld [vmem:[%s12 + $0x10] sm:$0xf]
      %v2147 = vld [vmem:[%s12 + $0x14] sm:$0xf]
      %v2148 = vld [vmem:[%s12 + $0x18] sm:$0xf]
      %v2149 = vld [vmem:[%s12 + $0x1c] sm:$0xf]
      %v2150 = vld [vmem:[%s12 + $0x20] sm:$0xf]
      %v2151 = vld [vmem:[%s12 + $0x24] sm:$0xf]
      %v2152 = vld [vmem:[%s12 + $0x28] sm:$0xf]
      %v2153 = vld [vmem:[%s12 + $0x2c] sm:$0xf]
      %v2154 = vld [vmem:[%s12 + $0x30] sm:$0xf]
      %v2155 = vld [vmem:[%s12 + $0x34] sm:$0xf]
      %v2156 = vld [vmem:[%s12 + $0x38] sm:$0xf]
      %v2157 = vld [vmem:[%s12 + $0x3c] sm:$0xf]
      %v2158 = vld [vmem:[%s13] sm:$0x1]
      %v2160 = vperm.slane %v2158, 0
      %v2178 = vunpack.c.l.b16 %v2142
      %v2179 = vunpack.c.l.b16 %v2143
      %v2180 = vunpack.c.l.b16 %v2144
      %v2181 = vunpack.c.l.b16 %v2145
      %v2182 = vunpack.c.l.b16 %v2146
      %v2183 = vunpack.c.l.b16 %v2147
      %v2184 = vunpack.c.l.b16 %v2148
      %v2185 = vunpack.c.l.b16 %v2149
      %v2186 = vunpack.c.l.b16 %v2150
      %v2187 = vunpack.c.l.b16 %v2151
      %v2188 = vunpack.c.l.b16 %v2152
      %v2189 = vunpack.c.l.b16 %v2153
      %v2190 = vunpack.c.l.b16 %v2154
      %v2191 = vunpack.c.l.b16 %v2155
      %v2192 = vunpack.c.l.b16 %v2156
      %v2193 = vunpack.c.l.b16 %v2157
      %v2194 = vpack.c.b16 %v2179, %v2178
      %v2195 = vpack.c.b16 %v2181, %v2180
      %v2196 = vpack.c.b16 %v2183, %v2182
      %v2197 = vpack.c.b16 %v2185, %v2184
      %v2198 = vpack.c.b16 %v2187, %v2186
      %v2199 = vpack.c.b16 %v2189, %v2188
      %v2200 = vpack.c.b16 %v2191, %v2190
      %v2201 = vpack.c.b16 %v2193, %v2192
      %2210 = vmatpush.bf16.msra.mxu0 %v2201
      %2211 = vmatpush.bf16.msra.mxu0 %v2200
      %2212 = vmatpush.bf16.msra.mxu0 %v2199
      %2213 = vmatpush.bf16.msra.mxu0 %v2198
      %2214 = vmatpush.bf16.msra.mxu0 %v2197
      %2215 = vmatpush.bf16.msra.mxu0 %v2196
      %2216 = vmatpush.bf16.msra.mxu0 %v2195
      %2217 = vmatpush.bf16.msra.mxu0 %v2194
      %2218 = vmatmul.bf16.gmra.mxu0 %v2140
      %v2219 = vpop.f32.mrf.mxu0
      %v2220 = vadd.f32 %v2160, %v2219
      %v2221 = vpop.f32.mrf.mxu0
      %v2222 = vadd.f32 %v2160, %v2221
      %2223 = vmatmul.bf16.gmra.mxu0 %v2141
      %v2224 = vpop.f32.mrf.mxu0
      %v2225 = vadd.f32 %v2160, %v2224
      %v2226 = vpop.f32.mrf.mxu0
      %v2227 = vadd.f32 %v2160, %v2226
      %2228 = vdwg.mxu0
      %v2233 = vrot.slane %v2220, 4
      %v2234 = vrot.slane %v2222, 4
      %v2235 = vrot.slane %v2225, 4
      %v2236 = vrot.slane %v2227, 4
      %v2241 = vadd.f32 %v1740, %v2220
      %v2242 = vadd.f32 %v1741, %v2233
      %v2243 = vadd.f32 %v1742, %v2222
      %v2244 = vadd.f32 %v1743, %v2234
      %v2245 = vadd.f32 %v1744, %v2225
      %v2246 = vadd.f32 %v1745, %v2235
      %v2247 = vadd.f32 %v1746, %v2227
      %v2248 = vadd.f32 %v1747, %v2236
      %2257 = vst [vmem:[#allocation1] ss:$2 sm:$0xff] %v2241
      %s2258 = scalar_lea.vmem [#allocation1], 1
      %2259 = vst [vmem:[%s2258] ss:$2 sm:$0xff] %v2245
      %v2260 = vld.sshfl [vmem:[#allocation1] sm:$0xff pattern:$0x75316420]
      %s2261 = scalar_lea.vmem [#allocation1], 16
      %2262 = vst [vmem:[%s2261] ss:$2 sm:$0xff] %v2242
      %s2263 = scalar_lea.vmem [#allocation1], 17
      %2264 = vst [vmem:[%s2263] ss:$2 sm:$0xff] %v2246
      %v2265 = vld.sshfl [vmem:[#allocation1 + $0x10] sm:$0xff pattern:$0x75316420]
      %s2266 = scalar_lea.vmem [#allocation1], 32
      %2267 = vst [vmem:[%s2266] ss:$2 sm:$0xff] %v2243
      %s2268 = scalar_lea.vmem [#allocation1], 33
      %2269 = vst [vmem:[%s2268] ss:$2 sm:$0xff] %v2247
      %v2270 = vld.sshfl [vmem:[#allocation1 + $0x20] sm:$0xff pattern:$0x75316420]
      %s2271 = scalar_lea.vmem [#allocation1], 48
      %2272 = vst [vmem:[%s2271] ss:$2 sm:$0xff] %v2244
      %s2273 = scalar_lea.vmem [#allocation1], 49
      %2274 = vst [vmem:[%s2273] ss:$2 sm:$0xff] %v2248
      %v2275 = vld.sshfl [vmem:[#allocation1 + $0x30] sm:$0xff pattern:$0x75316420]
      %2280 = vst.msk [vmem:[%s532] sm:$0xff] %vm574, %v2260
      %2281 = vst.msk [vmem:[%s532 + $0x8] sm:$0xff] %vm574, %v2265
      %2282 = vst.msk [vmem:[%s532 + $0x10] sm:$0xff] %vm574, %v2270
      %2283 = vst.msk [vmem:[%s532 + $0x18] sm:$0xff] %vm574, %v2275
      %s2284 = smul.u32 4, %s31
      %p2285 = scmp.lt.s32.totalorder %s30, 1
      %s2286 = scalar_select %p2285, %s30, 1
      %p2287 = scmp.lt.s32.totalorder %s2284, 7
      %s2288 = scalar_select %p2287, %s2284, 7
      %s2289 = smul.addr %s2286, 8
      %s2290 = sadd.s32 %s2288, %s2289
      %s2291 = smul.addr %s2290, 8
      %s2292 = scalar_lea.vmem %s15, %s2291
      // Predicated region
      $region81: #{_lambda_.3} parent=79 // pred_check
        %p2293 = pneg %p380
      $region82: #{_lambda_.3} parent=79 // pred_check_branch
        %2295 = sbr.rel (%p2293) target = $region84
      $region83: #{_lambda_.3} parent=79 // pred_region
        %s2296 = smul.u32 4, %s31
      $region84: #{_lambda_.3} parent=79 // pred_fallthru
        _
    $region80: #{_lambda_.3} parent=5 // pred_fallthru
      _
    %p2297 = scmp.le.s32.totalorder 2, %s21
    // Predicated region
    $region85: #{_lambda_.3} parent=5 // pred_check
      %p2298 = pneg %p2297
    $region86: #{_lambda_.3} parent=5 // pred_check_branch
      %2300 = sbr.rel (%p2298) target = $region88
    $region87: #{_lambda_.3} parent=5 // pred_region
      %s2301 = ssub.s32 %s21, 2
      // Predicated region
      $region89: #{_lambda_.3} parent=87 // pred_check
        %p2302 = pneg %p386
      $region90: #{_lambda_.3} parent=87 // pred_check_branch
        %2304 = sbr.rel (%p2302) target = $region92
      $region91: #{_lambda_.3} parent=87 // pred_region
        %s2305 = smul.u32 4, %s33
        %p2306 = scmp.lt.s32.totalorder %s32, 1
        %s2307 = scalar_select %p2306, %s32, 1
        %p2308 = scmp.lt.s32.totalorder %s2305, 7
        %s2309 = scalar_select %p2308, %s2305, 7
        %s2310 = smul.addr %s2307, 8
        %s2311 = sadd.s32 %s2309, %s2310
        %s2312 = smul.addr %s2311, 8
        %s2313 = scalar_lea.vmem %s15, %s2312
      $region92: #{_lambda_.3} parent=87 // pred_fallthru
        _
    $region88: #{_lambda_.3} parent=5 // pred_fallthru
      _
  $region6: #{_lambda_.3} parent=0 // loop_footer
    %s25 = sadd.s32 1, %s21
  $region7: #{_lambda_.3} parent=0 // loop_footer_branch
    %20 = sbr.rel target = $region3
  $region8: #{_lambda_.3} parent=0 // loop_exit
    _

</llo_original>
